<compile_context>
chip_gen: v5e
topology: v5e:2x2
jax: 0.10.0
libtpu: 0.0.40
codegen_flags: <defaults>
</compile_context>

<pallas_src>
import jax
import jax.numpy as jnp
from jax.experimental import pallas as pl
from jax.experimental.pallas import tpu as pltpu  # noqa: F401  (TPU backend assumed)

# ---------------- configuration (scaled-down SAM2 geometry) ----------------
IMG = 64                      # scaled-down image size (SAM2 uses 1024)
PATCH = 4                     # patch-embed stride
T0, T1, T2 = 32, 64, 128      # synthetic trunk channel dims per level
D_MODEL = 256                 # FPN neck / no_mem_embed dim (as in SAM2)
HR1_C, HR2_C = 32, 64         # conv_s0 / conv_s1 output channels (as in SAM2)
BB_FEAT_SIZES = [(16, 16), (8, 8), (4, 4)]   # scaled [(256,256),(128,128),(64,64)]

H0, W0 = BB_FEAT_SIZES[0]
H1, W1 = BB_FEAT_SIZES[1]
H2, W2 = BB_FEAT_SIZES[2]
HW0, HW1, HW2 = H0 * W0, H1 * W1, H2 * W2    # 256, 64, 16
K_RAW = 3 * PATCH * PATCH                    # 48
K_PAD = 128                                  # lane-aligned patch-embed K


# ---------------------------- fused Pallas kernel ----------------------------
def _fused_image_encoder_kernel(
    xT_ref, xm1_ref, xm2_ref,
    patch_wT_ref, patch_b_ref,
    m1_wT_ref, m1_b_ref,
    m2_wT_ref, m2_b_ref,
    neck0_wT_ref, neck0_b_ref,
    neck1_wT_ref, neck1_b_ref,
    neck2_wT_ref, neck2_b_ref,
    s0_wT_ref, s0_b_ref,
    s1_wT_ref, s1_b_ref,
    no_mem_ref,
    hr0T_ref, hr1T_ref, n2T_ref,
):
    f32, bf16 = jnp.float32, jnp.bfloat16

    def mm(a, b):
        # bf16 x bf16 MXU matmul with f32 accumulation.
        return jnp.dot(a, b, preferred_element_type=f32)

    patch_wT = patch_wT_ref[...]          # (T0, K_PAD) bf16
    patch_b = patch_b_ref[...]            # (T0, 1) f32
    m1_b = m1_b_ref[...]                  # (T1, 1) f32

    # ---- level-0 chain, all in (C, HW) layout: patch-embed -> neck0 -> conv_s0
    f0T = mm(patch_wT, xT_ref[...]) + patch_b                            # (T0, 256)
    n0T = mm(neck0_wT_ref[...], f0T.astype(bf16)) + neck0_b_ref[...]     # (256, 256)
    hr0T_ref[...] = mm(s0_wT_ref[...], n0T.astype(bf16)) + s0_b_ref[...]  # (32, 256)

    # ---- level-1 chain: 2x2 patch merge as 4 per-phase matmuls -> neck1 -> conv_s1
    acc1 = jnp.zeros((T1, HW1), f32)
    for p in range(4):
        f0T_p = mm(patch_wT, xm1_ref[p]) + patch_b                       # (T0, 64)
        acc1 = acc1 + mm(m1_wT_ref[p], f0T_p.astype(bf16))
    f1T = acc1 + m1_b                                                    # (T1, 64)
    n1T = mm(neck1_wT_ref[...], f1T.astype(bf16)) + neck1_b_ref[...]     # (256, 64)
    hr1T_ref[...] = mm(s1_wT_ref[...], n1T.astype(bf16)) + s1_b_ref[...]  # (64, 64)

    # ---- level-2 chain: second 2x2 merge -> neck2 -> + no_mem_embed (fused epilogue)
    acc2 = jnp.zeros((T2, HW2), f32)
    for q in range(4):
        acc1q = jnp.zeros((T1, HW2), f32)
        for p in range(4):
            f0T_qp = mm(patch_wT, xm2_ref[4 * q + p]) + patch_b          # (T0, 16)
            acc1q = acc1q + mm(m1_wT_ref[p], f0T_qp.astype(bf16))
        f1T_q = acc1q + m1_b                                             # (T1, 16)
        acc2 = acc2 + mm(m2_wT_ref[q], f1T_q.astype(bf16))
    f2T = acc2 + m2_b_ref[...]                                           # (T2, 16)

    n2T_ref[...] = (mm(neck2_wT_ref[...], f2T.astype(bf16))
                    + neck2_b_ref[...] + no_mem_ref[...])                # (256, 16)


# --------------------------- trace-time input glue ---------------------------
def _patchify_T(x):
    """NCHW -> (Cin*p*p, HW) transposed im2col, zero-padded to K_PAD rows."""
    B, C, H, W = x.shape
    p = PATCH
    xp = x.reshape(B, C, H // p, p, W // p, p)
    xp = jnp.transpose(xp, (0, 1, 3, 5, 2, 4))        # (B, C, ph, pw, H/p, W/p)
    xT = xp.reshape(C * p * p, (H // p) * (W // p))   # (48, 256), cols = h*W0 + w
    return jnp.pad(xT, ((0, K_PAD - C * p * p), (0, 0)))


def _phase_views(xT_pad):
    """Phase-permuted copies of the transposed patches for the 2x2 merges."""
    # merge-1 phases: slab p = dh*2+dw, columns in 8x8 row-major order.
    g1 = xT_pad.reshape(K_PAD, H1, 2, W1, 2)                   # (K, h2, dh, w2, dw)
    xm1 = jnp.transpose(g1, (2, 4, 0, 1, 3)).reshape(4, K_PAD, HW1)
    # merge-2-of-merge-1 phases: slab 4*q+p (q = eh*2+ew), columns 4x4 row-major.
    g2 = xT_pad.reshape(K_PAD, H2, 2, 2, W2, 2, 2)             # (K, h3, eh, dh, w3, ew, dw)
    xm2 = jnp.transpose(g2, (2, 5, 3, 6, 0, 1, 4)).reshape(16, K_PAD, HW2)
    return xm1, xm2


# ------------------------------- parameters ----------------------------------
def init_params(key):
    """Canonical f32 parameters (same shapes/semantics as the previous version)."""
    ks = jax.random.split(key, 16)
    s = 0.02
    n = jax.random.normal
    return {
        "patch_w": s * n(ks[0], (K_RAW, T0), jnp.float32),
        "patch_b": s * n(ks[9], (T0,), jnp.float32),
        "merge1_w": s * n(ks[1], (4 * T0, T1), jnp.float32),
        "merge1_b": s * n(ks[10], (T1,), jnp.float32),
        "merge2_w": s * n(ks[2], (4 * T1, T2), jnp.float32),
        "merge2_b": s * n(ks[11], (T2,), jnp.float32),
        "neck0_w": s * n(ks[3], (T0, D_MODEL), jnp.float32),
        "neck0_b": s * n(ks[12], (D_MODEL,), jnp.float32),
        "neck1_w": s * n(ks[4], (T1, D_MODEL), jnp.float32),
        "neck1_b": s * n(ks[13], (D_MODEL,), jnp.float32),
        "neck2_w": s * n(ks[5], (T2, D_MODEL), jnp.float32),
        "neck2_b": s * n(ks[14], (D_MODEL,), jnp.float32),
        "s0_w": s * n(ks[6], (D_MODEL, HR1_C), jnp.float32),
        "s0_b": s * n(ks[15], (HR1_C,), jnp.float32),
        "s1_w": s * n(ks[7], (D_MODEL, HR2_C), jnp.float32),
        "s1_b": jnp.zeros((HR2_C,), jnp.float32),
        "no_mem_embed": s * n(ks[8], (1, 1, D_MODEL), jnp.float32),  # as in SAM2
    }


def prepare_kernel_params(params):
    """Transposed / K-padded / bf16 weights + f32 (C, 1) biases for the kernel."""
    bf16 = jnp.bfloat16

    def col(b):
        return b.reshape(-1, 1).astype(jnp.float32)

    patch_wT = jnp.zeros((T0, K_PAD), jnp.float32).at[:, :K_RAW].set(params["patch_w"].T)
    m1_wT = jnp.transpose(params["merge1_w"].reshape(4, T0, T1), (0, 2, 1))
    m2_wT = jnp.transpose(params["merge2_w"].reshape(4, T1, T2), (0, 2, 1))
    return {
        "patch_wT": patch_wT.astype(bf16), "patch_b": col(params["patch_b"]),
        "m1_wT": m1_wT.astype(bf16), "m1_b": col(params["merge1_b"]),
        "m2_wT": m2_wT.astype(bf16), "m2_b": col(params["merge2_b"]),
        "neck0_wT": params["neck0_w"].T.astype(bf16), "neck0_b": col(params["neck0_b"]),
        "neck1_wT": params["neck1_w"].T.astype(bf16), "neck1_b": col(params["neck1_b"]),
        "neck2_wT": params["neck2_w"].T.astype(bf16), "neck2_b": col(params["neck2_b"]),
        "s0_wT": params["s0_w"].T.astype(bf16), "s0_b": col(params["s0_b"]),
        "s1_wT": params["s1_w"].T.astype(bf16), "s1_b": col(params["s1_b"]),
        "no_mem": col(params["no_mem_embed"].reshape(D_MODEL)),
    }


# ------------------------------ forward pass ---------------------------------
def image_encoder_forward(x, kparams):
    """Pallas re-implementation of ImageEncoder.forward (batch must be 1,
    matching the hard-coded .view(1, ...) in the PyTorch module)."""
    B, Cin, H, W = x.shape
    assert B == 1 and (H, W) == (IMG, IMG)

    xT = _patchify_T(x)                              # (K_PAD, 256) f32
    xm1, xm2 = _phase_views(xT)                      # (4, K_PAD, 64), (16, K_PAD, 16)
    bf16 = jnp.bfloat16
    xT, xm1, xm2 = xT.astype(bf16), xm1.astype(bf16), xm2.astype(bf16)

    kp = kparams
    hr0T, hr1T, n2T = pl.pallas_call(
        _fused_image_encoder_kernel,
        out_shape=(
            jax.ShapeDtypeStruct((HR1_C, HW0), jnp.float32),   # conv_s0 feat^T
            jax.ShapeDtypeStruct((HR2_C, HW1), jnp.float32),   # conv_s1 feat^T
            jax.ShapeDtypeStruct((D_MODEL, HW2), jnp.float32),  # image embed^T
        ),
    )(
        xT, xm1, xm2,
        kp["patch_wT"], kp["patch_b"],
        kp["m1_wT"], kp["m1_b"],
        kp["m2_wT"], kp["m2_b"],
        kp["neck0_wT"], kp["neck0_b"],
        kp["neck1_wT"], kp["neck1_b"],
        kp["neck2_wT"], kp["neck2_b"],
        kp["s0_wT"], kp["s0_b"],
        kp["s1_wT"], kp["s1_b"],
        kp["no_mem"],
    )

    # Kernel outputs are already in the permute(1, 2, 0) (C, HW) layout:
    # only metadata reshapes remain (no XLA transposes, no masked re-stores).
    image_embeddings = n2T.reshape(1, D_MODEL, H2, W2)
    high_res_features1 = hr0T.reshape(1, HR1_C, H0, W0)
    high_res_features2 = hr1T.reshape(1, HR2_C, H1, W1)
    return image_embeddings, high_res_features1, high_res_features2


# ------------------------- pure-f32 JAX reference ----------------------------
def _extract_patches(x, p):
    B, C, H, W = x.shape
    xp = x.reshape(B, C, H // p, p, W // p, p)
    xp = jnp.transpose(xp, (0, 2, 4, 1, 3, 5))
    return xp.reshape(B * (H // p) * (W // p), C * p * p)


def _merge2x2(f, H, W):
    C = f.shape[-1]
    g = f.reshape(H // 2, 2, W // 2, 2, C)
    g = jnp.transpose(g, (0, 2, 1, 3, 4))
    return g.reshape((H // 2) * (W // 2), 4 * C)


def reference_forward(x, params):
    """Pure-JAX f32 reference with identical semantics (for tolerance check)."""
    def lin(a, w, b):
        return jnp.dot(a, w, precision=jax.lax.Precision.HIGHEST) + b

    patches = _extract_patches(x, PATCH)
    f0 = lin(patches, params["patch_w"], params["patch_b"])
    f1 = lin(_merge2x2(f0, H0, W0), params["merge1_w"], params["merge1_b"])
    f2 = lin(_merge2x2(f1, H1, W1), params["merge2_w"], params["merge2_b"])
    n0 = lin(f0, params["neck0_w"], params["neck0_b"])
    n1 = lin(f1, params["neck1_w"], params["neck1_b"])
    n2 = lin(f2, params["neck2_w"], params["neck2_b"])
    hr0 = lin(n0, params["s0_w"], params["s0_b"])
    hr1 = lin(n1, params["s1_w"], params["s1_b"])
    n2 = n2 + params["no_mem_embed"].reshape(1, D_MODEL)
    feats = [f.T.reshape(1, -1, fs[0], fs[1])
             for f, fs in zip([hr0, hr1, n2], BB_FEAT_SIZES)]
    return feats[2], feats[0], feats[1]


if __name__ == "__main__":
    key = jax.random.PRNGKey(0)
    k_in, k_par = jax.random.split(key)
    x = jax.random.normal(k_in, (1, 3, IMG, IMG), jnp.float32)   # NCHW input
    params = init_params(k_par)
    kparams = prepare_kernel_params(params)

    fwd = jax.jit(image_encoder_forward)
    outs = jax.block_until_ready(fwd(x, kparams))

    image_embeddings, high_res_features1, high_res_features2 = outs
    assert image_embeddings.shape == (1, D_MODEL, H2, W2)
    assert high_res_features1.shape == (1, HR1_C, H0, W0)
    assert high_res_features2.shape == (1, HR2_C, H1, W1)
    assert all(bool(jnp.isfinite(o).all()) for o in outs)

    # bf16-MXU fused kernel vs pure-f32 reference (scale-relative tolerance).
    refs = reference_forward(x, params)
    for o, r in zip(outs, refs):
        err = jnp.max(jnp.abs(o - r))
        scale = jnp.max(jnp.abs(r)) + 1e-6
        assert float(err) <= 5e-2 * float(scale), (float(err), float(scale))

    print("KERNEL_OK")
</pallas_src>

<mosaic_0001>
module attributes {stable_mosaic.version = 11 : i64} {
  func.func @_fused_image_encoder_kernel(%arg0: memref<128x256xbf16, #tpu.memory_space<vmem>>, %arg1: memref<4x128x64xbf16, #tpu.memory_space<vmem>>, %arg2: memref<16x128x16xbf16, #tpu.memory_space<vmem>>, %arg3: memref<32x128xbf16, #tpu.memory_space<vmem>>, %arg4: memref<32x1xf32, #tpu.memory_space<vmem>>, %arg5: memref<4x64x32xbf16, #tpu.memory_space<vmem>>, %arg6: memref<64x1xf32, #tpu.memory_space<vmem>>, %arg7: memref<4x128x64xbf16, #tpu.memory_space<vmem>>, %arg8: memref<128x1xf32, #tpu.memory_space<vmem>>, %arg9: memref<256x32xbf16, #tpu.memory_space<vmem>>, %arg10: memref<256x1xf32, #tpu.memory_space<vmem>>, %arg11: memref<256x64xbf16, #tpu.memory_space<vmem>>, %arg12: memref<256x1xf32, #tpu.memory_space<vmem>>, %arg13: memref<256x128xbf16, #tpu.memory_space<vmem>>, %arg14: memref<256x1xf32, #tpu.memory_space<vmem>>, %arg15: memref<32x256xbf16, #tpu.memory_space<vmem>>, %arg16: memref<32x1xf32, #tpu.memory_space<vmem>>, %arg17: memref<64x256xbf16, #tpu.memory_space<vmem>>, %arg18: memref<64x1xf32, #tpu.memory_space<vmem>>, %arg19: memref<256x1xf32, #tpu.memory_space<vmem>>, %arg20: memref<32x256xf32, #tpu.memory_space<vmem>>, %arg21: memref<64x64xf32, #tpu.memory_space<vmem>>, %arg22: memref<256x16xf32, #tpu.memory_space<vmem>>) attributes {dimension_semantics = [], scalar_prefetch = 0 : i64, scratch_operands = 0 : i64, tpu.core_type = #tpu.core_type<tc>} {
    %c0 = arith.constant 0 : index
    %c0_0 = arith.constant 0 : index
    %0 = vector.load %arg3[%c0, %c0_0] : memref<32x128xbf16, #tpu.memory_space<vmem>>, vector<32x128xbf16>
    %c0_1 = arith.constant 0 : index
    %c0_2 = arith.constant 0 : index
    %1 = vector.load %arg4[%c0_1, %c0_2] : memref<32x1xf32, #tpu.memory_space<vmem>>, vector<32x1xf32>
    %c0_3 = arith.constant 0 : index
    %c0_4 = arith.constant 0 : index
    %2 = vector.load %arg6[%c0_3, %c0_4] : memref<64x1xf32, #tpu.memory_space<vmem>>, vector<64x1xf32>
    %c0_5 = arith.constant 0 : index
    %c0_6 = arith.constant 0 : index
    %3 = vector.load %arg0[%c0_5, %c0_6] : memref<128x256xbf16, #tpu.memory_space<vmem>>, vector<128x256xbf16>
    %cst = arith.constant dense<0.000000e+00> : vector<32x256xf32>
    %4 = tpu.matmul %0, %3, %cst {dimension_numbers = #tpu.dot_dimension_numbers<[1], [0], [0], [1], [0, 0, 1, 1], [], []>} : vector<32x128xbf16>, vector<128x256xbf16>, vector<32x256xf32> -> vector<32x256xf32>
    %5 = vector.broadcast %1 : vector<32x1xf32> to vector<32x256xf32>
    %6 = arith.addf %4, %5 : vector<32x256xf32>
    %c0_7 = arith.constant 0 : index
    %c0_8 = arith.constant 0 : index
    %7 = vector.load %arg9[%c0_7, %c0_8] : memref<256x32xbf16, #tpu.memory_space<vmem>>, vector<256x32xbf16>
    %8 = arith.truncf %6 : vector<32x256xf32> to vector<32x256xbf16>
    %cst_9 = arith.constant dense<0.000000e+00> : vector<256x256xf32>
    %9 = tpu.matmul %7, %8, %cst_9 {dimension_numbers = #tpu.dot_dimension_numbers<[1], [0], [0], [1], [0, 0, 1, 1], [], []>} : vector<256x32xbf16>, vector<32x256xbf16>, vector<256x256xf32> -> vector<256x256xf32>
    %c0_10 = arith.constant 0 : index
    %c0_11 = arith.constant 0 : index
    %10 = vector.load %arg10[%c0_10, %c0_11] : memref<256x1xf32, #tpu.memory_space<vmem>>, vector<256x1xf32>
    %11 = vector.broadcast %10 : vector<256x1xf32> to vector<256x256xf32>
    %12 = arith.addf %9, %11 : vector<256x256xf32>
    %c0_12 = arith.constant 0 : index
    %c0_13 = arith.constant 0 : index
    %13 = vector.load %arg15[%c0_12, %c0_13] : memref<32x256xbf16, #tpu.memory_space<vmem>>, vector<32x256xbf16>
    %14 = arith.truncf %12 : vector<256x256xf32> to vector<256x256xbf16>
    %cst_14 = arith.constant dense<0.000000e+00> : vector<32x256xf32>
    %15 = tpu.matmul %13, %14, %cst_14 {dimension_numbers = #tpu.dot_dimension_numbers<[1], [0], [0], [1], [0, 0, 1, 1], [], []>} : vector<32x256xbf16>, vector<256x256xbf16>, vector<32x256xf32> -> vector<32x256xf32>
    %c0_15 = arith.constant 0 : index
    %c0_16 = arith.constant 0 : index
    %16 = vector.load %arg16[%c0_15, %c0_16] : memref<32x1xf32, #tpu.memory_space<vmem>>, vector<32x1xf32>
    %17 = vector.broadcast %16 : vector<32x1xf32> to vector<32x256xf32>
    %18 = arith.addf %15, %17 : vector<32x256xf32>
    %c0_17 = arith.constant 0 : index
    %c0_18 = arith.constant 0 : index
    %19 = vector.load %arg20[%c0_17, %c0_18] : memref<32x256xf32, #tpu.memory_space<vmem>>, vector<32x256xf32>
    tpu.vector_store %arg20[%c0_17, %c0_18], %18 {strides = array<i32>} : memref<32x256xf32, #tpu.memory_space<vmem>>, vector<32x256xf32>,
    %cst_19 = arith.constant 0.000000e+00 : f32
    %20 = vector.broadcast %cst_19 : f32 to vector<64x64xf32>
    %c0_20 = arith.constant 0 : index
    %c0_21 = arith.constant 0 : index
    %c0_22 = arith.constant 0 : index
    %21 = vector.load %arg1[%c0_20, %c0_21, %c0_22] : memref<4x128x64xbf16, #tpu.memory_space<vmem>>, vector<1x128x64xbf16>
    %22 = vector.shape_cast %21 : vector<1x128x64xbf16> to vector<128x64xbf16>
    %cst_23 = arith.constant dense<0.000000e+00> : vector<32x64xf32>
    %23 = tpu.matmul %0, %22, %cst_23 {dimension_numbers = #tpu.dot_dimension_numbers<[1], [0], [0], [1], [0, 0, 1, 1], [], []>} : vector<32x128xbf16>, vector<128x64xbf16>, vector<32x64xf32> -> vector<32x64xf32>
    %24 = vector.broadcast %1 : vector<32x1xf32> to vector<32x64xf32>
    %25 = arith.addf %23, %24 : vector<32x64xf32>
    %c0_24 = arith.constant 0 : index
    %c0_25 = arith.constant 0 : index
    %c0_26 = arith.constant 0 : index
    %26 = vector.load %arg5[%c0_24, %c0_25, %c0_26] : memref<4x64x32xbf16, #tpu.memory_space<vmem>>, vector<1x64x32xbf16>
    %27 = vector.shape_cast %26 : vector<1x64x32xbf16> to vector<64x32xbf16>
    %28 = arith.truncf %25 : vector<32x64xf32> to vector<32x64xbf16>
    %cst_27 = arith.constant dense<0.000000e+00> : vector<64x64xf32>
    %29 = tpu.matmul %27, %28, %cst_27 {dimension_numbers = #tpu.dot_dimension_numbers<[1], [0], [0], [1], [0, 0, 1, 1], [], []>} : vector<64x32xbf16>, vector<32x64xbf16>, vector<64x64xf32> -> vector<64x64xf32>
    %30 = arith.addf %20, %29 : vector<64x64xf32>
    %c1 = arith.constant 1 : index
    %c0_28 = arith.constant 0 : index
    %c0_29 = arith.constant 0 : index
    %31 = vector.load %arg1[%c1, %c0_28, %c0_29] : memref<4x128x64xbf16, #tpu.memory_space<vmem>>, vector<1x128x64xbf16>
    %32 = vector.shape_cast %31 : vector<1x128x64xbf16> to vector<128x64xbf16>
    %cst_30 = arith.constant dense<0.000000e+00> : vector<32x64xf32>
    %33 = tpu.matmul %0, %32, %cst_30 {dimension_numbers = #tpu.dot_dimension_numbers<[1], [0], [0], [1], [0, 0, 1, 1], [], []>} : vector<32x128xbf16>, vector<128x64xbf16>, vector<32x64xf32> -> vector<32x64xf32>
    %34 = vector.broadcast %1 : vector<32x1xf32> to vector<32x64xf32>
    %35 = arith.addf %33, %34 : vector<32x64xf32>
    %c1_31 = arith.constant 1 : index
    %c0_32 = arith.constant 0 : index
    %c0_33 = arith.constant 0 : index
    %36 = vector.load %arg5[%c1_31, %c0_32, %c0_33] : memref<4x64x32xbf16, #tpu.memory_space<vmem>>, vector<1x64x32xbf16>
    %37 = vector.shape_cast %36 : vector<1x64x32xbf16> to vector<64x32xbf16>
    %38 = arith.truncf %35 : vector<32x64xf32> to vector<32x64xbf16>
    %cst_34 = arith.constant dense<0.000000e+00> : vector<64x64xf32>
    %39 = tpu.matmul %37, %38, %cst_34 {dimension_numbers = #tpu.dot_dimension_numbers<[1], [0], [0], [1], [0, 0, 1, 1], [], []>} : vector<64x32xbf16>, vector<32x64xbf16>, vector<64x64xf32> -> vector<64x64xf32>
    %40 = arith.addf %30, %39 : vector<64x64xf32>
    %c2 = arith.constant 2 : index
    %c0_35 = arith.constant 0 : index
    %c0_36 = arith.constant 0 : index
    %41 = vector.load %arg1[%c2, %c0_35, %c0_36] : memref<4x128x64xbf16, #tpu.memory_space<vmem>>, vector<1x128x64xbf16>
    %42 = vector.shape_cast %41 : vector<1x128x64xbf16> to vector<128x64xbf16>
    %cst_37 = arith.constant dense<0.000000e+00> : vector<32x64xf32>
    %43 = tpu.matmul %0, %42, %cst_37 {dimension_numbers = #tpu.dot_dimension_numbers<[1], [0], [0], [1], [0, 0, 1, 1], [], []>} : vector<32x128xbf16>, vector<128x64xbf16>, vector<32x64xf32> -> vector<32x64xf32>
    %44 = vector.broadcast %1 : vector<32x1xf32> to vector<32x64xf32>
    %45 = arith.addf %43, %44 : vector<32x64xf32>
    %c2_38 = arith.constant 2 : index
    %c0_39 = arith.constant 0 : index
    %c0_40 = arith.constant 0 : index
    %46 = vector.load %arg5[%c2_38, %c0_39, %c0_40] : memref<4x64x32xbf16, #tpu.memory_space<vmem>>, vector<1x64x32xbf16>
    %47 = vector.shape_cast %46 : vector<1x64x32xbf16> to vector<64x32xbf16>
    %48 = arith.truncf %45 : vector<32x64xf32> to vector<32x64xbf16>
    %cst_41 = arith.constant dense<0.000000e+00> : vector<64x64xf32>
    %49 = tpu.matmul %47, %48, %cst_41 {dimension_numbers = #tpu.dot_dimension_numbers<[1], [0], [0], [1], [0, 0, 1, 1], [], []>} : vector<64x32xbf16>, vector<32x64xbf16>, vector<64x64xf32> -> vector<64x64xf32>
    %50 = arith.addf %40, %49 : vector<64x64xf32>
    %c3 = arith.constant 3 : index
    %c0_42 = arith.constant 0 : index
    %c0_43 = arith.constant 0 : index
    %51 = vector.load %arg1[%c3, %c0_42, %c0_43] : memref<4x128x64xbf16, #tpu.memory_space<vmem>>, vector<1x128x64xbf16>
    %52 = vector.shape_cast %51 : vector<1x128x64xbf16> to vector<128x64xbf16>
    %cst_44 = arith.constant dense<0.000000e+00> : vector<32x64xf32>
    %53 = tpu.matmul %0, %52, %cst_44 {dimension_numbers = #tpu.dot_dimension_numbers<[1], [0], [0], [1], [0, 0, 1, 1], [], []>} : vector<32x128xbf16>, vector<128x64xbf16>, vector<32x64xf32> -> vector<32x64xf32>
    %54 = vector.broadcast %1 : vector<32x1xf32> to vector<32x64xf32>
    %55 = arith.addf %53, %54 : vector<32x64xf32>
    %c3_45 = arith.constant 3 : index
    %c0_46 = arith.constant 0 : index
    %c0_47 = arith.constant 0 : index
    %56 = vector.load %arg5[%c3_45, %c0_46, %c0_47] : memref<4x64x32xbf16, #tpu.memory_space<vmem>>, vector<1x64x32xbf16>
    %57 = vector.shape_cast %56 : vector<1x64x32xbf16> to vector<64x32xbf16>
    %58 = arith.truncf %55 : vector<32x64xf32> to vector<32x64xbf16>
    %cst_48 = arith.constant dense<0.000000e+00> : vector<64x64xf32>
    %59 = tpu.matmul %57, %58, %cst_48 {dimension_numbers = #tpu.dot_dimension_numbers<[1], [0], [0], [1], [0, 0, 1, 1], [], []>} : vector<64x32xbf16>, vector<32x64xbf16>, vector<64x64xf32> -> vector<64x64xf32>
    %60 = arith.addf %50, %59 : vector<64x64xf32>
    %61 = vector.broadcast %2 : vector<64x1xf32> to vector<64x64xf32>
    %62 = arith.addf %60, %61 : vector<64x64xf32>
    %c0_49 = arith.constant 0 : index
    %c0_50 = arith.constant 0 : index
    %63 = vector.load %arg11[%c0_49, %c0_50] : memref<256x64xbf16, #tpu.memory_space<vmem>>, vector<256x64xbf16>
    %64 = arith.truncf %62 : vector<64x64xf32> to vector<64x64xbf16>
    %cst_51 = arith.constant dense<0.000000e+00> : vector<256x64xf32>
    %65 = tpu.matmul %63, %64, %cst_51 {dimension_numbers = #tpu.dot_dimension_numbers<[1], [0], [0], [1], [0, 0, 1, 1], [], []>} : vector<256x64xbf16>, vector<64x64xbf16>, vector<256x64xf32> -> vector<256x64xf32>
    %c0_52 = arith.constant 0 : index
    %c0_53 = arith.constant 0 : index
    %66 = vector.load %arg12[%c0_52, %c0_53] : memref<256x1xf32, #tpu.memory_space<vmem>>, vector<256x1xf32>
    %67 = vector.broadcast %66 : vector<256x1xf32> to vector<256x64xf32>
    %68 = arith.addf %65, %67 : vector<256x64xf32>
    %c0_54 = arith.constant 0 : index
    %c0_55 = arith.constant 0 : index
    %69 = vector.load %arg17[%c0_54, %c0_55] : memref<64x256xbf16, #tpu.memory_space<vmem>>, vector<64x256xbf16>
    %70 = arith.truncf %68 : vector<256x64xf32> to vector<256x64xbf16>
    %cst_56 = arith.constant dense<0.000000e+00> : vector<64x64xf32>
    %71 = tpu.matmul %69, %70, %cst_56 {dimension_numbers = #tpu.dot_dimension_numbers<[1], [0], [0], [1], [0, 0, 1, 1], [], []>} : vector<64x256xbf16>, vector<256x64xbf16>, vector<64x64xf32> -> vector<64x64xf32>
    %c0_57 = arith.constant 0 : index
    %c0_58 = arith.constant 0 : index
    %72 = vector.load %arg18[%c0_57, %c0_58] : memref<64x1xf32, #tpu.memory_space<vmem>>, vector<64x1xf32>
    %73 = vector.broadcast %72 : vector<64x1xf32> to vector<64x64xf32>
    %74 = arith.addf %71, %73 : vector<64x64xf32>
    %c0_59 = arith.constant 0 : index
    %c0_60 = arith.constant 0 : index
    %75 = vector.load %arg21[%c0_59, %c0_60] : memref<64x64xf32, #tpu.memory_space<vmem>>, vector<64x64xf32>
    tpu.vector_store %arg21[%c0_59, %c0_60], %74 {strides = array<i32>} : memref<64x64xf32, #tpu.memory_space<vmem>>, vector<64x64xf32>,
    %cst_61 = arith.constant 0.000000e+00 : f32
    %76 = vector.broadcast %cst_61 : f32 to vector<128x16xf32>
    %cst_62 = arith.constant 0.000000e+00 : f32
    %77 = vector.broadcast %cst_62 : f32 to vector<64x16xf32>
    %c0_63 = arith.constant 0 : index
    %c0_64 = arith.constant 0 : index
    %c0_65 = arith.constant 0 : index
    %78 = vector.load %arg2[%c0_63, %c0_64, %c0_65] : memref<16x128x16xbf16, #tpu.memory_space<vmem>>, vector<1x128x16xbf16>
    %79 = vector.shape_cast %78 : vector<1x128x16xbf16> to vector<128x16xbf16>
    %cst_66 = arith.constant dense<0.000000e+00> : vector<32x16xf32>
    %80 = tpu.matmul %0, %79, %cst_66 {dimension_numbers = #tpu.dot_dimension_numbers<[1], [0], [0], [1], [0, 0, 1, 1], [], []>} : vector<32x128xbf16>, vector<128x16xbf16>, vector<32x16xf32> -> vector<32x16xf32>
    %81 = vector.broadcast %1 : vector<32x1xf32> to vector<32x16xf32>
    %82 = arith.addf %80, %81 : vector<32x16xf32>
    %c0_67 = arith.constant 0 : index
    %c0_68 = arith.constant 0 : index
    %c0_69 = arith.constant 0 : index
    %83 = vector.load %arg5[%c0_67, %c0_68, %c0_69] : memref<4x64x32xbf16, #tpu.memory_space<vmem>>, vector<1x64x32xbf16>
    %84 = vector.shape_cast %83 : vector<1x64x32xbf16> to vector<64x32xbf16>
    %85 = arith.truncf %82 : vector<32x16xf32> to vector<32x16xbf16>
    %cst_70 = arith.constant dense<0.000000e+00> : vector<64x16xf32>
    %86 = tpu.matmul %84, %85, %cst_70 {dimension_numbers = #tpu.dot_dimension_numbers<[1], [0], [0], [1], [0, 0, 1, 1], [], []>} : vector<64x32xbf16>, vector<32x16xbf16>, vector<64x16xf32> -> vector<64x16xf32>
    %87 = arith.addf %77, %86 : vector<64x16xf32>
    %c1_71 = arith.constant 1 : index
    %c0_72 = arith.constant 0 : index
    %c0_73 = arith.constant 0 : index
    %88 = vector.load %arg2[%c1_71, %c0_72, %c0_73] : memref<16x128x16xbf16, #tpu.memory_space<vmem>>, vector<1x128x16xbf16>
    %89 = vector.shape_cast %88 : vector<1x128x16xbf16> to vector<128x16xbf16>
    %cst_74 = arith.constant dense<0.000000e+00> : vector<32x16xf32>
    %90 = tpu.matmul %0, %89, %cst_74 {dimension_numbers = #tpu.dot_dimension_numbers<[1], [0], [0], [1], [0, 0, 1, 1], [], []>} : vector<32x128xbf16>, vector<128x16xbf16>, vector<32x16xf32> -> vector<32x16xf32>
    %91 = vector.broadcast %1 : vector<32x1xf32> to vector<32x16xf32>
    %92 = arith.addf %90, %91 : vector<32x16xf32>
    %c1_75 = arith.constant 1 : index
    %c0_76 = arith.constant 0 : index
    %c0_77 = arith.constant 0 : index
    %93 = vector.load %arg5[%c1_75, %c0_76, %c0_77] : memref<4x64x32xbf16, #tpu.memory_space<vmem>>, vector<1x64x32xbf16>
    %94 = vector.shape_cast %93 : vector<1x64x32xbf16> to vector<64x32xbf16>
    %95 = arith.truncf %92 : vector<32x16xf32> to vector<32x16xbf16>
    %cst_78 = arith.constant dense<0.000000e+00> : vector<64x16xf32>
    %96 = tpu.matmul %94, %95, %cst_78 {dimension_numbers = #tpu.dot_dimension_numbers<[1], [0], [0], [1], [0, 0, 1, 1], [], []>} : vector<64x32xbf16>, vector<32x16xbf16>, vector<64x16xf32> -> vector<64x16xf32>
    %97 = arith.addf %87, %96 : vector<64x16xf32>
    %c2_79 = arith.constant 2 : index
    %c0_80 = arith.constant 0 : index
    %c0_81 = arith.constant 0 : index
    %98 = vector.load %arg2[%c2_79, %c0_80, %c0_81] : memref<16x128x16xbf16, #tpu.memory_space<vmem>>, vector<1x128x16xbf16>
    %99 = vector.shape_cast %98 : vector<1x128x16xbf16> to vector<128x16xbf16>
    %cst_82 = arith.constant dense<0.000000e+00> : vector<32x16xf32>
    %100 = tpu.matmul %0, %99, %cst_82 {dimension_numbers = #tpu.dot_dimension_numbers<[1], [0], [0], [1], [0, 0, 1, 1], [], []>} : vector<32x128xbf16>, vector<128x16xbf16>, vector<32x16xf32> -> vector<32x16xf32>
    %101 = vector.broadcast %1 : vector<32x1xf32> to vector<32x16xf32>
    %102 = arith.addf %100, %101 : vector<32x16xf32>
    %c2_83 = arith.constant 2 : index
    %c0_84 = arith.constant 0 : index
    %c0_85 = arith.constant 0 : index
    %103 = vector.load %arg5[%c2_83, %c0_84, %c0_85] : memref<4x64x32xbf16, #tpu.memory_space<vmem>>, vector<1x64x32xbf16>
    %104 = vector.shape_cast %103 : vector<1x64x32xbf16> to vector<64x32xbf16>
    %105 = arith.truncf %102 : vector<32x16xf32> to vector<32x16xbf16>
    %cst_86 = arith.constant dense<0.000000e+00> : vector<64x16xf32>
    %106 = tpu.matmul %104, %105, %cst_86 {dimension_numbers = #tpu.dot_dimension_numbers<[1], [0], [0], [1], [0, 0, 1, 1], [], []>} : vector<64x32xbf16>, vector<32x16xbf16>, vector<64x16xf32> -> vector<64x16xf32>
    %107 = arith.addf %97, %106 : vector<64x16xf32>
    %c3_87 = arith.constant 3 : index
    %c0_88 = arith.constant 0 : index
    %c0_89 = arith.constant 0 : index
    %108 = vector.load %arg2[%c3_87, %c0_88, %c0_89] : memref<16x128x16xbf16, #tpu.memory_space<vmem>>, vector<1x128x16xbf16>
    %109 = vector.shape_cast %108 : vector<1x128x16xbf16> to vector<128x16xbf16>
    %cst_90 = arith.constant dense<0.000000e+00> : vector<32x16xf32>
    %110 = tpu.matmul %0, %109, %cst_90 {dimension_numbers = #tpu.dot_dimension_numbers<[1], [0], [0], [1], [0, 0, 1, 1], [], []>} : vector<32x128xbf16>, vector<128x16xbf16>, vector<32x16xf32> -> vector<32x16xf32>
    %111 = vector.broadcast %1 : vector<32x1xf32> to vector<32x16xf32>
    %112 = arith.addf %110, %111 : vector<32x16xf32>
    %c3_91 = arith.constant 3 : index
    %c0_92 = arith.constant 0 : index
    %c0_93 = arith.constant 0 : index
    %113 = vector.load %arg5[%c3_91, %c0_92, %c0_93] : memref<4x64x32xbf16, #tpu.memory_space<vmem>>, vector<1x64x32xbf16>
    %114 = vector.shape_cast %113 : vector<1x64x32xbf16> to vector<64x32xbf16>
    %115 = arith.truncf %112 : vector<32x16xf32> to vector<32x16xbf16>
    %cst_94 = arith.constant dense<0.000000e+00> : vector<64x16xf32>
    %116 = tpu.matmul %114, %115, %cst_94 {dimension_numbers = #tpu.dot_dimension_numbers<[1], [0], [0], [1], [0, 0, 1, 1], [], []>} : vector<64x32xbf16>, vector<32x16xbf16>, vector<64x16xf32> -> vector<64x16xf32>
    %117 = arith.addf %107, %116 : vector<64x16xf32>
    %118 = vector.broadcast %2 : vector<64x1xf32> to vector<64x16xf32>
    %119 = arith.addf %117, %118 : vector<64x16xf32>
    %c0_95 = arith.constant 0 : index
    %c0_96 = arith.constant 0 : index
    %c0_97 = arith.constant 0 : index
    %120 = vector.load %arg7[%c0_95, %c0_96, %c0_97] : memref<4x128x64xbf16, #tpu.memory_space<vmem>>, vector<1x128x64xbf16>
    %121 = vector.shape_cast %120 : vector<1x128x64xbf16> to vector<128x64xbf16>
    %122 = arith.truncf %119 : vector<64x16xf32> to vector<64x16xbf16>
    %cst_98 = arith.constant dense<0.000000e+00> : vector<128x16xf32>
    %123 = tpu.matmul %121, %122, %cst_98 {dimension_numbers = #tpu.dot_dimension_numbers<[1], [0], [0], [1], [0, 0, 1, 1], [], []>} : vector<128x64xbf16>, vector<64x16xbf16>, vector<128x16xf32> -> vector<128x16xf32>
    %124 = arith.addf %76, %123 : vector<128x16xf32>
    %cst_99 = arith.constant 0.000000e+00 : f32
    %125 = vector.broadcast %cst_99 : f32 to vector<64x16xf32>
    %c4 = arith.constant 4 : index
    %c0_100 = arith.constant 0 : index
    %c0_101 = arith.constant 0 : index
    %126 = vector.load %arg2[%c4, %c0_100, %c0_101] : memref<16x128x16xbf16, #tpu.memory_space<vmem>>, vector<1x128x16xbf16>
    %127 = vector.shape_cast %126 : vector<1x128x16xbf16> to vector<128x16xbf16>
    %cst_102 = arith.constant dense<0.000000e+00> : vector<32x16xf32>
    %128 = tpu.matmul %0, %127, %cst_102 {dimension_numbers = #tpu.dot_dimension_numbers<[1], [0], [0], [1], [0, 0, 1, 1], [], []>} : vector<32x128xbf16>, vector<128x16xbf16>, vector<32x16xf32> -> vector<32x16xf32>
    %129 = vector.broadcast %1 : vector<32x1xf32> to vector<32x16xf32>
    %130 = arith.addf %128, %129 : vector<32x16xf32>
    %c0_103 = arith.constant 0 : index
    %c0_104 = arith.constant 0 : index
    %c0_105 = arith.constant 0 : index
    %131 = vector.load %arg5[%c0_103, %c0_104, %c0_105] : memref<4x64x32xbf16, #tpu.memory_space<vmem>>, vector<1x64x32xbf16>
    %132 = vector.shape_cast %131 : vector<1x64x32xbf16> to vector<64x32xbf16>
    %133 = arith.truncf %130 : vector<32x16xf32> to vector<32x16xbf16>
    %cst_106 = arith.constant dense<0.000000e+00> : vector<64x16xf32>
    %134 = tpu.matmul %132, %133, %cst_106 {dimension_numbers = #tpu.dot_dimension_numbers<[1], [0], [0], [1], [0, 0, 1, 1], [], []>} : vector<64x32xbf16>, vector<32x16xbf16>, vector<64x16xf32> -> vector<64x16xf32>
    %135 = arith.addf %125, %134 : vector<64x16xf32>
    %c5 = arith.constant 5 : index
    %c0_107 = arith.constant 0 : index
    %c0_108 = arith.constant 0 : index
    %136 = vector.load %arg2[%c5, %c0_107, %c0_108] : memref<16x128x16xbf16, #tpu.memory_space<vmem>>, vector<1x128x16xbf16>
    %137 = vector.shape_cast %136 : vector<1x128x16xbf16> to vector<128x16xbf16>
    %cst_109 = arith.constant dense<0.000000e+00> : vector<32x16xf32>
    %138 = tpu.matmul %0, %137, %cst_109 {dimension_numbers = #tpu.dot_dimension_numbers<[1], [0], [0], [1], [0, 0, 1, 1], [], []>} : vector<32x128xbf16>, vector<128x16xbf16>, vector<32x16xf32> -> vector<32x16xf32>
    %139 = vector.broadcast %1 : vector<32x1xf32> to vector<32x16xf32>
    %140 = arith.addf %138, %139 : vector<32x16xf32>
    %c1_110 = arith.constant 1 : index
    %c0_111 = arith.constant 0 : index
    %c0_112 = arith.constant 0 : index
    %141 = vector.load %arg5[%c1_110, %c0_111, %c0_112] : memref<4x64x32xbf16, #tpu.memory_space<vmem>>, vector<1x64x32xbf16>
    %142 = vector.shape_cast %141 : vector<1x64x32xbf16> to vector<64x32xbf16>
    %143 = arith.truncf %140 : vector<32x16xf32> to vector<32x16xbf16>
    %cst_113 = arith.constant dense<0.000000e+00> : vector<64x16xf32>
    %144 = tpu.matmul %142, %143, %cst_113 {dimension_numbers = #tpu.dot_dimension_numbers<[1], [0], [0], [1], [0, 0, 1, 1], [], []>} : vector<64x32xbf16>, vector<32x16xbf16>, vector<64x16xf32> -> vector<64x16xf32>
    %145 = arith.addf %135, %144 : vector<64x16xf32>
    %c6 = arith.constant 6 : index
    %c0_114 = arith.constant 0 : index
    %c0_115 = arith.constant 0 : index
    %146 = vector.load %arg2[%c6, %c0_114, %c0_115] : memref<16x128x16xbf16, #tpu.memory_space<vmem>>, vector<1x128x16xbf16>
    %147 = vector.shape_cast %146 : vector<1x128x16xbf16> to vector<128x16xbf16>
    %cst_116 = arith.constant dense<0.000000e+00> : vector<32x16xf32>
    %148 = tpu.matmul %0, %147, %cst_116 {dimension_numbers = #tpu.dot_dimension_numbers<[1], [0], [0], [1], [0, 0, 1, 1], [], []>} : vector<32x128xbf16>, vector<128x16xbf16>, vector<32x16xf32> -> vector<32x16xf32>
    %149 = vector.broadcast %1 : vector<32x1xf32> to vector<32x16xf32>
    %150 = arith.addf %148, %149 : vector<32x16xf32>
    %c2_117 = arith.constant 2 : index
    %c0_118 = arith.constant 0 : index
    %c0_119 = arith.constant 0 : index
    %151 = vector.load %arg5[%c2_117, %c0_118, %c0_119] : memref<4x64x32xbf16, #tpu.memory_space<vmem>>, vector<1x64x32xbf16>
    %152 = vector.shape_cast %151 : vector<1x64x32xbf16> to vector<64x32xbf16>
    %153 = arith.truncf %150 : vector<32x16xf32> to vector<32x16xbf16>
    %cst_120 = arith.constant dense<0.000000e+00> : vector<64x16xf32>
    %154 = tpu.matmul %152, %153, %cst_120 {dimension_numbers = #tpu.dot_dimension_numbers<[1], [0], [0], [1], [0, 0, 1, 1], [], []>} : vector<64x32xbf16>, vector<32x16xbf16>, vector<64x16xf32> -> vector<64x16xf32>
    %155 = arith.addf %145, %154 : vector<64x16xf32>
    %c7 = arith.constant 7 : index
    %c0_121 = arith.constant 0 : index
    %c0_122 = arith.constant 0 : index
    %156 = vector.load %arg2[%c7, %c0_121, %c0_122] : memref<16x128x16xbf16, #tpu.memory_space<vmem>>, vector<1x128x16xbf16>
    %157 = vector.shape_cast %156 : vector<1x128x16xbf16> to vector<128x16xbf16>
    %cst_123 = arith.constant dense<0.000000e+00> : vector<32x16xf32>
    %158 = tpu.matmul %0, %157, %cst_123 {dimension_numbers = #tpu.dot_dimension_numbers<[1], [0], [0], [1], [0, 0, 1, 1], [], []>} : vector<32x128xbf16>, vector<128x16xbf16>, vector<32x16xf32> -> vector<32x16xf32>
    %159 = vector.broadcast %1 : vector<32x1xf32> to vector<32x16xf32>
    %160 = arith.addf %158, %159 : vector<32x16xf32>
    %c3_124 = arith.constant 3 : index
    %c0_125 = arith.constant 0 : index
    %c0_126 = arith.constant 0 : index
    %161 = vector.load %arg5[%c3_124, %c0_125, %c0_126] : memref<4x64x32xbf16, #tpu.memory_space<vmem>>, vector<1x64x32xbf16>
    %162 = vector.shape_cast %161 : vector<1x64x32xbf16> to vector<64x32xbf16>
    %163 = arith.truncf %160 : vector<32x16xf32> to vector<32x16xbf16>
    %cst_127 = arith.constant dense<0.000000e+00> : vector<64x16xf32>
    %164 = tpu.matmul %162, %163, %cst_127 {dimension_numbers = #tpu.dot_dimension_numbers<[1], [0], [0], [1], [0, 0, 1, 1], [], []>} : vector<64x32xbf16>, vector<32x16xbf16>, vector<64x16xf32> -> vector<64x16xf32>
    %165 = arith.addf %155, %164 : vector<64x16xf32>
    %166 = vector.broadcast %2 : vector<64x1xf32> to vector<64x16xf32>
    %167 = arith.addf %165, %166 : vector<64x16xf32>
    %c1_128 = arith.constant 1 : index
    %c0_129 = arith.constant 0 : index
    %c0_130 = arith.constant 0 : index
    %168 = vector.load %arg7[%c1_128, %c0_129, %c0_130] : memref<4x128x64xbf16, #tpu.memory_space<vmem>>, vector<1x128x64xbf16>
    %169 = vector.shape_cast %168 : vector<1x128x64xbf16> to vector<128x64xbf16>
    %170 = arith.truncf %167 : vector<64x16xf32> to vector<64x16xbf16>
    %cst_131 = arith.constant dense<0.000000e+00> : vector<128x16xf32>
    %171 = tpu.matmul %169, %170, %cst_131 {dimension_numbers = #tpu.dot_dimension_numbers<[1], [0], [0], [1], [0, 0, 1, 1], [], []>} : vector<128x64xbf16>, vector<64x16xbf16>, vector<128x16xf32> -> vector<128x16xf32>
    %172 = arith.addf %124, %171 : vector<128x16xf32>
    %cst_132 = arith.constant 0.000000e+00 : f32
    %173 = vector.broadcast %cst_132 : f32 to vector<64x16xf32>
    %c8 = arith.constant 8 : index
    %c0_133 = arith.constant 0 : index
    %c0_134 = arith.constant 0 : index
    %174 = vector.load %arg2[%c8, %c0_133, %c0_134] : memref<16x128x16xbf16, #tpu.memory_space<vmem>>, vector<1x128x16xbf16>
    %175 = vector.shape_cast %174 : vector<1x128x16xbf16> to vector<128x16xbf16>
    %cst_135 = arith.constant dense<0.000000e+00> : vector<32x16xf32>
    %176 = tpu.matmul %0, %175, %cst_135 {dimension_numbers = #tpu.dot_dimension_numbers<[1], [0], [0], [1], [0, 0, 1, 1], [], []>} : vector<32x128xbf16>, vector<128x16xbf16>, vector<32x16xf32> -> vector<32x16xf32>
    %177 = vector.broadcast %1 : vector<32x1xf32> to vector<32x16xf32>
    %178 = arith.addf %176, %177 : vector<32x16xf32>
    %c0_136 = arith.constant 0 : index
    %c0_137 = arith.constant 0 : index
    %c0_138 = arith.constant 0 : index
    %179 = vector.load %arg5[%c0_136, %c0_137, %c0_138] : memref<4x64x32xbf16, #tpu.memory_space<vmem>>, vector<1x64x32xbf16>
    %180 = vector.shape_cast %179 : vector<1x64x32xbf16> to vector<64x32xbf16>
    %181 = arith.truncf %178 : vector<32x16xf32> to vector<32x16xbf16>
    %cst_139 = arith.constant dense<0.000000e+00> : vector<64x16xf32>
    %182 = tpu.matmul %180, %181, %cst_139 {dimension_numbers = #tpu.dot_dimension_numbers<[1], [0], [0], [1], [0, 0, 1, 1], [], []>} : vector<64x32xbf16>, vector<32x16xbf16>, vector<64x16xf32> -> vector<64x16xf32>
    %183 = arith.addf %173, %182 : vector<64x16xf32>
    %c9 = arith.constant 9 : index
    %c0_140 = arith.constant 0 : index
    %c0_141 = arith.constant 0 : index
    %184 = vector.load %arg2[%c9, %c0_140, %c0_141] : memref<16x128x16xbf16, #tpu.memory_space<vmem>>, vector<1x128x16xbf16>
    %185 = vector.shape_cast %184 : vector<1x128x16xbf16> to vector<128x16xbf16>
    %cst_142 = arith.constant dense<0.000000e+00> : vector<32x16xf32>
    %186 = tpu.matmul %0, %185, %cst_142 {dimension_numbers = #tpu.dot_dimension_numbers<[1], [0], [0], [1], [0, 0, 1, 1], [], []>} : vector<32x128xbf16>, vector<128x16xbf16>, vector<32x16xf32> -> vector<32x16xf32>
    %187 = vector.broadcast %1 : vector<32x1xf32> to vector<32x16xf32>
    %188 = arith.addf %186, %187 : vector<32x16xf32>
    %c1_143 = arith.constant 1 : index
    %c0_144 = arith.constant 0 : index
    %c0_145 = arith.constant 0 : index
    %189 = vector.load %arg5[%c1_143, %c0_144, %c0_145] : memref<4x64x32xbf16, #tpu.memory_space<vmem>>, vector<1x64x32xbf16>
    %190 = vector.shape_cast %189 : vector<1x64x32xbf16> to vector<64x32xbf16>
    %191 = arith.truncf %188 : vector<32x16xf32> to vector<32x16xbf16>
    %cst_146 = arith.constant dense<0.000000e+00> : vector<64x16xf32>
    %192 = tpu.matmul %190, %191, %cst_146 {dimension_numbers = #tpu.dot_dimension_numbers<[1], [0], [0], [1], [0, 0, 1, 1], [], []>} : vector<64x32xbf16>, vector<32x16xbf16>, vector<64x16xf32> -> vector<64x16xf32>
    %193 = arith.addf %183, %192 : vector<64x16xf32>
    %c10 = arith.constant 10 : index
    %c0_147 = arith.constant 0 : index
    %c0_148 = arith.constant 0 : index
    %194 = vector.load %arg2[%c10, %c0_147, %c0_148] : memref<16x128x16xbf16, #tpu.memory_space<vmem>>, vector<1x128x16xbf16>
    %195 = vector.shape_cast %194 : vector<1x128x16xbf16> to vector<128x16xbf16>
    %cst_149 = arith.constant dense<0.000000e+00> : vector<32x16xf32>
    %196 = tpu.matmul %0, %195, %cst_149 {dimension_numbers = #tpu.dot_dimension_numbers<[1], [0], [0], [1], [0, 0, 1, 1], [], []>} : vector<32x128xbf16>, vector<128x16xbf16>, vector<32x16xf32> -> vector<32x16xf32>
    %197 = vector.broadcast %1 : vector<32x1xf32> to vector<32x16xf32>
    %198 = arith.addf %196, %197 : vector<32x16xf32>
    %c2_150 = arith.constant 2 : index
    %c0_151 = arith.constant 0 : index
    %c0_152 = arith.constant 0 : index
    %199 = vector.load %arg5[%c2_150, %c0_151, %c0_152] : memref<4x64x32xbf16, #tpu.memory_space<vmem>>, vector<1x64x32xbf16>
    %200 = vector.shape_cast %199 : vector<1x64x32xbf16> to vector<64x32xbf16>
    %201 = arith.truncf %198 : vector<32x16xf32> to vector<32x16xbf16>
    %cst_153 = arith.constant dense<0.000000e+00> : vector<64x16xf32>
    %202 = tpu.matmul %200, %201, %cst_153 {dimension_numbers = #tpu.dot_dimension_numbers<[1], [0], [0], [1], [0, 0, 1, 1], [], []>} : vector<64x32xbf16>, vector<32x16xbf16>, vector<64x16xf32> -> vector<64x16xf32>
    %203 = arith.addf %193, %202 : vector<64x16xf32>
    %c11 = arith.constant 11 : index
    %c0_154 = arith.constant 0 : index
    %c0_155 = arith.constant 0 : index
    %204 = vector.load %arg2[%c11, %c0_154, %c0_155] : memref<16x128x16xbf16, #tpu.memory_space<vmem>>, vector<1x128x16xbf16>
    %205 = vector.shape_cast %204 : vector<1x128x16xbf16> to vector<128x16xbf16>
    %cst_156 = arith.constant dense<0.000000e+00> : vector<32x16xf32>
    %206 = tpu.matmul %0, %205, %cst_156 {dimension_numbers = #tpu.dot_dimension_numbers<[1], [0], [0], [1], [0, 0, 1, 1], [], []>} : vector<32x128xbf16>, vector<128x16xbf16>, vector<32x16xf32> -> vector<32x16xf32>
    %207 = vector.broadcast %1 : vector<32x1xf32> to vector<32x16xf32>
    %208 = arith.addf %206, %207 : vector<32x16xf32>
    %c3_157 = arith.constant 3 : index
    %c0_158 = arith.constant 0 : index
    %c0_159 = arith.constant 0 : index
    %209 = vector.load %arg5[%c3_157, %c0_158, %c0_159] : memref<4x64x32xbf16, #tpu.memory_space<vmem>>, vector<1x64x32xbf16>
    %210 = vector.shape_cast %209 : vector<1x64x32xbf16> to vector<64x32xbf16>
    %211 = arith.truncf %208 : vector<32x16xf32> to vector<32x16xbf16>
    %cst_160 = arith.constant dense<0.000000e+00> : vector<64x16xf32>
    %212 = tpu.matmul %210, %211, %cst_160 {dimension_numbers = #tpu.dot_dimension_numbers<[1], [0], [0], [1], [0, 0, 1, 1], [], []>} : vector<64x32xbf16>, vector<32x16xbf16>, vector<64x16xf32> -> vector<64x16xf32>
    %213 = arith.addf %203, %212 : vector<64x16xf32>
    %214 = vector.broadcast %2 : vector<64x1xf32> to vector<64x16xf32>
    %215 = arith.addf %213, %214 : vector<64x16xf32>
    %c2_161 = arith.constant 2 : index
    %c0_162 = arith.constant 0 : index
    %c0_163 = arith.constant 0 : index
    %216 = vector.load %arg7[%c2_161, %c0_162, %c0_163] : memref<4x128x64xbf16, #tpu.memory_space<vmem>>, vector<1x128x64xbf16>
    %217 = vector.shape_cast %216 : vector<1x128x64xbf16> to vector<128x64xbf16>
    %218 = arith.truncf %215 : vector<64x16xf32> to vector<64x16xbf16>
    %cst_164 = arith.constant dense<0.000000e+00> : vector<128x16xf32>
    %219 = tpu.matmul %217, %218, %cst_164 {dimension_numbers = #tpu.dot_dimension_numbers<[1], [0], [0], [1], [0, 0, 1, 1], [], []>} : vector<128x64xbf16>, vector<64x16xbf16>, vector<128x16xf32> -> vector<128x16xf32>
    %220 = arith.addf %172, %219 : vector<128x16xf32>
    %cst_165 = arith.constant 0.000000e+00 : f32
    %221 = vector.broadcast %cst_165 : f32 to vector<64x16xf32>
    %c12 = arith.constant 12 : index
    %c0_166 = arith.constant 0 : index
    %c0_167 = arith.constant 0 : index
    %222 = vector.load %arg2[%c12, %c0_166, %c0_167] : memref<16x128x16xbf16, #tpu.memory_space<vmem>>, vector<1x128x16xbf16>
    %223 = vector.shape_cast %222 : vector<1x128x16xbf16> to vector<128x16xbf16>
    %cst_168 = arith.constant dense<0.000000e+00> : vector<32x16xf32>
    %224 = tpu.matmul %0, %223, %cst_168 {dimension_numbers = #tpu.dot_dimension_numbers<[1], [0], [0], [1], [0, 0, 1, 1], [], []>} : vector<32x128xbf16>, vector<128x16xbf16>, vector<32x16xf32> -> vector<32x16xf32>
    %225 = vector.broadcast %1 : vector<32x1xf32> to vector<32x16xf32>
    %226 = arith.addf %224, %225 : vector<32x16xf32>
    %c0_169 = arith.constant 0 : index
    %c0_170 = arith.constant 0 : index
    %c0_171 = arith.constant 0 : index
    %227 = vector.load %arg5[%c0_169, %c0_170, %c0_171] : memref<4x64x32xbf16, #tpu.memory_space<vmem>>, vector<1x64x32xbf16>
    %228 = vector.shape_cast %227 : vector<1x64x32xbf16> to vector<64x32xbf16>
    %229 = arith.truncf %226 : vector<32x16xf32> to vector<32x16xbf16>
    %cst_172 = arith.constant dense<0.000000e+00> : vector<64x16xf32>
    %230 = tpu.matmul %228, %229, %cst_172 {dimension_numbers = #tpu.dot_dimension_numbers<[1], [0], [0], [1], [0, 0, 1, 1], [], []>} : vector<64x32xbf16>, vector<32x16xbf16>, vector<64x16xf32> -> vector<64x16xf32>
    %231 = arith.addf %221, %230 : vector<64x16xf32>
    %c13 = arith.constant 13 : index
    %c0_173 = arith.constant 0 : index
    %c0_174 = arith.constant 0 : index
    %232 = vector.load %arg2[%c13, %c0_173, %c0_174] : memref<16x128x16xbf16, #tpu.memory_space<vmem>>, vector<1x128x16xbf16>
    %233 = vector.shape_cast %232 : vector<1x128x16xbf16> to vector<128x16xbf16>
    %cst_175 = arith.constant dense<0.000000e+00> : vector<32x16xf32>
    %234 = tpu.matmul %0, %233, %cst_175 {dimension_numbers = #tpu.dot_dimension_numbers<[1], [0], [0], [1], [0, 0, 1, 1], [], []>} : vector<32x128xbf16>, vector<128x16xbf16>, vector<32x16xf32> -> vector<32x16xf32>
    %235 = vector.broadcast %1 : vector<32x1xf32> to vector<32x16xf32>
    %236 = arith.addf %234, %235 : vector<32x16xf32>
    %c1_176 = arith.constant 1 : index
    %c0_177 = arith.constant 0 : index
    %c0_178 = arith.constant 0 : index
    %237 = vector.load %arg5[%c1_176, %c0_177, %c0_178] : memref<4x64x32xbf16, #tpu.memory_space<vmem>>, vector<1x64x32xbf16>
    %238 = vector.shape_cast %237 : vector<1x64x32xbf16> to vector<64x32xbf16>
    %239 = arith.truncf %236 : vector<32x16xf32> to vector<32x16xbf16>
    %cst_179 = arith.constant dense<0.000000e+00> : vector<64x16xf32>
    %240 = tpu.matmul %238, %239, %cst_179 {dimension_numbers = #tpu.dot_dimension_numbers<[1], [0], [0], [1], [0, 0, 1, 1], [], []>} : vector<64x32xbf16>, vector<32x16xbf16>, vector<64x16xf32> -> vector<64x16xf32>
    %241 = arith.addf %231, %240 : vector<64x16xf32>
    %c14 = arith.constant 14 : index
    %c0_180 = arith.constant 0 : index
    %c0_181 = arith.constant 0 : index
    %242 = vector.load %arg2[%c14, %c0_180, %c0_181] : memref<16x128x16xbf16, #tpu.memory_space<vmem>>, vector<1x128x16xbf16>
    %243 = vector.shape_cast %242 : vector<1x128x16xbf16> to vector<128x16xbf16>
    %cst_182 = arith.constant dense<0.000000e+00> : vector<32x16xf32>
    %244 = tpu.matmul %0, %243, %cst_182 {dimension_numbers = #tpu.dot_dimension_numbers<[1], [0], [0], [1], [0, 0, 1, 1], [], []>} : vector<32x128xbf16>, vector<128x16xbf16>, vector<32x16xf32> -> vector<32x16xf32>
    %245 = vector.broadcast %1 : vector<32x1xf32> to vector<32x16xf32>
    %246 = arith.addf %244, %245 : vector<32x16xf32>
    %c2_183 = arith.constant 2 : index
    %c0_184 = arith.constant 0 : index
    %c0_185 = arith.constant 0 : index
    %247 = vector.load %arg5[%c2_183, %c0_184, %c0_185] : memref<4x64x32xbf16, #tpu.memory_space<vmem>>, vector<1x64x32xbf16>
    %248 = vector.shape_cast %247 : vector<1x64x32xbf16> to vector<64x32xbf16>
    %249 = arith.truncf %246 : vector<32x16xf32> to vector<32x16xbf16>
    %cst_186 = arith.constant dense<0.000000e+00> : vector<64x16xf32>
    %250 = tpu.matmul %248, %249, %cst_186 {dimension_numbers = #tpu.dot_dimension_numbers<[1], [0], [0], [1], [0, 0, 1, 1], [], []>} : vector<64x32xbf16>, vector<32x16xbf16>, vector<64x16xf32> -> vector<64x16xf32>
    %251 = arith.addf %241, %250 : vector<64x16xf32>
    %c15 = arith.constant 15 : index
    %c0_187 = arith.constant 0 : index
    %c0_188 = arith.constant 0 : index
    %252 = vector.load %arg2[%c15, %c0_187, %c0_188] : memref<16x128x16xbf16, #tpu.memory_space<vmem>>, vector<1x128x16xbf16>
    %253 = vector.shape_cast %252 : vector<1x128x16xbf16> to vector<128x16xbf16>
    %cst_189 = arith.constant dense<0.000000e+00> : vector<32x16xf32>
    %254 = tpu.matmul %0, %253, %cst_189 {dimension_numbers = #tpu.dot_dimension_numbers<[1], [0], [0], [1], [0, 0, 1, 1], [], []>} : vector<32x128xbf16>, vector<128x16xbf16>, vector<32x16xf32> -> vector<32x16xf32>
    %255 = vector.broadcast %1 : vector<32x1xf32> to vector<32x16xf32>
    %256 = arith.addf %254, %255 : vector<32x16xf32>
    %c3_190 = arith.constant 3 : index
    %c0_191 = arith.constant 0 : index
    %c0_192 = arith.constant 0 : index
    %257 = vector.load %arg5[%c3_190, %c0_191, %c0_192] : memref<4x64x32xbf16, #tpu.memory_space<vmem>>, vector<1x64x32xbf16>
    %258 = vector.shape_cast %257 : vector<1x64x32xbf16> to vector<64x32xbf16>
    %259 = arith.truncf %256 : vector<32x16xf32> to vector<32x16xbf16>
    %cst_193 = arith.constant dense<0.000000e+00> : vector<64x16xf32>
    %260 = tpu.matmul %258, %259, %cst_193 {dimension_numbers = #tpu.dot_dimension_numbers<[1], [0], [0], [1], [0, 0, 1, 1], [], []>} : vector<64x32xbf16>, vector<32x16xbf16>, vector<64x16xf32> -> vector<64x16xf32>
    %261 = arith.addf %251, %260 : vector<64x16xf32>
    %262 = vector.broadcast %2 : vector<64x1xf32> to vector<64x16xf32>
    %263 = arith.addf %261, %262 : vector<64x16xf32>
    %c3_194 = arith.constant 3 : index
    %c0_195 = arith.constant 0 : index
    %c0_196 = arith.constant 0 : index
    %264 = vector.load %arg7[%c3_194, %c0_195, %c0_196] : memref<4x128x64xbf16, #tpu.memory_space<vmem>>, vector<1x128x64xbf16>
    %265 = vector.shape_cast %264 : vector<1x128x64xbf16> to vector<128x64xbf16>
    %266 = arith.truncf %263 : vector<64x16xf32> to vector<64x16xbf16>
    %cst_197 = arith.constant dense<0.000000e+00> : vector<128x16xf32>
    %267 = tpu.matmul %265, %266, %cst_197 {dimension_numbers = #tpu.dot_dimension_numbers<[1], [0], [0], [1], [0, 0, 1, 1], [], []>} : vector<128x64xbf16>, vector<64x16xbf16>, vector<128x16xf32> -> vector<128x16xf32>
    %268 = arith.addf %220, %267 : vector<128x16xf32>
    %c0_198 = arith.constant 0 : index
    %c0_199 = arith.constant 0 : index
    %269 = vector.load %arg8[%c0_198, %c0_199] : memref<128x1xf32, #tpu.memory_space<vmem>>, vector<128x1xf32>
    %270 = vector.broadcast %269 : vector<128x1xf32> to vector<128x16xf32>
    %271 = arith.addf %268, %270 : vector<128x16xf32>
    %c0_200 = arith.constant 0 : index
    %c0_201 = arith.constant 0 : index
    %272 = vector.load %arg13[%c0_200, %c0_201] : memref<256x128xbf16, #tpu.memory_space<vmem>>, vector<256x128xbf16>
    %273 = arith.truncf %271 : vector<128x16xf32> to vector<128x16xbf16>
    %cst_202 = arith.constant dense<0.000000e+00> : vector<256x16xf32>
    %274 = tpu.matmul %272, %273, %cst_202 {dimension_numbers = #tpu.dot_dimension_numbers<[1], [0], [0], [1], [0, 0, 1, 1], [], []>} : vector<256x128xbf16>, vector<128x16xbf16>, vector<256x16xf32> -> vector<256x16xf32>
    %c0_203 = arith.constant 0 : index
    %c0_204 = arith.constant 0 : index
    %275 = vector.load %arg14[%c0_203, %c0_204] : memref<256x1xf32, #tpu.memory_space<vmem>>, vector<256x1xf32>
    %276 = vector.broadcast %275 : vector<256x1xf32> to vector<256x16xf32>
    %277 = arith.addf %274, %276 : vector<256x16xf32>
    %c0_205 = arith.constant 0 : index
    %c0_206 = arith.constant 0 : index
    %278 = vector.load %arg19[%c0_205, %c0_206] : memref<256x1xf32, #tpu.memory_space<vmem>>, vector<256x1xf32>
    %279 = vector.broadcast %278 : vector<256x1xf32> to vector<256x16xf32>
    %280 = arith.addf %277, %279 : vector<256x16xf32>
    %c0_207 = arith.constant 0 : index
    %c0_208 = arith.constant 0 : index
    %281 = vector.load %arg22[%c0_207, %c0_208] : memref<256x16xf32, #tpu.memory_space<vmem>>, vector<256x16xf32>
    tpu.vector_store %arg22[%c0_207, %c0_208], %280 {strides = array<i32>} : memref<256x16xf32, #tpu.memory_space<vmem>>, vector<256x16xf32>,
    return
  }
}

</mosaic_0001>

<llo_original>
// kernel: image_encoder_forward.1
$region0: #{image_encoder_forward.1}
  #allocation0 [shape = 'u32[]', space=smem, size = 0x4, offset = 0x4, fixed_abs, tag = 'smem constant byte address 0x4 - core index']
  #allocation1 [shape = 'u32[72,128]{1,0:T(1,128)}', space=vmem, size = 0x9000, scoped, tag = 'internal scratch']
  %s0 = inlined_call_operand.vmem [shape: bf16[128,256], index: 0, kind: input, shape index: {}]
  %s1 = inlined_call_operand.vmem [shape: bf16[4,128,64], index: 1, kind: input, shape index: {}]
  %s2 = inlined_call_operand.vmem [shape: bf16[16,128,16], index: 2, kind: input, shape index: {}]
  %s3 = inlined_call_operand.vmem [shape: bf16[32,128], index: 3, kind: input, shape index: {}]
  %s4 = inlined_call_operand.vmem [shape: f32[32,1], index: 4, kind: input, shape index: {}]
  %s5 = inlined_call_operand.vmem [shape: bf16[4,64,32], index: 5, kind: input, shape index: {}]
  %s6 = inlined_call_operand.vmem [shape: f32[64,1], index: 6, kind: input, shape index: {}]
  %s7 = inlined_call_operand.vmem [shape: bf16[4,128,64], index: 7, kind: input, shape index: {}]
  %s8 = inlined_call_operand.vmem [shape: f32[128,1], index: 8, kind: input, shape index: {}]
  %s9 = inlined_call_operand.vmem [shape: bf16[256,32], index: 9, kind: input, shape index: {}]
  %s10 = inlined_call_operand.vmem [shape: f32[256,1], index: 10, kind: input, shape index: {}]
  %s11 = inlined_call_operand.vmem [shape: bf16[256,64], index: 11, kind: input, shape index: {}]
  %s12 = inlined_call_operand.vmem [shape: f32[256,1], index: 12, kind: input, shape index: {}]
  %s13 = inlined_call_operand.vmem [shape: bf16[256,128], index: 13, kind: input, shape index: {}]
  %s14 = inlined_call_operand.vmem [shape: f32[256,1], index: 14, kind: input, shape index: {}]
  %s15 = inlined_call_operand.vmem [shape: bf16[32,256], index: 15, kind: input, shape index: {}]
  %s16 = inlined_call_operand.vmem [shape: f32[32,1], index: 16, kind: input, shape index: {}]
  %s17 = inlined_call_operand.vmem [shape: bf16[64,256], index: 17, kind: input, shape index: {}]
  %s18 = inlined_call_operand.vmem [shape: f32[64,1], index: 18, kind: input, shape index: {}]
  %s19 = inlined_call_operand.vmem [shape: f32[256,1], index: 19, kind: input, shape index: {}]
  %s20 = inlined_call_operand.vmem [shape: f32[32,256], index: 20, kind: output, shape index: {0}]
  %s21 = inlined_call_operand.vmem [shape: f32[64,64], index: 21, kind: output, shape index: {1}]
  %s22 = inlined_call_operand.vmem [shape: f32[256,16], index: 22, kind: output, shape index: {2}]
  %23 = xla_tuple %s20, %s21, %s22
  %s24 = sld [smem:[#allocation0]]
  $region106: #{image_encoder_forward.1} parent=0
    _
  %s26 = ssub.s32 1, %s24
  %s27 = scalar_select 0, %s26, %s24
  // Predicated region
  $region2: #{image_encoder_forward.1} parent=0 // pred_check
    _
  $region3: #{image_encoder_forward.1} parent=0 // pred_check_branch
    %29 = sbr.rel (0) target = $region5
  $region4: #{image_encoder_forward.1} parent=0 // pred_region
    _
  $region5: #{image_encoder_forward.1} parent=0 // pred_fallthru
    _
  // Predicated region
  $region6: #{image_encoder_forward.1} parent=0 // pred_check
    _
  $region7: #{image_encoder_forward.1} parent=0 // pred_check_branch
    %31 = sbr.rel (0) target = $region9
  $region8: #{image_encoder_forward.1} parent=0 // pred_region
    _
  $region9: #{image_encoder_forward.1} parent=0 // pred_fallthru
    _
  // Predicated region
  $region10: #{image_encoder_forward.1} parent=0 // pred_check
    _
  $region11: #{image_encoder_forward.1} parent=0 // pred_check_branch
    %33 = sbr.rel (0) target = $region13
  $region12: #{image_encoder_forward.1} parent=0 // pred_region
    _
  $region13: #{image_encoder_forward.1} parent=0 // pred_fallthru
    _
  // Predicated region
  $region14: #{image_encoder_forward.1} parent=0 // pred_check
    _
  $region15: #{image_encoder_forward.1} parent=0 // pred_check_branch
    %35 = sbr.rel (0) target = $region17
  $region16: #{image_encoder_forward.1} parent=0 // pred_region
    _
  $region17: #{image_encoder_forward.1} parent=0 // pred_fallthru
    _
  // Predicated region
  $region18: #{image_encoder_forward.1} parent=0 // pred_check
    _
  $region19: #{image_encoder_forward.1} parent=0 // pred_check_branch
    %37 = sbr.rel (0) target = $region21
  $region20: #{image_encoder_forward.1} parent=0 // pred_region
    _
  $region21: #{image_encoder_forward.1} parent=0 // pred_fallthru
    _
  // Predicated region
  $region22: #{image_encoder_forward.1} parent=0 // pred_check
    _
  $region23: #{image_encoder_forward.1} parent=0 // pred_check_branch
    %39 = sbr.rel (0) target = $region25
  $region24: #{image_encoder_forward.1} parent=0 // pred_region
    _
  $region25: #{image_encoder_forward.1} parent=0 // pred_fallthru
    _
  // Predicated region
  $region26: #{image_encoder_forward.1} parent=0 // pred_check
    _
  $region27: #{image_encoder_forward.1} parent=0 // pred_check_branch
    %41 = sbr.rel (0) target = $region29
  $region28: #{image_encoder_forward.1} parent=0 // pred_region
    _
  $region29: #{image_encoder_forward.1} parent=0 // pred_fallthru
    _
  // Predicated region
  $region30: #{image_encoder_forward.1} parent=0 // pred_check
    _
  $region31: #{image_encoder_forward.1} parent=0 // pred_check_branch
    %43 = sbr.rel (0) target = $region33
  $region32: #{image_encoder_forward.1} parent=0 // pred_region
    _
  $region33: #{image_encoder_forward.1} parent=0 // pred_fallthru
    _
  // Predicated region
  $region34: #{image_encoder_forward.1} parent=0 // pred_check
    _
  $region35: #{image_encoder_forward.1} parent=0 // pred_check_branch
    %45 = sbr.rel (0) target = $region37
  $region36: #{image_encoder_forward.1} parent=0 // pred_region
    _
  $region37: #{image_encoder_forward.1} parent=0 // pred_fallthru
    _
  // Predicated region
  $region38: #{image_encoder_forward.1} parent=0 // pred_check
    _
  $region39: #{image_encoder_forward.1} parent=0 // pred_check_branch
    %47 = sbr.rel (0) target = $region41
  $region40: #{image_encoder_forward.1} parent=0 // pred_region
    _
  $region41: #{image_encoder_forward.1} parent=0 // pred_fallthru
    _
  // Predicated region
  $region42: #{image_encoder_forward.1} parent=0 // pred_check
    _
  $region43: #{image_encoder_forward.1} parent=0 // pred_check_branch
    %49 = sbr.rel (0) target = $region45
  $region44: #{image_encoder_forward.1} parent=0 // pred_region
    _
  $region45: #{image_encoder_forward.1} parent=0 // pred_fallthru
    _
  // Predicated region
  $region46: #{image_encoder_forward.1} parent=0 // pred_check
    _
  $region47: #{image_encoder_forward.1} parent=0 // pred_check_branch
    %51 = sbr.rel (0) target = $region49
  $region48: #{image_encoder_forward.1} parent=0 // pred_region
    _
  $region49: #{image_encoder_forward.1} parent=0 // pred_fallthru
    _
  // Predicated region
  $region50: #{image_encoder_forward.1} parent=0 // pred_check
    _
  $region51: #{image_encoder_forward.1} parent=0 // pred_check_branch
    %53 = sbr.rel (0) target = $region53
  $region52: #{image_encoder_forward.1} parent=0 // pred_region
    _
  $region53: #{image_encoder_forward.1} parent=0 // pred_fallthru
    _
  // Predicated region
  $region54: #{image_encoder_forward.1} parent=0 // pred_check
    _
  $region55: #{image_encoder_forward.1} parent=0 // pred_check_branch
    %55 = sbr.rel (0) target = $region57
  $region56: #{image_encoder_forward.1} parent=0 // pred_region
    _
  $region57: #{image_encoder_forward.1} parent=0 // pred_fallthru
    _
  // Predicated region
  $region58: #{image_encoder_forward.1} parent=0 // pred_check
    _
  $region59: #{image_encoder_forward.1} parent=0 // pred_check_branch
    %57 = sbr.rel (0) target = $region61
  $region60: #{image_encoder_forward.1} parent=0 // pred_region
    _
  $region61: #{image_encoder_forward.1} parent=0 // pred_fallthru
    _
  // Predicated region
  $region62: #{image_encoder_forward.1} parent=0 // pred_check
    _
  $region63: #{image_encoder_forward.1} parent=0 // pred_check_branch
    %59 = sbr.rel (0) target = $region65
  $region64: #{image_encoder_forward.1} parent=0 // pred_region
    _
  $region65: #{image_encoder_forward.1} parent=0 // pred_fallthru
    _
  // Predicated region
  $region66: #{image_encoder_forward.1} parent=0 // pred_check
    _
  $region67: #{image_encoder_forward.1} parent=0 // pred_check_branch
    %61 = sbr.rel (0) target = $region69
  $region68: #{image_encoder_forward.1} parent=0 // pred_region
    _
  $region69: #{image_encoder_forward.1} parent=0 // pred_fallthru
    _
  // Predicated region
  $region70: #{image_encoder_forward.1} parent=0 // pred_check
    _
  $region71: #{image_encoder_forward.1} parent=0 // pred_check_branch
    %63 = sbr.rel (0) target = $region73
  $region72: #{image_encoder_forward.1} parent=0 // pred_region
    _
  $region73: #{image_encoder_forward.1} parent=0 // pred_fallthru
    _
  // Predicated region
  $region74: #{image_encoder_forward.1} parent=0 // pred_check
    _
  $region75: #{image_encoder_forward.1} parent=0 // pred_check_branch
    %65 = sbr.rel (0) target = $region77
  $region76: #{image_encoder_forward.1} parent=0 // pred_region
    _
  $region77: #{image_encoder_forward.1} parent=0 // pred_fallthru
    _
  // Predicated region
  $region78: #{image_encoder_forward.1} parent=0 // pred_check
    _
  $region79: #{image_encoder_forward.1} parent=0 // pred_check_branch
    %67 = sbr.rel (0) target = $region81
  $region80: #{image_encoder_forward.1} parent=0 // pred_region
    _
  $region81: #{image_encoder_forward.1} parent=0 // pred_fallthru
    _
  %v69 = vld [vmem:[%s3] sm:$0xf]
  %v70 = vld [vmem:[%s3 + $0x4] sm:$0xf]
  %v71 = vld [vmem:[%s3 + $0x8] sm:$0xf]
  %v72 = vld [vmem:[%s3 + $0xc] sm:$0xf]
  %v73 = vld [vmem:[%s4] sm:$0xff]
  %v74 = vld [vmem:[%s4 + $0x8] sm:$0xff]
  %v75 = vld [vmem:[%s4 + $0x10] sm:$0xff]
  %v76 = vld [vmem:[%s4 + $0x18] sm:$0xff]
  %v77 = vld [vmem:[%s6] sm:$0xff]
  %v78 = vld [vmem:[%s6 + $0x8] sm:$0xff]
  %v79 = vld [vmem:[%s6 + $0x10] sm:$0xff]
  %v80 = vld [vmem:[%s6 + $0x18] sm:$0xff]
  %v81 = vld [vmem:[%s6 + $0x20] sm:$0xff]
  %v82 = vld [vmem:[%s6 + $0x28] sm:$0xff]
  %v83 = vld [vmem:[%s6 + $0x30] sm:$0xff]
  %v84 = vld [vmem:[%s6 + $0x38] sm:$0xff]
  %v85 = vld [vmem:[%s0] sm:$0xff]
  %v86 = vld [vmem:[%s0 + $0x8] sm:$0xff]
  %v87 = vld [vmem:[%s0 + $0x10] sm:$0xff]
  %v88 = vld [vmem:[%s0 + $0x18] sm:$0xff]
  %v89 = vld [vmem:[%s0 + $0x20] sm:$0xff]
  %v90 = vld [vmem:[%s0 + $0x28] sm:$0xff]
  %v91 = vld [vmem:[%s0 + $0x30] sm:$0xff]
  %v92 = vld [vmem:[%s0 + $0x38] sm:$0xff]
  %v93 = vld [vmem:[%s0 + $0x40] sm:$0xff]
  %v94 = vld [vmem:[%s0 + $0x48] sm:$0xff]
  %v95 = vld [vmem:[%s0 + $0x50] sm:$0xff]
  %v96 = vld [vmem:[%s0 + $0x58] sm:$0xff]
  %v97 = vld [vmem:[%s0 + $0x60] sm:$0xff]
  %v98 = vld [vmem:[%s0 + $0x68] sm:$0xff]
  %v99 = vld [vmem:[%s0 + $0x70] sm:$0xff]
  %v100 = vld [vmem:[%s0 + $0x78] sm:$0xff]
  %102 = vset.pattern.permute.xlu0 0
  %103 = vperm.xlu0 %102, %v73
  %v104 = vpop.permute.xlu0 %103
  %107 = vset.pattern.permute.xlu0 0
  %108 = vperm.xlu0 %107, %v74
  %v109 = vpop.permute.xlu0 %108
  %112 = vset.pattern.permute.xlu0 0
  %113 = vperm.xlu0 %112, %v75
  %v114 = vpop.permute.xlu0 %113
  %117 = vset.pattern.permute.xlu0 0
  %118 = vperm.xlu0 %117, %v76
  %v119 = vpop.permute.xlu0 %118
  %v125 = vunpack.c.l.b16 %v69
  %v126 = vunpack.c.l.b16 %v70
  %v127 = vunpack.c.l.b16 %v71
  %v128 = vunpack.c.l.b16 %v72
  %v129 = vpack.c.b16 %v126, %v125
  %v130 = vpack.c.b16 %v128, %v127
  %v149 = vunpack.c.l.b16 %v85
  %v150 = vunpack.c.h.b16 %v85
  %v151 = vunpack.c.l.b16 %v86
  %v152 = vunpack.c.h.b16 %v86
  %v153 = vunpack.c.l.b16 %v87
  %v154 = vunpack.c.h.b16 %v87
  %v155 = vunpack.c.l.b16 %v88
  %v156 = vunpack.c.h.b16 %v88
  %v157 = vunpack.c.l.b16 %v89
  %v158 = vunpack.c.h.b16 %v89
  %v159 = vunpack.c.l.b16 %v90
  %v160 = vunpack.c.h.b16 %v90
  %v161 = vunpack.c.l.b16 %v91
  %v162 = vunpack.c.h.b16 %v91
  %v163 = vunpack.c.l.b16 %v92
  %v164 = vunpack.c.h.b16 %v92
  %v165 = vunpack.c.l.b16 %v93
  %v166 = vunpack.c.h.b16 %v93
  %v167 = vunpack.c.l.b16 %v94
  %v168 = vunpack.c.h.b16 %v94
  %v169 = vunpack.c.l.b16 %v95
  %v170 = vunpack.c.h.b16 %v95
  %v171 = vunpack.c.l.b16 %v96
  %v172 = vunpack.c.h.b16 %v96
  %v173 = vunpack.c.l.b16 %v97
  %v174 = vunpack.c.h.b16 %v97
  %v175 = vunpack.c.l.b16 %v98
  %v176 = vunpack.c.h.b16 %v98
  %v177 = vunpack.c.l.b16 %v99
  %v178 = vunpack.c.h.b16 %v99
  %v179 = vunpack.c.l.b16 %v100
  %v180 = vunpack.c.h.b16 %v100
  %v181 = vpack.c.b16 %v151, %v149
  %v182 = vpack.c.b16 %v152, %v150
  %v183 = vpack.c.b16 %v155, %v153
  %v184 = vpack.c.b16 %v156, %v154
  %v185 = vpack.c.b16 %v159, %v157
  %v186 = vpack.c.b16 %v160, %v158
  %v187 = vpack.c.b16 %v163, %v161
  %v188 = vpack.c.b16 %v164, %v162
  %v189 = vpack.c.b16 %v167, %v165
  %v190 = vpack.c.b16 %v168, %v166
  %v191 = vpack.c.b16 %v171, %v169
  %v192 = vpack.c.b16 %v172, %v170
  %v193 = vpack.c.b16 %v175, %v173
  %v194 = vpack.c.b16 %v176, %v174
  %v195 = vpack.c.b16 %v179, %v177
  %v196 = vpack.c.b16 %v180, %v178
  %213 = vmatpush.bf16.msra.mxu0 %v195
  %214 = vmatpush.bf16.msra.mxu0 %v193
  %215 = vmatpush.bf16.msra.mxu0 %v191
  %216 = vmatpush.bf16.msra.mxu0 %v189
  %217 = vmatpush.bf16.msra.mxu0 %v187
  %218 = vmatpush.bf16.msra.mxu0 %v185
  %219 = vmatpush.bf16.msra.mxu0 %v183
  %220 = vmatpush.bf16.msra.mxu0 %v181
  %221 = vmatmul.bf16.gmra.mxu0 %v129
  %v222 = vpop.f32.mrf.mxu0
  %v223 = vadd.f32 %v104, %v222
  %v224 = vpop.f32.mrf.mxu0
  %v225 = vadd.f32 %v109, %v224
  %226 = vmatmul.bf16.gmra.mxu0 %v130
  %v227 = vpop.f32.mrf.mxu0
  %v228 = vadd.f32 %v114, %v227
  %v229 = vpop.f32.mrf.mxu0
  %v230 = vadd.f32 %v119, %v229
  %231 = vdwg.mxu0
  %232 = vmatpush.bf16.msra.mxu0 %v196
  %233 = vmatpush.bf16.msra.mxu0 %v194
  %234 = vmatpush.bf16.msra.mxu0 %v192
  %235 = vmatpush.bf16.msra.mxu0 %v190
  %236 = vmatpush.bf16.msra.mxu0 %v188
  %237 = vmatpush.bf16.msra.mxu0 %v186
  %238 = vmatpush.bf16.msra.mxu0 %v184
  %239 = vmatpush.bf16.msra.mxu0 %v182
  %240 = vmatmul.bf16.gmra.mxu0 %v129
  %v241 = vpop.f32.mrf.mxu0
  %v242 = vadd.f32 %v104, %v241
  %v243 = vpop.f32.mrf.mxu0
  %v244 = vadd.f32 %v109, %v243
  %245 = vmatmul.bf16.gmra.mxu0 %v130
  %v246 = vpop.f32.mrf.mxu0
  %v247 = vadd.f32 %v114, %v246
  %v248 = vpop.f32.mrf.mxu0
  %v249 = vadd.f32 %v119, %v248
  %250 = vdwg.mxu0
  %v251 = vld [vmem:[%s9] sm:$0xf]
  %v252 = vld [vmem:[%s9 + $0x4] sm:$0xf]
  %v253 = vld [vmem:[%s9 + $0x8] sm:$0xf]
  %v254 = vld [vmem:[%s9 + $0xc] sm:$0xf]
  %v255 = vld [vmem:[%s9 + $0x10] sm:$0xf]
  %v256 = vld [vmem:[%s9 + $0x14] sm:$0xf]
  %v257 = vld [vmem:[%s9 + $0x18] sm:$0xf]
  %v258 = vld [vmem:[%s9 + $0x1c] sm:$0xf]
  %v259 = vld [vmem:[%s9 + $0x20] sm:$0xf]
  %v260 = vld [vmem:[%s9 + $0x24] sm:$0xf]
  %v261 = vld [vmem:[%s9 + $0x28] sm:$0xf]
  %v262 = vld [vmem:[%s9 + $0x2c] sm:$0xf]
  %v263 = vld [vmem:[%s9 + $0x30] sm:$0xf]
  %v264 = vld [vmem:[%s9 + $0x34] sm:$0xf]
  %v265 = vld [vmem:[%s9 + $0x38] sm:$0xf]
  %v266 = vld [vmem:[%s9 + $0x3c] sm:$0xf]
  %v267 = vld [vmem:[%s9 + $0x40] sm:$0xf]
  %v268 = vld [vmem:[%s9 + $0x44] sm:$0xf]
  %v269 = vld [vmem:[%s9 + $0x48] sm:$0xf]
  %v270 = vld [vmem:[%s9 + $0x4c] sm:$0xf]
  %v271 = vld [vmem:[%s9 + $0x50] sm:$0xf]
  %v272 = vld [vmem:[%s9 + $0x54] sm:$0xf]
  %v273 = vld [vmem:[%s9 + $0x58] sm:$0xf]
  %v274 = vld [vmem:[%s9 + $0x5c] sm:$0xf]
  %v275 = vld [vmem:[%s9 + $0x60] sm:$0xf]
  %v276 = vld [vmem:[%s9 + $0x64] sm:$0xf]
  %v277 = vld [vmem:[%s9 + $0x68] sm:$0xf]
  %v278 = vld [vmem:[%s9 + $0x6c] sm:$0xf]
  %v279 = vld [vmem:[%s9 + $0x70] sm:$0xf]
  %v280 = vld [vmem:[%s9 + $0x74] sm:$0xf]
  %v281 = vld [vmem:[%s9 + $0x78] sm:$0xf]
  %v282 = vld [vmem:[%s9 + $0x7c] sm:$0xf]
  %v283 = vpack.c.bf16 %v225, %v223
  %v284 = vpack.c.bf16 %v244, %v242
  %v285 = vpack.c.bf16 %v230, %v228
  %v286 = vpack.c.bf16 %v249, %v247
  %v287 = vld [vmem:[%s10] sm:$0xff]
  %v288 = vld [vmem:[%s10 + $0x8] sm:$0xff]
  %v289 = vld [vmem:[%s10 + $0x10] sm:$0xff]
  %v290 = vld [vmem:[%s10 + $0x18] sm:$0xff]
  %v291 = vld [vmem:[%s10 + $0x20] sm:$0xff]
  %v292 = vld [vmem:[%s10 + $0x28] sm:$0xff]
  %v293 = vld [vmem:[%s10 + $0x30] sm:$0xff]
  %v294 = vld [vmem:[%s10 + $0x38] sm:$0xff]
  %v295 = vld [vmem:[%s10 + $0x40] sm:$0xff]
  %v296 = vld [vmem:[%s10 + $0x48] sm:$0xff]
  %v297 = vld [vmem:[%s10 + $0x50] sm:$0xff]
  %v298 = vld [vmem:[%s10 + $0x58] sm:$0xff]
  %v299 = vld [vmem:[%s10 + $0x60] sm:$0xff]
  %v300 = vld [vmem:[%s10 + $0x68] sm:$0xff]
  %v301 = vld [vmem:[%s10 + $0x70] sm:$0xff]
  %v302 = vld [vmem:[%s10 + $0x78] sm:$0xff]
  %v303 = vld [vmem:[%s10 + $0x80] sm:$0xff]
  %v304 = vld [vmem:[%s10 + $0x88] sm:$0xff]
  %v305 = vld [vmem:[%s10 + $0x90] sm:$0xff]
  %v306 = vld [vmem:[%s10 + $0x98] sm:$0xff]
  %v307 = vld [vmem:[%s10 + $0xa0] sm:$0xff]
  %v308 = vld [vmem:[%s10 + $0xa8] sm:$0xff]
  %v309 = vld [vmem:[%s10 + $0xb0] sm:$0xff]
  %v310 = vld [vmem:[%s10 + $0xb8] sm:$0xff]
  %v311 = vld [vmem:[%s10 + $0xc0] sm:$0xff]
  %v312 = vld [vmem:[%s10 + $0xc8] sm:$0xff]
  %v313 = vld [vmem:[%s10 + $0xd0] sm:$0xff]
  %v314 = vld [vmem:[%s10 + $0xd8] sm:$0xff]
  %v315 = vld [vmem:[%s10 + $0xe0] sm:$0xff]
  %v316 = vld [vmem:[%s10 + $0xe8] sm:$0xff]
  %v317 = vld [vmem:[%s10 + $0xf0] sm:$0xff]
  %v318 = vld [vmem:[%s10 + $0xf8] sm:$0xff]
  %320 = vset.pattern.permute.xlu0 0
  %321 = vperm.xlu0 %320, %v287
  %v322 = vpop.permute.xlu0 %321
  %325 = vset.pattern.permute.xlu0 0
  %326 = vperm.xlu0 %325, %v288
  %v327 = vpop.permute.xlu0 %326
  %330 = vset.pattern.permute.xlu0 0
  %331 = vperm.xlu0 %330, %v289
  %v332 = vpop.permute.xlu0 %331
  %335 = vset.pattern.permute.xlu0 0
  %336 = vperm.xlu0 %335, %v290
  %v337 = vpop.permute.xlu0 %336
  %340 = vset.pattern.permute.xlu0 0
  %341 = vperm.xlu0 %340, %v291
  %v342 = vpop.permute.xlu0 %341
  %345 = vset.pattern.permute.xlu0 0
  %346 = vperm.xlu0 %345, %v292
  %v347 = vpop.permute.xlu0 %346
  %350 = vset.pattern.permute.xlu0 0
  %351 = vperm.xlu0 %350, %v293
  %v352 = vpop.permute.xlu0 %351
  %355 = vset.pattern.permute.xlu0 0
  %356 = vperm.xlu0 %355, %v294
  %v357 = vpop.permute.xlu0 %356
  %360 = vset.pattern.permute.xlu0 0
  %361 = vperm.xlu0 %360, %v295
  %v362 = vpop.permute.xlu0 %361
  %365 = vset.pattern.permute.xlu0 0
  %366 = vperm.xlu0 %365, %v296
  %v367 = vpop.permute.xlu0 %366
  %370 = vset.pattern.permute.xlu0 0
  %371 = vperm.xlu0 %370, %v297
  %v372 = vpop.permute.xlu0 %371
  %375 = vset.pattern.permute.xlu0 0
  %376 = vperm.xlu0 %375, %v298
  %v377 = vpop.permute.xlu0 %376
  %380 = vset.pattern.permute.xlu0 0
  %381 = vperm.xlu0 %380, %v299
  %v382 = vpop.permute.xlu0 %381
  %385 = vset.pattern.permute.xlu0 0
  %386 = vperm.xlu0 %385, %v300
  %v387 = vpop.permute.xlu0 %386
  %390 = vset.pattern.permute.xlu0 0
  %391 = vperm.xlu0 %390, %v301
  %v392 = vpop.permute.xlu0 %391
  %395 = vset.pattern.permute.xlu0 0
  %396 = vperm.xlu0 %395, %v302
  %v397 = vpop.permute.xlu0 %396
  %400 = vset.pattern.permute.xlu0 0
  %401 = vperm.xlu0 %400, %v303
  %v402 = vpop.permute.xlu0 %401
  %405 = vset.pattern.permute.xlu0 0
  %406 = vperm.xlu0 %405, %v304
  %v407 = vpop.permute.xlu0 %406
  %410 = vset.pattern.permute.xlu0 0
  %411 = vperm.xlu0 %410, %v305
  %v412 = vpop.permute.xlu0 %411
  %415 = vset.pattern.permute.xlu0 0
  %416 = vperm.xlu0 %415, %v306
  %v417 = vpop.permute.xlu0 %416
  %420 = vset.pattern.permute.xlu0 0
  %421 = vperm.xlu0 %420, %v307
  %v422 = vpop.permute.xlu0 %421
  %425 = vset.pattern.permute.xlu0 0
  %426 = vperm.xlu0 %425, %v308
  %v427 = vpop.permute.xlu0 %426
  %430 = vset.pattern.permute.xlu0 0
  %431 = vperm.xlu0 %430, %v309
  %v432 = vpop.permute.xlu0 %431
  %435 = vset.pattern.permute.xlu0 0
  %436 = vperm.xlu0 %435, %v310
  %v437 = vpop.permute.xlu0 %436
  %440 = vset.pattern.permute.xlu0 0
  %441 = vperm.xlu0 %440, %v311
  %v442 = vpop.permute.xlu0 %441
  %445 = vset.pattern.permute.xlu0 0
  %446 = vperm.xlu0 %445, %v312
  %v447 = vpop.permute.xlu0 %446
  %450 = vset.pattern.permute.xlu0 0
  %451 = vperm.xlu0 %450, %v313
  %v452 = vpop.permute.xlu0 %451
  %455 = vset.pattern.permute.xlu0 0
  %456 = vperm.xlu0 %455, %v314
  %v457 = vpop.permute.xlu0 %456
  %460 = vset.pattern.permute.xlu0 0
  %461 = vperm.xlu0 %460, %v315
  %v462 = vpop.permute.xlu0 %461
  %465 = vset.pattern.permute.xlu0 0
  %466 = vperm.xlu0 %465, %v316
  %v467 = vpop.permute.xlu0 %466
  %470 = vset.pattern.permute.xlu0 0
  %471 = vperm.xlu0 %470, %v317
  %v472 = vpop.permute.xlu0 %471
  %475 = vset.pattern.permute.xlu0 0
  %476 = vperm.xlu0 %475, %v318
  %v477 = vpop.permute.xlu0 %476
  %v511 = vunpack.c.l.b16 %v251
  %v512 = vunpack.c.l.b16 %v252
  %v513 = vunpack.c.l.b16 %v253
  %v514 = vunpack.c.l.b16 %v254
  %v515 = vunpack.c.l.b16 %v255
  %v516 = vunpack.c.l.b16 %v256
  %v517 = vunpack.c.l.b16 %v257
  %v518 = vunpack.c.l.b16 %v258
  %v519 = vunpack.c.l.b16 %v259
  %v520 = vunpack.c.l.b16 %v260
  %v521 = vunpack.c.l.b16 %v261
  %v522 = vunpack.c.l.b16 %v262
  %v523 = vunpack.c.l.b16 %v263
  %v524 = vunpack.c.l.b16 %v264
  %v525 = vunpack.c.l.b16 %v265
  %v526 = vunpack.c.l.b16 %v266
  %v527 = vunpack.c.l.b16 %v267
  %v528 = vunpack.c.l.b16 %v268
  %v529 = vunpack.c.l.b16 %v269
  %v530 = vunpack.c.l.b16 %v270
  %v531 = vunpack.c.l.b16 %v271
  %v532 = vunpack.c.l.b16 %v272
  %v533 = vunpack.c.l.b16 %v273
  %v534 = vunpack.c.l.b16 %v274
  %v535 = vunpack.c.l.b16 %v275
  %v536 = vunpack.c.l.b16 %v276
  %v537 = vunpack.c.l.b16 %v277
  %v538 = vunpack.c.l.b16 %v278
  %v539 = vunpack.c.l.b16 %v279
  %v540 = vunpack.c.l.b16 %v280
  %v541 = vunpack.c.l.b16 %v281
  %v542 = vunpack.c.l.b16 %v282
  %v543 = vpack.c.b16 %v512, %v511
  %v544 = vpack.c.b16 %v514, %v513
  %v545 = vpack.c.b16 %v516, %v515
  %v546 = vpack.c.b16 %v518, %v517
  %v547 = vpack.c.b16 %v520, %v519
  %v548 = vpack.c.b16 %v522, %v521
  %v549 = vpack.c.b16 %v524, %v523
  %v550 = vpack.c.b16 %v526, %v525
  %v551 = vpack.c.b16 %v528, %v527
  %v552 = vpack.c.b16 %v530, %v529
  %v553 = vpack.c.b16 %v532, %v531
  %v554 = vpack.c.b16 %v534, %v533
  %v555 = vpack.c.b16 %v536, %v535
  %v556 = vpack.c.b16 %v538, %v537
  %v557 = vpack.c.b16 %v540, %v539
  %v558 = vpack.c.b16 %v542, %v541
  %vm559 = vcmask 261120
  %v561 = vsel %vm559, %v543, 0
  %v564 = vsel %vm559, %v544, 0
  %v567 = vsel %vm559, %v545, 0
  %v570 = vsel %vm559, %v546, 0
  %v573 = vsel %vm559, %v547, 0
  %v576 = vsel %vm559, %v548, 0
  %v579 = vsel %vm559, %v549, 0
  %v582 = vsel %vm559, %v550, 0
  %v585 = vsel %vm559, %v551, 0
  %v588 = vsel %vm559, %v552, 0
  %v591 = vsel %vm559, %v553, 0
  %v594 = vsel %vm559, %v554, 0
  %v597 = vsel %vm559, %v555, 0
  %v600 = vsel %vm559, %v556, 0
  %v603 = vsel %vm559, %v557, 0
  %v606 = vsel %vm559, %v558, 0
  %608 = vmatpush.bf16.msra.mxu0 0
  %609 = vmatpush.bf16.msra.mxu0 0
  %610 = vmatpush.bf16.msra.mxu0 0
  %611 = vmatpush.bf16.msra.mxu0 0
  %612 = vmatpush.bf16.msra.mxu0 0
  %613 = vmatpush.bf16.msra.mxu0 0
  %614 = vmatpush.bf16.msra.mxu0 %v285
  %615 = vmatpush.bf16.msra.mxu0 %v283
  %616 = vmatmul.bf16.gmra.mxu0 %v561
  %v617 = vpop.f32.mrf.mxu0
  %v618 = vadd.f32 %v322, %v617
  %v619 = vpop.f32.mrf.mxu0
  %v620 = vadd.f32 %v327, %v619
  %621 = vmatmul.bf16.gmra.mxu0 %v564
  %v622 = vpop.f32.mrf.mxu0
  %v623 = vadd.f32 %v332, %v622
  %v624 = vpop.f32.mrf.mxu0
  %v625 = vadd.f32 %v337, %v624
  %626 = vmatmul.bf16.gmra.mxu0 %v567
  %v627 = vpop.f32.mrf.mxu0
  %v628 = vadd.f32 %v342, %v627
  %v629 = vpop.f32.mrf.mxu0
  %v630 = vadd.f32 %v347, %v629
  %631 = vmatmul.bf16.gmra.mxu0 %v570
  %v632 = vpop.f32.mrf.mxu0
  %v633 = vadd.f32 %v352, %v632
  %v634 = vpop.f32.mrf.mxu0
  %v635 = vadd.f32 %v357, %v634
  %636 = vmatmul.bf16.gmra.mxu0 %v573
  %v637 = vpop.f32.mrf.mxu0
  %v638 = vadd.f32 %v362, %v637
  %v639 = vpop.f32.mrf.mxu0
  %v640 = vadd.f32 %v367, %v639
  %641 = vmatmul.bf16.gmra.mxu0 %v576
  %v642 = vpop.f32.mrf.mxu0
  %v643 = vadd.f32 %v372, %v642
  %v644 = vpop.f32.mrf.mxu0
  %v645 = vadd.f32 %v377, %v644
  %646 = vmatmul.bf16.gmra.mxu0 %v579
  %v647 = vpop.f32.mrf.mxu0
  %v648 = vadd.f32 %v382, %v647
  %v649 = vpop.f32.mrf.mxu0
  %v650 = vadd.f32 %v387, %v649
  %651 = vmatmul.bf16.gmra.mxu0 %v582
  %v652 = vpop.f32.mrf.mxu0
  %v653 = vadd.f32 %v392, %v652
  %v654 = vpop.f32.mrf.mxu0
  %v655 = vadd.f32 %v397, %v654
  %656 = vmatmul.bf16.gmra.mxu0 %v585
  %v657 = vpop.f32.mrf.mxu0
  %v658 = vadd.f32 %v402, %v657
  %v659 = vpop.f32.mrf.mxu0
  %v660 = vadd.f32 %v407, %v659
  %661 = vmatmul.bf16.gmra.mxu0 %v588
  %v662 = vpop.f32.mrf.mxu0
  %v663 = vadd.f32 %v412, %v662
  %v664 = vpop.f32.mrf.mxu0
  %v665 = vadd.f32 %v417, %v664
  %666 = vmatmul.bf16.gmra.mxu0 %v591
  %v667 = vpop.f32.mrf.mxu0
  %v668 = vadd.f32 %v422, %v667
  %v669 = vpop.f32.mrf.mxu0
  %v670 = vadd.f32 %v427, %v669
  %671 = vmatmul.bf16.gmra.mxu0 %v594
  %v672 = vpop.f32.mrf.mxu0
  %v673 = vadd.f32 %v432, %v672
  %v674 = vpop.f32.mrf.mxu0
  %v675 = vadd.f32 %v437, %v674
  %676 = vmatmul.bf16.gmra.mxu0 %v597
  %v677 = vpop.f32.mrf.mxu0
  %v678 = vadd.f32 %v442, %v677
  %v679 = vpop.f32.mrf.mxu0
  %v680 = vadd.f32 %v447, %v679
  %681 = vmatmul.bf16.gmra.mxu0 %v600
  %v682 = vpop.f32.mrf.mxu0
  %v683 = vadd.f32 %v452, %v682
  %v684 = vpop.f32.mrf.mxu0
  %v685 = vadd.f32 %v457, %v684
  %686 = vmatmul.bf16.gmra.mxu0 %v603
  %v687 = vpop.f32.mrf.mxu0
  %v688 = vadd.f32 %v462, %v687
  %v689 = vpop.f32.mrf.mxu0
  %v690 = vadd.f32 %v467, %v689
  %691 = vmatmul.bf16.gmra.mxu0 %v606
  %v692 = vpop.f32.mrf.mxu0
  %v693 = vadd.f32 %v472, %v692
  %v694 = vpop.f32.mrf.mxu0
  %v695 = vadd.f32 %v477, %v694
  %696 = vdwg.mxu0
  %697 = vmatpush.bf16.msra.mxu0 0
  %698 = vmatpush.bf16.msra.mxu0 0
  %699 = vmatpush.bf16.msra.mxu0 0
  %700 = vmatpush.bf16.msra.mxu0 0
  %701 = vmatpush.bf16.msra.mxu0 0
  %702 = vmatpush.bf16.msra.mxu0 0
  %703 = vmatpush.bf16.msra.mxu0 %v286
  %704 = vmatpush.bf16.msra.mxu0 %v284
  %705 = vmatmul.bf16.gmra.mxu0 %v561
  %v706 = vpop.f32.mrf.mxu0
  %v707 = vadd.f32 %v322, %v706
  %v708 = vpop.f32.mrf.mxu0
  %v709 = vadd.f32 %v327, %v708
  %710 = vmatmul.bf16.gmra.mxu0 %v564
  %v711 = vpop.f32.mrf.mxu0
  %v712 = vadd.f32 %v332, %v711
  %v713 = vpop.f32.mrf.mxu0
  %v714 = vadd.f32 %v337, %v713
  %715 = vmatmul.bf16.gmra.mxu0 %v567
  %v716 = vpop.f32.mrf.mxu0
  %v717 = vadd.f32 %v342, %v716
  %v718 = vpop.f32.mrf.mxu0
  %v719 = vadd.f32 %v347, %v718
  %720 = vmatmul.bf16.gmra.mxu0 %v570
  %v721 = vpop.f32.mrf.mxu0
  %v722 = vadd.f32 %v352, %v721
  %v723 = vpop.f32.mrf.mxu0
  %v724 = vadd.f32 %v357, %v723
  %725 = vmatmul.bf16.gmra.mxu0 %v573
  %v726 = vpop.f32.mrf.mxu0
  %v727 = vadd.f32 %v362, %v726
  %v728 = vpop.f32.mrf.mxu0
  %v729 = vadd.f32 %v367, %v728
  %730 = vmatmul.bf16.gmra.mxu0 %v576
  %v731 = vpop.f32.mrf.mxu0
  %v732 = vadd.f32 %v372, %v731
  %v733 = vpop.f32.mrf.mxu0
  %v734 = vadd.f32 %v377, %v733
  %735 = vmatmul.bf16.gmra.mxu0 %v579
  %v736 = vpop.f32.mrf.mxu0
  %v737 = vadd.f32 %v382, %v736
  %v738 = vpop.f32.mrf.mxu0
  %v739 = vadd.f32 %v387, %v738
  %740 = vmatmul.bf16.gmra.mxu0 %v582
  %v741 = vpop.f32.mrf.mxu0
  %v742 = vadd.f32 %v392, %v741
  %v743 = vpop.f32.mrf.mxu0
  %v744 = vadd.f32 %v397, %v743
  %745 = vmatmul.bf16.gmra.mxu0 %v585
  %v746 = vpop.f32.mrf.mxu0
  %v747 = vadd.f32 %v402, %v746
  %v748 = vpop.f32.mrf.mxu0
  %v749 = vadd.f32 %v407, %v748
  %750 = vmatmul.bf16.gmra.mxu0 %v588
  %v751 = vpop.f32.mrf.mxu0
  %v752 = vadd.f32 %v412, %v751
  %v753 = vpop.f32.mrf.mxu0
  %v754 = vadd.f32 %v417, %v753
  %755 = vmatmul.bf16.gmra.mxu0 %v591
  %v756 = vpop.f32.mrf.mxu0
  %v757 = vadd.f32 %v422, %v756
  %v758 = vpop.f32.mrf.mxu0
  %v759 = vadd.f32 %v427, %v758
  %760 = vmatmul.bf16.gmra.mxu0 %v594
  %v761 = vpop.f32.mrf.mxu0
  %v762 = vadd.f32 %v432, %v761
  %v763 = vpop.f32.mrf.mxu0
  %v764 = vadd.f32 %v437, %v763
  %765 = vmatmul.bf16.gmra.mxu0 %v597
  %v766 = vpop.f32.mrf.mxu0
  %v767 = vadd.f32 %v442, %v766
  %v768 = vpop.f32.mrf.mxu0
  %v769 = vadd.f32 %v447, %v768
  %770 = vmatmul.bf16.gmra.mxu0 %v600
  %v771 = vpop.f32.mrf.mxu0
  %v772 = vadd.f32 %v452, %v771
  %v773 = vpop.f32.mrf.mxu0
  %v774 = vadd.f32 %v457, %v773
  %775 = vmatmul.bf16.gmra.mxu0 %v603
  %v776 = vpop.f32.mrf.mxu0
  %v777 = vadd.f32 %v462, %v776
  %v778 = vpop.f32.mrf.mxu0
  %v779 = vadd.f32 %v467, %v778
  %780 = vmatmul.bf16.gmra.mxu0 %v606
  %v781 = vpop.f32.mrf.mxu0
  %v782 = vadd.f32 %v472, %v781
  %v783 = vpop.f32.mrf.mxu0
  %v784 = vadd.f32 %v477, %v783
  %785 = vdwg.mxu0
  %v786 = vld [vmem:[%s15] sm:$0xff]
  %v787 = vld [vmem:[%s15 + $0x8] sm:$0xff]
  %v788 = vld [vmem:[%s15 + $0x10] sm:$0xff]
  %v789 = vld [vmem:[%s15 + $0x18] sm:$0xff]
  %v790 = vpack.c.bf16 %v620, %v618
  %v791 = vpack.c.bf16 %v709, %v707
  %v792 = vpack.c.bf16 %v625, %v623
  %v793 = vpack.c.bf16 %v714, %v712
  %v794 = vpack.c.bf16 %v630, %v628
  %v795 = vpack.c.bf16 %v719, %v717
  %v796 = vpack.c.bf16 %v635, %v633
  %v797 = vpack.c.bf16 %v724, %v722
  %v798 = vpack.c.bf16 %v640, %v638
  %v799 = vpack.c.bf16 %v729, %v727
  %v800 = vpack.c.bf16 %v645, %v643
  %v801 = vpack.c.bf16 %v734, %v732
  %v802 = vpack.c.bf16 %v650, %v648
  %v803 = vpack.c.bf16 %v739, %v737
  %v804 = vpack.c.bf16 %v655, %v653
  %v805 = vpack.c.bf16 %v744, %v742
  %v806 = vpack.c.bf16 %v660, %v658
  %v807 = vpack.c.bf16 %v749, %v747
  %v808 = vpack.c.bf16 %v665, %v663
  %v809 = vpack.c.bf16 %v754, %v752
  %v810 = vpack.c.bf16 %v670, %v668
  %v811 = vpack.c.bf16 %v759, %v757
  %v812 = vpack.c.bf16 %v675, %v673
  %v813 = vpack.c.bf16 %v764, %v762
  %v814 = vpack.c.bf16 %v680, %v678
  %v815 = vpack.c.bf16 %v769, %v767
  %v816 = vpack.c.bf16 %v685, %v683
  %v817 = vpack.c.bf16 %v774, %v772
  %v818 = vpack.c.bf16 %v690, %v688
  %v819 = vpack.c.bf16 %v779, %v777
  %v820 = vpack.c.bf16 %v695, %v693
  %v821 = vpack.c.bf16 %v784, %v782
  %v822 = vld [vmem:[%s16] sm:$0xff]
  %v823 = vld [vmem:[%s16 + $0x8] sm:$0xff]
  %v824 = vld [vmem:[%s16 + $0x10] sm:$0xff]
  %v825 = vld [vmem:[%s16 + $0x18] sm:$0xff]
  %827 = vset.pattern.permute.xlu0 0
  %828 = vperm.xlu0 %827, %v822
  %v829 = vpop.permute.xlu0 %828
  %832 = vset.pattern.permute.xlu0 0
  %833 = vperm.xlu0 %832, %v823
  %v834 = vpop.permute.xlu0 %833
  %837 = vset.pattern.permute.xlu0 0
  %838 = vperm.xlu0 %837, %v824
  %v839 = vpop.permute.xlu0 %838
  %842 = vset.pattern.permute.xlu0 0
  %843 = vperm.xlu0 %842, %v825
  %v844 = vpop.permute.xlu0 %843
  %v850 = vunpack.c.l.b16 %v786
  %v851 = vunpack.c.h.b16 %v786
  %v852 = vunpack.c.l.b16 %v787
  %v853 = vunpack.c.h.b16 %v787
  %v854 = vunpack.c.l.b16 %v788
  %v855 = vunpack.c.h.b16 %v788
  %v856 = vunpack.c.l.b16 %v789
  %v857 = vunpack.c.h.b16 %v789
  %v858 = vpack.c.b16 %v852, %v850
  %v859 = vpack.c.b16 %v853, %v851
  %v860 = vpack.c.b16 %v856, %v854
  %v861 = vpack.c.b16 %v857, %v855
  %866 = vmatpush.bf16.msra.mxu0 %v804
  %867 = vmatpush.bf16.msra.mxu0 %v802
  %868 = vmatpush.bf16.msra.mxu0 %v800
  %869 = vmatpush.bf16.msra.mxu0 %v798
  %870 = vmatpush.bf16.msra.mxu0 %v796
  %871 = vmatpush.bf16.msra.mxu0 %v794
  %872 = vmatpush.bf16.msra.mxu0 %v792
  %873 = vmatpush.bf16.msra.mxu0 %v790
  %874 = vmatmul.bf16.gmra.mxu0 %v858
  %v875 = vpop.f32.mrf.mxu0
  %v876 = vadd.f32 %v829, %v875
  %v877 = vpop.f32.mrf.mxu0
  %v878 = vadd.f32 %v834, %v877
  %879 = vmatmul.bf16.gmra.mxu0 %v860
  %v880 = vpop.f32.mrf.mxu0
  %v881 = vadd.f32 %v839, %v880
  %v882 = vpop.f32.mrf.mxu0
  %v883 = vadd.f32 %v844, %v882
  %884 = vdwg.mxu0
  %885 = vmatpush.bf16.msra.mxu0 %v820
  %886 = vmatpush.bf16.msra.mxu0 %v818
  %887 = vmatpush.bf16.msra.mxu0 %v816
  %888 = vmatpush.bf16.msra.mxu0 %v814
  %889 = vmatpush.bf16.msra.mxu0 %v812
  %890 = vmatpush.bf16.msra.mxu0 %v810
  %891 = vmatpush.bf16.msra.mxu0 %v808
  %892 = vmatpush.bf16.msra.mxu0 %v806
  %893 = vmatmul.bf16.gmra.mxu0 %v859
  %v894 = vpop.f32.mrf.mxu0
  %v895 = vadd.f32 %v876, %v894
  %v896 = vpop.f32.mrf.mxu0
  %v897 = vadd.f32 %v878, %v896
  %898 = vmatmul.bf16.gmra.mxu0 %v861
  %v899 = vpop.f32.mrf.mxu0
  %v900 = vadd.f32 %v881, %v899
  %v901 = vpop.f32.mrf.mxu0
  %v902 = vadd.f32 %v883, %v901
  %903 = vdwg.mxu0
  %904 = vmatpush.bf16.msra.mxu0 %v805
  %905 = vmatpush.bf16.msra.mxu0 %v803
  %906 = vmatpush.bf16.msra.mxu0 %v801
  %907 = vmatpush.bf16.msra.mxu0 %v799
  %908 = vmatpush.bf16.msra.mxu0 %v797
  %909 = vmatpush.bf16.msra.mxu0 %v795
  %910 = vmatpush.bf16.msra.mxu0 %v793
  %911 = vmatpush.bf16.msra.mxu0 %v791
  %912 = vmatmul.bf16.gmra.mxu0 %v858
  %v913 = vpop.f32.mrf.mxu0
  %v914 = vadd.f32 %v829, %v913
  %v915 = vpop.f32.mrf.mxu0
  %v916 = vadd.f32 %v834, %v915
  %917 = vmatmul.bf16.gmra.mxu0 %v860
  %v918 = vpop.f32.mrf.mxu0
  %v919 = vadd.f32 %v839, %v918
  %v920 = vpop.f32.mrf.mxu0
  %v921 = vadd.f32 %v844, %v920
  %922 = vdwg.mxu0
  %923 = vmatpush.bf16.msra.mxu0 %v821
  %924 = vmatpush.bf16.msra.mxu0 %v819
  %925 = vmatpush.bf16.msra.mxu0 %v817
  %926 = vmatpush.bf16.msra.mxu0 %v815
  %927 = vmatpush.bf16.msra.mxu0 %v813
  %928 = vmatpush.bf16.msra.mxu0 %v811
  %929 = vmatpush.bf16.msra.mxu0 %v809
  %930 = vmatpush.bf16.msra.mxu0 %v807
  %931 = vmatmul.bf16.gmra.mxu0 %v859
  %v932 = vpop.f32.mrf.mxu0
  %v933 = vadd.f32 %v914, %v932
  %v934 = vpop.f32.mrf.mxu0
  %v935 = vadd.f32 %v916, %v934
  %936 = vmatmul.bf16.gmra.mxu0 %v861
  %v937 = vpop.f32.mrf.mxu0
  %v938 = vadd.f32 %v919, %v937
  %v939 = vpop.f32.mrf.mxu0
  %v940 = vadd.f32 %v921, %v939
  %941 = vdwg.mxu0
  %942 = vst [vmem:[%s20] sm:$0xff] %v895
  %943 = vst [vmem:[%s20 + $0x8] sm:$0xff] %v933
  %944 = vst [vmem:[%s20 + $0x10] sm:$0xff] %v897
  %945 = vst [vmem:[%s20 + $0x18] sm:$0xff] %v935
  %946 = vst [vmem:[%s20 + $0x20] sm:$0xff] %v900
  %947 = vst [vmem:[%s20 + $0x28] sm:$0xff] %v938
  %948 = vst [vmem:[%s20 + $0x30] sm:$0xff] %v902
  %949 = vst [vmem:[%s20 + $0x38] sm:$0xff] %v940
  %v950 = vld [vmem:[%s1] sm:$0xf]
  %v951 = vld [vmem:[%s1 + $0x4] sm:$0xf]
  %v952 = vld [vmem:[%s1 + $0x8] sm:$0xf]
  %v953 = vld [vmem:[%s1 + $0xc] sm:$0xf]
  %v954 = vld [vmem:[%s1 + $0x10] sm:$0xf]
  %v955 = vld [vmem:[%s1 + $0x14] sm:$0xf]
  %v956 = vld [vmem:[%s1 + $0x18] sm:$0xf]
  %v957 = vld [vmem:[%s1 + $0x1c] sm:$0xf]
  %v958 = vld [vmem:[%s1 + $0x20] sm:$0xf]
  %v959 = vld [vmem:[%s1 + $0x24] sm:$0xf]
  %v960 = vld [vmem:[%s1 + $0x28] sm:$0xf]
  %v961 = vld [vmem:[%s1 + $0x2c] sm:$0xf]
  %v962 = vld [vmem:[%s1 + $0x30] sm:$0xf]
  %v963 = vld [vmem:[%s1 + $0x34] sm:$0xf]
  %v964 = vld [vmem:[%s1 + $0x38] sm:$0xf]
  %v965 = vld [vmem:[%s1 + $0x3c] sm:$0xf]
  %v982 = vunpack.c.l.b16 %v950
  %v983 = vunpack.c.l.b16 %v951
  %v984 = vunpack.c.l.b16 %v952
  %v985 = vunpack.c.l.b16 %v953
  %v986 = vunpack.c.l.b16 %v954
  %v987 = vunpack.c.l.b16 %v955
  %v988 = vunpack.c.l.b16 %v956
  %v989 = vunpack.c.l.b16 %v957
  %v990 = vunpack.c.l.b16 %v958
  %v991 = vunpack.c.l.b16 %v959
  %v992 = vunpack.c.l.b16 %v960
  %v993 = vunpack.c.l.b16 %v961
  %v994 = vunpack.c.l.b16 %v962
  %v995 = vunpack.c.l.b16 %v963
  %v996 = vunpack.c.l.b16 %v964
  %v997 = vunpack.c.l.b16 %v965
  %v998 = vpack.c.b16 %v983, %v982
  %v999 = vpack.c.b16 %v985, %v984
  %v1000 = vpack.c.b16 %v987, %v986
  %v1001 = vpack.c.b16 %v989, %v988
  %v1002 = vpack.c.b16 %v991, %v990
  %v1003 = vpack.c.b16 %v993, %v992
  %v1004 = vpack.c.b16 %v995, %v994
  %v1005 = vpack.c.b16 %v997, %v996
  %1014 = vmatpush.bf16.msra.mxu0 %v1005
  %1015 = vmatpush.bf16.msra.mxu0 %v1004
  %1016 = vmatpush.bf16.msra.mxu0 %v1003
  %1017 = vmatpush.bf16.msra.mxu0 %v1002
  %1018 = vmatpush.bf16.msra.mxu0 %v1001
  %1019 = vmatpush.bf16.msra.mxu0 %v1000
  %1020 = vmatpush.bf16.msra.mxu0 %v999
  %1021 = vmatpush.bf16.msra.mxu0 %v998
  %1022 = vmatmul.bf16.gmra.mxu0 %v129
  %v1023 = vpop.f32.mrf.mxu0
  %v1024 = vadd.f32 %v104, %v1023
  %v1025 = vpop.f32.mrf.mxu0
  %v1026 = vadd.f32 %v109, %v1025
  %1027 = vmatmul.bf16.gmra.mxu0 %v130
  %v1028 = vpop.f32.mrf.mxu0
  %v1029 = vadd.f32 %v114, %v1028
  %v1030 = vpop.f32.mrf.mxu0
  %v1031 = vadd.f32 %v119, %v1030
  %1032 = vdwg.mxu0
  %v1033 = vld [vmem:[%s5] sm:$0xf]
  %v1034 = vld [vmem:[%s5 + $0x4] sm:$0xf]
  %v1035 = vld [vmem:[%s5 + $0x8] sm:$0xf]
  %v1036 = vld [vmem:[%s5 + $0xc] sm:$0xf]
  %v1037 = vld [vmem:[%s5 + $0x10] sm:$0xf]
  %v1038 = vld [vmem:[%s5 + $0x14] sm:$0xf]
  %v1039 = vld [vmem:[%s5 + $0x18] sm:$0xf]
  %v1040 = vld [vmem:[%s5 + $0x1c] sm:$0xf]
  %v1041 = vpack.c.bf16 %v1026, %v1024
  %v1042 = vpack.c.bf16 %v1031, %v1029
  %s1043 = scalar_lea.vmem %s1, 64
  %v1044 = vld [vmem:[%s1043] sm:$0xf]
  %v1045 = vld [vmem:[%s1043 + $0x4] sm:$0xf]
  %v1046 = vld [vmem:[%s1043 + $0x8] sm:$0xf]
  %v1047 = vld [vmem:[%s1043 + $0xc] sm:$0xf]
  %v1048 = vld [vmem:[%s1043 + $0x10] sm:$0xf]
  %v1049 = vld [vmem:[%s1043 + $0x14] sm:$0xf]
  %v1050 = vld [vmem:[%s1043 + $0x18] sm:$0xf]
  %v1051 = vld [vmem:[%s1043 + $0x1c] sm:$0xf]
  %v1052 = vld [vmem:[%s1043 + $0x20] sm:$0xf]
  %v1053 = vld [vmem:[%s1043 + $0x24] sm:$0xf]
  %v1054 = vld [vmem:[%s1043 + $0x28] sm:$0xf]
  %v1055 = vld [vmem:[%s1043 + $0x2c] sm:$0xf]
  %v1056 = vld [vmem:[%s1043 + $0x30] sm:$0xf]
  %v1057 = vld [vmem:[%s1043 + $0x34] sm:$0xf]
  %v1058 = vld [vmem:[%s1043 + $0x38] sm:$0xf]
  %v1059 = vld [vmem:[%s1043 + $0x3c] sm:$0xf]
  %v1076 = vunpack.c.l.b16 %v1044
  %v1077 = vunpack.c.l.b16 %v1045
  %v1078 = vunpack.c.l.b16 %v1046
  %v1079 = vunpack.c.l.b16 %v1047
  %v1080 = vunpack.c.l.b16 %v1048
  %v1081 = vunpack.c.l.b16 %v1049
  %v1082 = vunpack.c.l.b16 %v1050
  %v1083 = vunpack.c.l.b16 %v1051
  %v1084 = vunpack.c.l.b16 %v1052
  %v1085 = vunpack.c.l.b16 %v1053
  %v1086 = vunpack.c.l.b16 %v1054
  %v1087 = vunpack.c.l.b16 %v1055
  %v1088 = vunpack.c.l.b16 %v1056
  %v1089 = vunpack.c.l.b16 %v1057
  %v1090 = vunpack.c.l.b16 %v1058
  %v1091 = vunpack.c.l.b16 %v1059
  %v1092 = vpack.c.b16 %v1077, %v1076
  %v1093 = vpack.c.b16 %v1079, %v1078
  %v1094 = vpack.c.b16 %v1081, %v1080
  %v1095 = vpack.c.b16 %v1083, %v1082
  %v1096 = vpack.c.b16 %v1085, %v1084
  %v1097 = vpack.c.b16 %v1087, %v1086
  %v1098 = vpack.c.b16 %v1089, %v1088
  %v1099 = vpack.c.b16 %v1091, %v1090
  %1108 = vmatpush.bf16.msra.mxu0 %v1099
  %1109 = vmatpush.bf16.msra.mxu0 %v1098
  %1110 = vmatpush.bf16.msra.mxu0 %v1097
  %1111 = vmatpush.bf16.msra.mxu0 %v1096
  %1112 = vmatpush.bf16.msra.mxu0 %v1095
  %1113 = vmatpush.bf16.msra.mxu0 %v1094
  %1114 = vmatpush.bf16.msra.mxu0 %v1093
  %1115 = vmatpush.bf16.msra.mxu0 %v1092
  %1116 = vmatmul.bf16.gmra.mxu0 %v129
  %v1117 = vpop.f32.mrf.mxu0
  %v1118 = vadd.f32 %v104, %v1117
  %v1119 = vpop.f32.mrf.mxu0
  %v1120 = vadd.f32 %v109, %v1119
  %1121 = vmatmul.bf16.gmra.mxu0 %v130
  %v1122 = vpop.f32.mrf.mxu0
  %v1123 = vadd.f32 %v114, %v1122
  %v1124 = vpop.f32.mrf.mxu0
  %v1125 = vadd.f32 %v119, %v1124
  %1126 = vdwg.mxu0
  %s1127 = scalar_lea.vmem %s5, 32
  %v1128 = vld [vmem:[%s1127] sm:$0xf]
  %v1129 = vld [vmem:[%s1127 + $0x4] sm:$0xf]
  %v1130 = vld [vmem:[%s1127 + $0x8] sm:$0xf]
  %v1131 = vld [vmem:[%s1127 + $0xc] sm:$0xf]
  %v1132 = vld [vmem:[%s1127 + $0x10] sm:$0xf]
  %v1133 = vld [vmem:[%s1127 + $0x14] sm:$0xf]
  %v1134 = vld [vmem:[%s1127 + $0x18] sm:$0xf]
  %v1135 = vld [vmem:[%s1127 + $0x1c] sm:$0xf]
  %v1136 = vpack.c.bf16 %v1120, %v1118
  %v1137 = vpack.c.bf16 %v1125, %v1123
  %v1146 = vunpack.c.l.b16 %v1128
  %v1147 = vunpack.c.l.b16 %v1129
  %v1148 = vunpack.c.l.b16 %v1130
  %v1149 = vunpack.c.l.b16 %v1131
  %v1150 = vunpack.c.l.b16 %v1132
  %v1151 = vunpack.c.l.b16 %v1133
  %v1152 = vunpack.c.l.b16 %v1134
  %v1153 = vunpack.c.l.b16 %v1135
  %v1154 = vpack.c.b16 %v1147, %v1146
  %v1155 = vpack.c.b16 %v1149, %v1148
  %v1156 = vpack.c.b16 %v1151, %v1150
  %v1157 = vpack.c.b16 %v1153, %v1152
  %v1159 = vsel %vm559, %v1154, 0
  %v1162 = vsel %vm559, %v1155, 0
  %v1165 = vsel %vm559, %v1156, 0
  %v1168 = vsel %vm559, %v1157, 0
  %1170 = vmatpush.bf16.msra.mxu0 0
  %1171 = vmatpush.bf16.msra.mxu0 0
  %1172 = vmatpush.bf16.msra.mxu0 0
  %1173 = vmatpush.bf16.msra.mxu0 0
  %1174 = vmatpush.bf16.msra.mxu0 0
  %1175 = vmatpush.bf16.msra.mxu0 0
  %1176 = vmatpush.bf16.msra.mxu0 %v1137
  %1177 = vmatpush.bf16.msra.mxu0 %v1136
  %1178 = vmatmul.bf16.gmra.mxu0 %v1159
  %v1179 = vpop.f32.mrf.mxu0
  %v1180 = vadd.f32 0.0, %v1179
  %v1181 = vpop.f32.mrf.mxu0
  %v1182 = vadd.f32 0.0, %v1181
  %1183 = vmatmul.bf16.gmra.mxu0 %v1162
  %v1184 = vpop.f32.mrf.mxu0
  %v1185 = vadd.f32 0.0, %v1184
  %v1186 = vpop.f32.mrf.mxu0
  %v1187 = vadd.f32 0.0, %v1186
  %1188 = vmatmul.bf16.gmra.mxu0 %v1165
  %v1189 = vpop.f32.mrf.mxu0
  %v1190 = vadd.f32 0.0, %v1189
  %v1191 = vpop.f32.mrf.mxu0
  %v1192 = vadd.f32 0.0, %v1191
  %1193 = vmatmul.bf16.gmra.mxu0 %v1168
  %v1194 = vpop.f32.mrf.mxu0
  %v1195 = vadd.f32 0.0, %v1194
  %v1196 = vpop.f32.mrf.mxu0
  %v1197 = vadd.f32 0.0, %v1196
  %1198 = vdwg.mxu0
  %v1207 = vunpack.c.l.b16 %v1033
  %v1208 = vunpack.c.l.b16 %v1034
  %v1209 = vunpack.c.l.b16 %v1035
  %v1210 = vunpack.c.l.b16 %v1036
  %v1211 = vunpack.c.l.b16 %v1037
  %v1212 = vunpack.c.l.b16 %v1038
  %v1213 = vunpack.c.l.b16 %v1039
  %v1214 = vunpack.c.l.b16 %v1040
  %v1215 = vpack.c.b16 %v1208, %v1207
  %v1216 = vpack.c.b16 %v1210, %v1209
  %v1217 = vpack.c.b16 %v1212, %v1211
  %v1218 = vpack.c.b16 %v1214, %v1213
  %v1220 = vsel %vm559, %v1215, 0
  %v1223 = vsel %vm559, %v1216, 0
  %v1226 = vsel %vm559, %v1217, 0
  %v1229 = vsel %vm559, %v1218, 0
  %1231 = vmatpush.bf16.msra.mxu0 0
  %1232 = vmatpush.bf16.msra.mxu0 0
  %1233 = vmatpush.bf16.msra.mxu0 0
  %1234 = vmatpush.bf16.msra.mxu0 0
  %1235 = vmatpush.bf16.msra.mxu0 0
  %1236 = vmatpush.bf16.msra.mxu0 0
  %1237 = vmatpush.bf16.msra.mxu0 %v1042
  %1238 = vmatpush.bf16.msra.mxu0 %v1041
  %1239 = vmatmul.bf16.gmra.mxu0 %v1220
  %v1240 = vpop.f32.mrf.mxu0
  %v1241 = vadd.f32 %v1180, %v1240
  %v1242 = vpop.f32.mrf.mxu0
  %v1243 = vadd.f32 %v1182, %v1242
  %1244 = vmatmul.bf16.gmra.mxu0 %v1223
  %v1245 = vpop.f32.mrf.mxu0
  %v1246 = vadd.f32 %v1185, %v1245
  %v1247 = vpop.f32.mrf.mxu0
  %v1248 = vadd.f32 %v1187, %v1247
  %1249 = vmatmul.bf16.gmra.mxu0 %v1226
  %v1250 = vpop.f32.mrf.mxu0
  %v1251 = vadd.f32 %v1190, %v1250
  %v1252 = vpop.f32.mrf.mxu0
  %v1253 = vadd.f32 %v1192, %v1252
  %1254 = vmatmul.bf16.gmra.mxu0 %v1229
  %v1255 = vpop.f32.mrf.mxu0
  %v1256 = vadd.f32 %v1195, %v1255
  %v1257 = vpop.f32.mrf.mxu0
  %v1258 = vadd.f32 %v1197, %v1257
  %1259 = vdwg.mxu0
  %s1260 = scalar_lea.vmem %s1, 128
  %v1261 = vld [vmem:[%s1260] sm:$0xf]
  %v1262 = vld [vmem:[%s1260 + $0x4] sm:$0xf]
  %v1263 = vld [vmem:[%s1260 + $0x8] sm:$0xf]
  %v1264 = vld [vmem:[%s1260 + $0xc] sm:$0xf]
  %v1265 = vld [vmem:[%s1260 + $0x10] sm:$0xf]
  %v1266 = vld [vmem:[%s1260 + $0x14] sm:$0xf]
  %v1267 = vld [vmem:[%s1260 + $0x18] sm:$0xf]
  %v1268 = vld [vmem:[%s1260 + $0x1c] sm:$0xf]
  %v1269 = vld [vmem:[%s1260 + $0x20] sm:$0xf]
  %v1270 = vld [vmem:[%s1260 + $0x24] sm:$0xf]
  %v1271 = vld [vmem:[%s1260 + $0x28] sm:$0xf]
  %v1272 = vld [vmem:[%s1260 + $0x2c] sm:$0xf]
  %v1273 = vld [vmem:[%s1260 + $0x30] sm:$0xf]
  %v1274 = vld [vmem:[%s1260 + $0x34] sm:$0xf]
  %v1275 = vld [vmem:[%s1260 + $0x38] sm:$0xf]
  %v1276 = vld [vmem:[%s1260 + $0x3c] sm:$0xf]
  %v1293 = vunpack.c.l.b16 %v1261
  %v1294 = vunpack.c.l.b16 %v1262
  %v1295 = vunpack.c.l.b16 %v1263
  %v1296 = vunpack.c.l.b16 %v1264
  %v1297 = vunpack.c.l.b16 %v1265
  %v1298 = vunpack.c.l.b16 %v1266
  %v1299 = vunpack.c.l.b16 %v1267
  %v1300 = vunpack.c.l.b16 %v1268
  %v1301 = vunpack.c.l.b16 %v1269
  %v1302 = vunpack.c.l.b16 %v1270
  %v1303 = vunpack.c.l.b16 %v1271
  %v1304 = vunpack.c.l.b16 %v1272
  %v1305 = vunpack.c.l.b16 %v1273
  %v1306 = vunpack.c.l.b16 %v1274
  %v1307 = vunpack.c.l.b16 %v1275
  %v1308 = vunpack.c.l.b16 %v1276
  %v1309 = vpack.c.b16 %v1294, %v1293
  %v1310 = vpack.c.b16 %v1296, %v1295
  %v1311 = vpack.c.b16 %v1298, %v1297
  %v1312 = vpack.c.b16 %v1300, %v1299
  %v1313 = vpack.c.b16 %v1302, %v1301
  %v1314 = vpack.c.b16 %v1304, %v1303
  %v1315 = vpack.c.b16 %v1306, %v1305
  %v1316 = vpack.c.b16 %v1308, %v1307
  %1325 = vmatpush.bf16.msra.mxu0 %v1316
  %1326 = vmatpush.bf16.msra.mxu0 %v1315
  %1327 = vmatpush.bf16.msra.mxu0 %v1314
  %1328 = vmatpush.bf16.msra.mxu0 %v1313
  %1329 = vmatpush.bf16.msra.mxu0 %v1312
  %1330 = vmatpush.bf16.msra.mxu0 %v1311
  %1331 = vmatpush.bf16.msra.mxu0 %v1310
  %1332 = vmatpush.bf16.msra.mxu0 %v1309
  %1333 = vmatmul.bf16.gmra.mxu0 %v129
  %v1334 = vpop.f32.mrf.mxu0
  %v1335 = vadd.f32 %v104, %v1334
  %v1336 = vpop.f32.mrf.mxu0
  %v1337 = vadd.f32 %v109, %v1336
  %1338 = vmatmul.bf16.gmra.mxu0 %v130
  %v1339 = vpop.f32.mrf.mxu0
  %v1340 = vadd.f32 %v114, %v1339
  %v1341 = vpop.f32.mrf.mxu0
  %v1342 = vadd.f32 %v119, %v1341
  %1343 = vdwg.mxu0
  %s1344 = scalar_lea.vmem %s5, 64
  %v1345 = vld [vmem:[%s1344] sm:$0xf]
  %v1346 = vld [vmem:[%s1344 + $0x4] sm:$0xf]
  %v1347 = vld [vmem:[%s1344 + $0x8] sm:$0xf]
  %v1348 = vld [vmem:[%s1344 + $0xc] sm:$0xf]
  %v1349 = vld [vmem:[%s1344 + $0x10] sm:$0xf]
  %v1350 = vld [vmem:[%s1344 + $0x14] sm:$0xf]
  %v1351 = vld [vmem:[%s1344 + $0x18] sm:$0xf]
  %v1352 = vld [vmem:[%s1344 + $0x1c] sm:$0xf]
  %v1353 = vpack.c.bf16 %v1337, %v1335
  %v1354 = vpack.c.bf16 %v1342, %v1340
  %v1363 = vunpack.c.l.b16 %v1345
  %v1364 = vunpack.c.l.b16 %v1346
  %v1365 = vunpack.c.l.b16 %v1347
  %v1366 = vunpack.c.l.b16 %v1348
  %v1367 = vunpack.c.l.b16 %v1349
  %v1368 = vunpack.c.l.b16 %v1350
  %v1369 = vunpack.c.l.b16 %v1351
  %v1370 = vunpack.c.l.b16 %v1352
  %v1371 = vpack.c.b16 %v1364, %v1363
  %v1372 = vpack.c.b16 %v1366, %v1365
  %v1373 = vpack.c.b16 %v1368, %v1367
  %v1374 = vpack.c.b16 %v1370, %v1369
  %v1376 = vsel %vm559, %v1371, 0
  %v1379 = vsel %vm559, %v1372, 0
  %v1382 = vsel %vm559, %v1373, 0
  %v1385 = vsel %vm559, %v1374, 0
  %1387 = vmatpush.bf16.msra.mxu0 0
  %1388 = vmatpush.bf16.msra.mxu0 0
  %1389 = vmatpush.bf16.msra.mxu0 0
  %1390 = vmatpush.bf16.msra.mxu0 0
  %1391 = vmatpush.bf16.msra.mxu0 0
  %1392 = vmatpush.bf16.msra.mxu0 0
  %1393 = vmatpush.bf16.msra.mxu0 %v1354
  %1394 = vmatpush.bf16.msra.mxu0 %v1353
  %1395 = vmatmul.bf16.gmra.mxu0 %v1376
  %v1396 = vpop.f32.mrf.mxu0
  %v1397 = vadd.f32 0.0, %v1396
  %v1398 = vpop.f32.mrf.mxu0
  %v1399 = vadd.f32 0.0, %v1398
  %1400 = vmatmul.bf16.gmra.mxu0 %v1379
  %v1401 = vpop.f32.mrf.mxu0
  %v1402 = vadd.f32 0.0, %v1401
  %v1403 = vpop.f32.mrf.mxu0
  %v1404 = vadd.f32 0.0, %v1403
  %1405 = vmatmul.bf16.gmra.mxu0 %v1382
  %v1406 = vpop.f32.mrf.mxu0
  %v1407 = vadd.f32 0.0, %v1406
  %v1408 = vpop.f32.mrf.mxu0
  %v1409 = vadd.f32 0.0, %v1408
  %1410 = vmatmul.bf16.gmra.mxu0 %v1385
  %v1411 = vpop.f32.mrf.mxu0
  %v1412 = vadd.f32 0.0, %v1411
  %v1413 = vpop.f32.mrf.mxu0
  %v1414 = vadd.f32 0.0, %v1413
  %1415 = vdwg.mxu0
  %v1416 = vadd.f32 %v1241, %v1397
  %v1417 = vadd.f32 %v1243, %v1399
  %v1418 = vadd.f32 %v1246, %v1402
  %v1419 = vadd.f32 %v1248, %v1404
  %v1420 = vadd.f32 %v1251, %v1407
  %v1421 = vadd.f32 %v1253, %v1409
  %v1422 = vadd.f32 %v1256, %v1412
  %v1423 = vadd.f32 %v1258, %v1414
  %s1424 = scalar_lea.vmem %s1, 192
  %v1425 = vld [vmem:[%s1424] sm:$0xf]
  %v1426 = vld [vmem:[%s1424 + $0x4] sm:$0xf]
  %v1427 = vld [vmem:[%s1424 + $0x8] sm:$0xf]
  %v1428 = vld [vmem:[%s1424 + $0xc] sm:$0xf]
  %v1429 = vld [vmem:[%s1424 + $0x10] sm:$0xf]
  %v1430 = vld [vmem:[%s1424 + $0x14] sm:$0xf]
  %v1431 = vld [vmem:[%s1424 + $0x18] sm:$0xf]
  %v1432 = vld [vmem:[%s1424 + $0x1c] sm:$0xf]
  %v1433 = vld [vmem:[%s1424 + $0x20] sm:$0xf]
  %v1434 = vld [vmem:[%s1424 + $0x24] sm:$0xf]
  %v1435 = vld [vmem:[%s1424 + $0x28] sm:$0xf]
  %v1436 = vld [vmem:[%s1424 + $0x2c] sm:$0xf]
  %v1437 = vld [vmem:[%s1424 + $0x30] sm:$0xf]
  %v1438 = vld [vmem:[%s1424 + $0x34] sm:$0xf]
  %v1439 = vld [vmem:[%s1424 + $0x38] sm:$0xf]
  %v1440 = vld [vmem:[%s1424 + $0x3c] sm:$0xf]
  %v1457 = vunpack.c.l.b16 %v1425
  %v1458 = vunpack.c.l.b16 %v1426
  %v1459 = vunpack.c.l.b16 %v1427
  %v1460 = vunpack.c.l.b16 %v1428
  %v1461 = vunpack.c.l.b16 %v1429
  %v1462 = vunpack.c.l.b16 %v1430
  %v1463 = vunpack.c.l.b16 %v1431
  %v1464 = vunpack.c.l.b16 %v1432
  %v1465 = vunpack.c.l.b16 %v1433
  %v1466 = vunpack.c.l.b16 %v1434
  %v1467 = vunpack.c.l.b16 %v1435
  %v1468 = vunpack.c.l.b16 %v1436
  %v1469 = vunpack.c.l.b16 %v1437
  %v1470 = vunpack.c.l.b16 %v1438
  %v1471 = vunpack.c.l.b16 %v1439
  %v1472 = vunpack.c.l.b16 %v1440
  %v1473 = vpack.c.b16 %v1458, %v1457
  %v1474 = vpack.c.b16 %v1460, %v1459
  %v1475 = vpack.c.b16 %v1462, %v1461
  %v1476 = vpack.c.b16 %v1464, %v1463
  %v1477 = vpack.c.b16 %v1466, %v1465
  %v1478 = vpack.c.b16 %v1468, %v1467
  %v1479 = vpack.c.b16 %v1470, %v1469
  %v1480 = vpack.c.b16 %v1472, %v1471
  %1489 = vmatpush.bf16.msra.mxu0 %v1480
  %1490 = vmatpush.bf16.msra.mxu0 %v1479
  %1491 = vmatpush.bf16.msra.mxu0 %v1478
  %1492 = vmatpush.bf16.msra.mxu0 %v1477
  %1493 = vmatpush.bf16.msra.mxu0 %v1476
  %1494 = vmatpush.bf16.msra.mxu0 %v1475
  %1495 = vmatpush.bf16.msra.mxu0 %v1474
  %1496 = vmatpush.bf16.msra.mxu0 %v1473
  %1497 = vmatmul.bf16.gmra.mxu0 %v129
  %v1498 = vpop.f32.mrf.mxu0
  %v1499 = vadd.f32 %v104, %v1498
  %v1500 = vpop.f32.mrf.mxu0
  %v1501 = vadd.f32 %v109, %v1500
  %1502 = vmatmul.bf16.gmra.mxu0 %v130
  %v1503 = vpop.f32.mrf.mxu0
  %v1504 = vadd.f32 %v114, %v1503
  %v1505 = vpop.f32.mrf.mxu0
  %v1506 = vadd.f32 %v119, %v1505
  %1507 = vdwg.mxu0
  %s1508 = scalar_lea.vmem %s5, 96
  %v1509 = vld [vmem:[%s1508] sm:$0xf]
  %v1510 = vld [vmem:[%s1508 + $0x4] sm:$0xf]
  %v1511 = vld [vmem:[%s1508 + $0x8] sm:$0xf]
  %v1512 = vld [vmem:[%s1508 + $0xc] sm:$0xf]
  %v1513 = vld [vmem:[%s1508 + $0x10] sm:$0xf]
  %v1514 = vld [vmem:[%s1508 + $0x14] sm:$0xf]
  %v1515 = vld [vmem:[%s1508 + $0x18] sm:$0xf]
  %v1516 = vld [vmem:[%s1508 + $0x1c] sm:$0xf]
  %v1517 = vpack.c.bf16 %v1501, %v1499
  %v1518 = vpack.c.bf16 %v1506, %v1504
  %v1527 = vunpack.c.l.b16 %v1509
  %v1528 = vunpack.c.l.b16 %v1510
  %v1529 = vunpack.c.l.b16 %v1511
  %v1530 = vunpack.c.l.b16 %v1512
  %v1531 = vunpack.c.l.b16 %v1513
  %v1532 = vunpack.c.l.b16 %v1514
  %v1533 = vunpack.c.l.b16 %v1515
  %v1534 = vunpack.c.l.b16 %v1516
  %v1535 = vpack.c.b16 %v1528, %v1527
  %v1536 = vpack.c.b16 %v1530, %v1529
  %v1537 = vpack.c.b16 %v1532, %v1531
  %v1538 = vpack.c.b16 %v1534, %v1533
  %v1540 = vsel %vm559, %v1535, 0
  %v1543 = vsel %vm559, %v1536, 0
  %v1546 = vsel %vm559, %v1537, 0
  %v1549 = vsel %vm559, %v1538, 0
  %1551 = vmatpush.bf16.msra.mxu0 0
  %1552 = vmatpush.bf16.msra.mxu0 0
  %1553 = vmatpush.bf16.msra.mxu0 0
  %1554 = vmatpush.bf16.msra.mxu0 0
  %1555 = vmatpush.bf16.msra.mxu0 0
  %1556 = vmatpush.bf16.msra.mxu0 0
  %1557 = vmatpush.bf16.msra.mxu0 %v1518
  %1558 = vmatpush.bf16.msra.mxu0 %v1517
  %1559 = vmatmul.bf16.gmra.mxu0 %v1540
  %v1560 = vpop.f32.mrf.mxu0
  %v1561 = vadd.f32 0.0, %v1560
  %v1562 = vpop.f32.mrf.mxu0
  %v1563 = vadd.f32 0.0, %v1562
  %1564 = vmatmul.bf16.gmra.mxu0 %v1543
  %v1565 = vpop.f32.mrf.mxu0
  %v1566 = vadd.f32 0.0, %v1565
  %v1567 = vpop.f32.mrf.mxu0
  %v1568 = vadd.f32 0.0, %v1567
  %1569 = vmatmul.bf16.gmra.mxu0 %v1546
  %v1570 = vpop.f32.mrf.mxu0
  %v1571 = vadd.f32 0.0, %v1570
  %v1572 = vpop.f32.mrf.mxu0
  %v1573 = vadd.f32 0.0, %v1572
  %1574 = vmatmul.bf16.gmra.mxu0 %v1549
  %v1575 = vpop.f32.mrf.mxu0
  %v1576 = vadd.f32 0.0, %v1575
  %v1577 = vpop.f32.mrf.mxu0
  %v1578 = vadd.f32 0.0, %v1577
  %1579 = vdwg.mxu0
  %v1580 = vadd.f32 %v1416, %v1561
  %v1581 = vadd.f32 %v1417, %v1563
  %v1582 = vadd.f32 %v1418, %v1566
  %v1583 = vadd.f32 %v1419, %v1568
  %v1584 = vadd.f32 %v1420, %v1571
  %v1585 = vadd.f32 %v1421, %v1573
  %v1586 = vadd.f32 %v1422, %v1576
  %v1587 = vadd.f32 %v1423, %v1578
  %1589 = vset.pattern.permute.xlu0 0
  %1590 = vperm.xlu0 %1589, %v77
  %v1591 = vpop.permute.xlu0 %1590
  %1594 = vset.pattern.permute.xlu0 0
  %1595 = vperm.xlu0 %1594, %v78
  %v1596 = vpop.permute.xlu0 %1595
  %1599 = vset.pattern.permute.xlu0 0
  %1600 = vperm.xlu0 %1599, %v79
  %v1601 = vpop.permute.xlu0 %1600
  %1604 = vset.pattern.permute.xlu0 0
  %1605 = vperm.xlu0 %1604, %v80
  %v1606 = vpop.permute.xlu0 %1605
  %1609 = vset.pattern.permute.xlu0 0
  %1610 = vperm.xlu0 %1609, %v81
  %v1611 = vpop.permute.xlu0 %1610
  %1614 = vset.pattern.permute.xlu0 0
  %1615 = vperm.xlu0 %1614, %v82
  %v1616 = vpop.permute.xlu0 %1615
  %1619 = vset.pattern.permute.xlu0 0
  %1620 = vperm.xlu0 %1619, %v83
  %v1621 = vpop.permute.xlu0 %1620
  %1624 = vset.pattern.permute.xlu0 0
  %1625 = vperm.xlu0 %1624, %v84
  %v1626 = vpop.permute.xlu0 %1625
  %v1628 = vadd.f32 %v1580, %v1591
  %v1629 = vadd.f32 %v1581, %v1596
  %v1630 = vadd.f32 %v1582, %v1601
  %v1631 = vadd.f32 %v1583, %v1606
  %v1632 = vadd.f32 %v1584, %v1611
  %v1633 = vadd.f32 %v1585, %v1616
  %v1634 = vadd.f32 %v1586, %v1621
  %v1635 = vadd.f32 %v1587, %v1626
  %v1636 = vld [vmem:[%s11] sm:$0xf]
  %v1637 = vld [vmem:[%s11 + $0x4] sm:$0xf]
  %v1638 = vld [vmem:[%s11 + $0x8] sm:$0xf]
  %v1639 = vld [vmem:[%s11 + $0xc] sm:$0xf]
  %v1640 = vld [vmem:[%s11 + $0x10] sm:$0xf]
  %v1641 = vld [vmem:[%s11 + $0x14] sm:$0xf]
  %v1642 = vld [vmem:[%s11 + $0x18] sm:$0xf]
  %v1643 = vld [vmem:[%s11 + $0x1c] sm:$0xf]
  %v1644 = vld [vmem:[%s11 + $0x20] sm:$0xf]
  %v1645 = vld [vmem:[%s11 + $0x24] sm:$0xf]
  %v1646 = vld [vmem:[%s11 + $0x28] sm:$0xf]
  %v1647 = vld [vmem:[%s11 + $0x2c] sm:$0xf]
  %v1648 = vld [vmem:[%s11 + $0x30] sm:$0xf]
  %v1649 = vld [vmem:[%s11 + $0x34] sm:$0xf]
  %v1650 = vld [vmem:[%s11 + $0x38] sm:$0xf]
  %v1651 = vld [vmem:[%s11 + $0x3c] sm:$0xf]
  %v1652 = vld [vmem:[%s11 + $0x40] sm:$0xf]
  %v1653 = vld [vmem:[%s11 + $0x44] sm:$0xf]
  %v1654 = vld [vmem:[%s11 + $0x48] sm:$0xf]
  %v1655 = vld [vmem:[%s11 + $0x4c] sm:$0xf]
  %v1656 = vld [vmem:[%s11 + $0x50] sm:$0xf]
  %v1657 = vld [vmem:[%s11 + $0x54] sm:$0xf]
  %v1658 = vld [vmem:[%s11 + $0x58] sm:$0xf]
  %v1659 = vld [vmem:[%s11 + $0x5c] sm:$0xf]
  %v1660 = vld [vmem:[%s11 + $0x60] sm:$0xf]
  %v1661 = vld [vmem:[%s11 + $0x64] sm:$0xf]
  %v1662 = vld [vmem:[%s11 + $0x68] sm:$0xf]
  %v1663 = vld [vmem:[%s11 + $0x6c] sm:$0xf]
  %v1664 = vld [vmem:[%s11 + $0x70] sm:$0xf]
  %v1665 = vld [vmem:[%s11 + $0x74] sm:$0xf]
  %v1666 = vld [vmem:[%s11 + $0x78] sm:$0xf]
  %v1667 = vld [vmem:[%s11 + $0x7c] sm:$0xf]
  %v1668 = vpack.c.bf16 %v1629, %v1628
  %v1669 = vpack.c.bf16 %v1631, %v1630
  %v1670 = vpack.c.bf16 %v1633, %v1632
  %v1671 = vpack.c.bf16 %v1635, %v1634
  %v1672 = vld [vmem:[%s12] sm:$0xff]
  %v1673 = vld [vmem:[%s12 + $0x8] sm:$0xff]
  %v1674 = vld [vmem:[%s12 + $0x10] sm:$0xff]
  %v1675 = vld [vmem:[%s12 + $0x18] sm:$0xff]
  %v1676 = vld [vmem:[%s12 + $0x20] sm:$0xff]
  %v1677 = vld [vmem:[%s12 + $0x28] sm:$0xff]
  %v1678 = vld [vmem:[%s12 + $0x30] sm:$0xff]
  %v1679 = vld [vmem:[%s12 + $0x38] sm:$0xff]
  %v1680 = vld [vmem:[%s12 + $0x40] sm:$0xff]
  %v1681 = vld [vmem:[%s12 + $0x48] sm:$0xff]
  %v1682 = vld [vmem:[%s12 + $0x50] sm:$0xff]
  %v1683 = vld [vmem:[%s12 + $0x58] sm:$0xff]
  %v1684 = vld [vmem:[%s12 + $0x60] sm:$0xff]
  %v1685 = vld [vmem:[%s12 + $0x68] sm:$0xff]
  %v1686 = vld [vmem:[%s12 + $0x70] sm:$0xff]
  %v1687 = vld [vmem:[%s12 + $0x78] sm:$0xff]
  %v1688 = vld [vmem:[%s12 + $0x80] sm:$0xff]
  %v1689 = vld [vmem:[%s12 + $0x88] sm:$0xff]
  %v1690 = vld [vmem:[%s12 + $0x90] sm:$0xff]
  %v1691 = vld [vmem:[%s12 + $0x98] sm:$0xff]
  %v1692 = vld [vmem:[%s12 + $0xa0] sm:$0xff]
  %v1693 = vld [vmem:[%s12 + $0xa8] sm:$0xff]
  %v1694 = vld [vmem:[%s12 + $0xb0] sm:$0xff]
  %v1695 = vld [vmem:[%s12 + $0xb8] sm:$0xff]
  %v1696 = vld [vmem:[%s12 + $0xc0] sm:$0xff]
  %v1697 = vld [vmem:[%s12 + $0xc8] sm:$0xff]
  %v1698 = vld [vmem:[%s12 + $0xd0] sm:$0xff]
  %v1699 = vld [vmem:[%s12 + $0xd8] sm:$0xff]
  %v1700 = vld [vmem:[%s12 + $0xe0] sm:$0xff]
  %v1701 = vld [vmem:[%s12 + $0xe8] sm:$0xff]
  %v1702 = vld [vmem:[%s12 + $0xf0] sm:$0xff]
  %v1703 = vld [vmem:[%s12 + $0xf8] sm:$0xff]
  %1705 = vset.pattern.permute.xlu0 0
  %1706 = vperm.xlu0 %1705, %v1672
  %v1707 = vpop.permute.xlu0 %1706
  %1710 = vset.pattern.permute.xlu0 0
  %1711 = vperm.xlu0 %1710, %v1673
  %v1712 = vpop.permute.xlu0 %1711
  %1715 = vset.pattern.permute.xlu0 0
  %1716 = vperm.xlu0 %1715, %v1674
  %v1717 = vpop.permute.xlu0 %1716
  %1720 = vset.pattern.permute.xlu0 0
  %1721 = vperm.xlu0 %1720, %v1675
  %v1722 = vpop.permute.xlu0 %1721
  %1725 = vset.pattern.permute.xlu0 0
  %1726 = vperm.xlu0 %1725, %v1676
  %v1727 = vpop.permute.xlu0 %1726
  %1730 = vset.pattern.permute.xlu0 0
  %1731 = vperm.xlu0 %1730, %v1677
  %v1732 = vpop.permute.xlu0 %1731
  %1735 = vset.pattern.permute.xlu0 0
  %1736 = vperm.xlu0 %1735, %v1678
  %v1737 = vpop.permute.xlu0 %1736
  %1740 = vset.pattern.permute.xlu0 0
  %1741 = vperm.xlu0 %1740, %v1679
  %v1742 = vpop.permute.xlu0 %1741
  %1745 = vset.pattern.permute.xlu0 0
  %1746 = vperm.xlu0 %1745, %v1680
  %v1747 = vpop.permute.xlu0 %1746
  %1750 = vset.pattern.permute.xlu0 0
  %1751 = vperm.xlu0 %1750, %v1681
  %v1752 = vpop.permute.xlu0 %1751
  %1755 = vset.pattern.permute.xlu0 0
  %1756 = vperm.xlu0 %1755, %v1682
  %v1757 = vpop.permute.xlu0 %1756
  %1760 = vset.pattern.permute.xlu0 0
  %1761 = vperm.xlu0 %1760, %v1683
  %v1762 = vpop.permute.xlu0 %1761
  %1765 = vset.pattern.permute.xlu0 0
  %1766 = vperm.xlu0 %1765, %v1684
  %v1767 = vpop.permute.xlu0 %1766
  %1770 = vset.pattern.permute.xlu0 0
  %1771 = vperm.xlu0 %1770, %v1685
  %v1772 = vpop.permute.xlu0 %1771
  %1775 = vset.pattern.permute.xlu0 0
  %1776 = vperm.xlu0 %1775, %v1686
  %v1777 = vpop.permute.xlu0 %1776
  %1780 = vset.pattern.permute.xlu0 0
  %1781 = vperm.xlu0 %1780, %v1687
  %v1782 = vpop.permute.xlu0 %1781
  %1785 = vset.pattern.permute.xlu0 0
  %1786 = vperm.xlu0 %1785, %v1688
  %v1787 = vpop.permute.xlu0 %1786
  %1790 = vset.pattern.permute.xlu0 0
  %1791 = vperm.xlu0 %1790, %v1689
  %v1792 = vpop.permute.xlu0 %1791
  %1795 = vset.pattern.permute.xlu0 0
  %1796 = vperm.xlu0 %1795, %v1690
  %v1797 = vpop.permute.xlu0 %1796
  %1800 = vset.pattern.permute.xlu0 0
  %1801 = vperm.xlu0 %1800, %v1691
  %v1802 = vpop.permute.xlu0 %1801
  %1805 = vset.pattern.permute.xlu0 0
  %1806 = vperm.xlu0 %1805, %v1692
  %v1807 = vpop.permute.xlu0 %1806
  %1810 = vset.pattern.permute.xlu0 0
  %1811 = vperm.xlu0 %1810, %v1693
  %v1812 = vpop.permute.xlu0 %1811
  %1815 = vset.pattern.permute.xlu0 0
  %1816 = vperm.xlu0 %1815, %v1694
  %v1817 = vpop.permute.xlu0 %1816
  %1820 = vset.pattern.permute.xlu0 0
  %1821 = vperm.xlu0 %1820, %v1695
  %v1822 = vpop.permute.xlu0 %1821
  %1825 = vset.pattern.permute.xlu0 0
  %1826 = vperm.xlu0 %1825, %v1696
  %v1827 = vpop.permute.xlu0 %1826
  %1830 = vset.pattern.permute.xlu0 0
  %1831 = vperm.xlu0 %1830, %v1697
  %v1832 = vpop.permute.xlu0 %1831
  %1835 = vset.pattern.permute.xlu0 0
  %1836 = vperm.xlu0 %1835, %v1698
  %v1837 = vpop.permute.xlu0 %1836
  %1840 = vset.pattern.permute.xlu0 0
  %1841 = vperm.xlu0 %1840, %v1699
  %v1842 = vpop.permute.xlu0 %1841
  %1845 = vset.pattern.permute.xlu0 0
  %1846 = vperm.xlu0 %1845, %v1700
  %v1847 = vpop.permute.xlu0 %1846
  %1850 = vset.pattern.permute.xlu0 0
  %1851 = vperm.xlu0 %1850, %v1701
  %v1852 = vpop.permute.xlu0 %1851
  %1855 = vset.pattern.permute.xlu0 0
  %1856 = vperm.xlu0 %1855, %v1702
  %v1857 = vpop.permute.xlu0 %1856
  %1860 = vset.pattern.permute.xlu0 0
  %1861 = vperm.xlu0 %1860, %v1703
  %v1862 = vpop.permute.xlu0 %1861
  %v1896 = vunpack.c.l.b16 %v1636
  %v1897 = vunpack.c.l.b16 %v1637
  %v1898 = vunpack.c.l.b16 %v1638
  %v1899 = vunpack.c.l.b16 %v1639
  %v1900 = vunpack.c.l.b16 %v1640
  %v1901 = vunpack.c.l.b16 %v1641
  %v1902 = vunpack.c.l.b16 %v1642
  %v1903 = vunpack.c.l.b16 %v1643
  %v1904 = vunpack.c.l.b16 %v1644
  %v1905 = vunpack.c.l.b16 %v1645
  %v1906 = vunpack.c.l.b16 %v1646
  %v1907 = vunpack.c.l.b16 %v1647
  %v1908 = vunpack.c.l.b16 %v1648
  %v1909 = vunpack.c.l.b16 %v1649
  %v1910 = vunpack.c.l.b16 %v1650
  %v1911 = vunpack.c.l.b16 %v1651
  %v1912 = vunpack.c.l.b16 %v1652
  %v1913 = vunpack.c.l.b16 %v1653
  %v1914 = vunpack.c.l.b16 %v1654
  %v1915 = vunpack.c.l.b16 %v1655
  %v1916 = vunpack.c.l.b16 %v1656
  %v1917 = vunpack.c.l.b16 %v1657
  %v1918 = vunpack.c.l.b16 %v1658
  %v1919 = vunpack.c.l.b16 %v1659
  %v1920 = vunpack.c.l.b16 %v1660
  %v1921 = vunpack.c.l.b16 %v1661
  %v1922 = vunpack.c.l.b16 %v1662
  %v1923 = vunpack.c.l.b16 %v1663
  %v1924 = vunpack.c.l.b16 %v1664
  %v1925 = vunpack.c.l.b16 %v1665
  %v1926 = vunpack.c.l.b16 %v1666
  %v1927 = vunpack.c.l.b16 %v1667
  %v1928 = vpack.c.b16 %v1897, %v1896
  %v1929 = vpack.c.b16 %v1899, %v1898
  %v1930 = vpack.c.b16 %v1901, %v1900
  %v1931 = vpack.c.b16 %v1903, %v1902
  %v1932 = vpack.c.b16 %v1905, %v1904
  %v1933 = vpack.c.b16 %v1907, %v1906
  %v1934 = vpack.c.b16 %v1909, %v1908
  %v1935 = vpack.c.b16 %v1911, %v1910
  %v1936 = vpack.c.b16 %v1913, %v1912
  %v1937 = vpack.c.b16 %v1915, %v1914
  %v1938 = vpack.c.b16 %v1917, %v1916
  %v1939 = vpack.c.b16 %v1919, %v1918
  %v1940 = vpack.c.b16 %v1921, %v1920
  %v1941 = vpack.c.b16 %v1923, %v1922
  %v1942 = vpack.c.b16 %v1925, %v1924
  %v1943 = vpack.c.b16 %v1927, %v1926
  %vm1944 = vcmask 523264
  %v1946 = vsel %vm1944, %v1928, 0
  %v1949 = vsel %vm1944, %v1929, 0
  %v1952 = vsel %vm1944, %v1930, 0
  %v1955 = vsel %vm1944, %v1931, 0
  %v1958 = vsel %vm1944, %v1932, 0
  %v1961 = vsel %vm1944, %v1933, 0
  %v1964 = vsel %vm1944, %v1934, 0
  %v1967 = vsel %vm1944, %v1935, 0
  %v1970 = vsel %vm1944, %v1936, 0
  %v1973 = vsel %vm1944, %v1937, 0
  %v1976 = vsel %vm1944, %v1938, 0
  %v1979 = vsel %vm1944, %v1939, 0
  %v1982 = vsel %vm1944, %v1940, 0
  %v1985 = vsel %vm1944, %v1941, 0
  %v1988 = vsel %vm1944, %v1942, 0
  %v1991 = vsel %vm1944, %v1943, 0
  %1993 = vmatpush.bf16.msra.mxu0 0
  %1994 = vmatpush.bf16.msra.mxu0 0
  %1995 = vmatpush.bf16.msra.mxu0 0
  %1996 = vmatpush.bf16.msra.mxu0 0
  %1997 = vmatpush.bf16.msra.mxu0 %v1671
  %1998 = vmatpush.bf16.msra.mxu0 %v1670
  %1999 = vmatpush.bf16.msra.mxu0 %v1669
  %2000 = vmatpush.bf16.msra.mxu0 %v1668
  %2001 = vmatmul.bf16.gmra.mxu0 %v1946
  %v2002 = vpop.f32.mrf.mxu0
  %v2003 = vadd.f32 %v1707, %v2002
  %v2004 = vpop.f32.mrf.mxu0
  %v2005 = vadd.f32 %v1712, %v2004
  %2006 = vmatmul.bf16.gmra.mxu0 %v1949
  %v2007 = vpop.f32.mrf.mxu0
  %v2008 = vadd.f32 %v1717, %v2007
  %v2009 = vpop.f32.mrf.mxu0
  %v2010 = vadd.f32 %v1722, %v2009
  %2011 = vmatmul.bf16.gmra.mxu0 %v1952
  %v2012 = vpop.f32.mrf.mxu0
  %v2013 = vadd.f32 %v1727, %v2012
  %v2014 = vpop.f32.mrf.mxu0
  %v2015 = vadd.f32 %v1732, %v2014
  %2016 = vmatmul.bf16.gmra.mxu0 %v1955
  %v2017 = vpop.f32.mrf.mxu0
  %v2018 = vadd.f32 %v1737, %v2017
  %v2019 = vpop.f32.mrf.mxu0
  %v2020 = vadd.f32 %v1742, %v2019
  %2021 = vmatmul.bf16.gmra.mxu0 %v1958
  %v2022 = vpop.f32.mrf.mxu0
  %v2023 = vadd.f32 %v1747, %v2022
  %v2024 = vpop.f32.mrf.mxu0
  %v2025 = vadd.f32 %v1752, %v2024
  %2026 = vmatmul.bf16.gmra.mxu0 %v1961
  %v2027 = vpop.f32.mrf.mxu0
  %v2028 = vadd.f32 %v1757, %v2027
  %v2029 = vpop.f32.mrf.mxu0
  %v2030 = vadd.f32 %v1762, %v2029
  %2031 = vmatmul.bf16.gmra.mxu0 %v1964
  %v2032 = vpop.f32.mrf.mxu0
  %v2033 = vadd.f32 %v1767, %v2032
  %v2034 = vpop.f32.mrf.mxu0
  %v2035 = vadd.f32 %v1772, %v2034
  %2036 = vmatmul.bf16.gmra.mxu0 %v1967
  %v2037 = vpop.f32.mrf.mxu0
  %v2038 = vadd.f32 %v1777, %v2037
  %v2039 = vpop.f32.mrf.mxu0
  %v2040 = vadd.f32 %v1782, %v2039
  %2041 = vmatmul.bf16.gmra.mxu0 %v1970
  %v2042 = vpop.f32.mrf.mxu0
  %v2043 = vadd.f32 %v1787, %v2042
  %v2044 = vpop.f32.mrf.mxu0
  %v2045 = vadd.f32 %v1792, %v2044
  %2046 = vmatmul.bf16.gmra.mxu0 %v1973
  %v2047 = vpop.f32.mrf.mxu0
  %v2048 = vadd.f32 %v1797, %v2047
  %v2049 = vpop.f32.mrf.mxu0
  %v2050 = vadd.f32 %v1802, %v2049
  %2051 = vmatmul.bf16.gmra.mxu0 %v1976
  %v2052 = vpop.f32.mrf.mxu0
  %v2053 = vadd.f32 %v1807, %v2052
  %v2054 = vpop.f32.mrf.mxu0
  %v2055 = vadd.f32 %v1812, %v2054
  %2056 = vmatmul.bf16.gmra.mxu0 %v1979
  %v2057 = vpop.f32.mrf.mxu0
  %v2058 = vadd.f32 %v1817, %v2057
  %v2059 = vpop.f32.mrf.mxu0
  %v2060 = vadd.f32 %v1822, %v2059
  %2061 = vmatmul.bf16.gmra.mxu0 %v1982
  %v2062 = vpop.f32.mrf.mxu0
  %v2063 = vadd.f32 %v1827, %v2062
  %v2064 = vpop.f32.mrf.mxu0
  %v2065 = vadd.f32 %v1832, %v2064
  %2066 = vmatmul.bf16.gmra.mxu0 %v1985
  %v2067 = vpop.f32.mrf.mxu0
  %v2068 = vadd.f32 %v1837, %v2067
  %v2069 = vpop.f32.mrf.mxu0
  %v2070 = vadd.f32 %v1842, %v2069
  %2071 = vmatmul.bf16.gmra.mxu0 %v1988
  %v2072 = vpop.f32.mrf.mxu0
  %v2073 = vadd.f32 %v1847, %v2072
  %v2074 = vpop.f32.mrf.mxu0
  %v2075 = vadd.f32 %v1852, %v2074
  %2076 = vmatmul.bf16.gmra.mxu0 %v1991
  %v2077 = vpop.f32.mrf.mxu0
  %v2078 = vadd.f32 %v1857, %v2077
  %v2079 = vpop.f32.mrf.mxu0
  %v2080 = vadd.f32 %v1862, %v2079
  %2081 = vdwg.mxu0
  %v2082 = vld [vmem:[%s17] sm:$0xff]
  %v2083 = vld [vmem:[%s17 + $0x8] sm:$0xff]
  %v2084 = vld [vmem:[%s17 + $0x10] sm:$0xff]
  %v2085 = vld [vmem:[%s17 + $0x18] sm:$0xff]
  %v2086 = vld [vmem:[%s17 + $0x20] sm:$0xff]
  %v2087 = vld [vmem:[%s17 + $0x28] sm:$0xff]
  %v2088 = vld [vmem:[%s17 + $0x30] sm:$0xff]
  %v2089 = vld [vmem:[%s17 + $0x38] sm:$0xff]
  %v2090 = vpack.c.bf16 %v2005, %v2003
  %v2091 = vpack.c.bf16 %v2010, %v2008
  %v2092 = vpack.c.bf16 %v2015, %v2013
  %v2093 = vpack.c.bf16 %v2020, %v2018
  %v2094 = vpack.c.bf16 %v2025, %v2023
  %v2095 = vpack.c.bf16 %v2030, %v2028
  %v2096 = vpack.c.bf16 %v2035, %v2033
  %v2097 = vpack.c.bf16 %v2040, %v2038
  %v2098 = vpack.c.bf16 %v2045, %v2043
  %v2099 = vpack.c.bf16 %v2050, %v2048
  %v2100 = vpack.c.bf16 %v2055, %v2053
  %v2101 = vpack.c.bf16 %v2060, %v2058
  %v2102 = vpack.c.bf16 %v2065, %v2063
  %v2103 = vpack.c.bf16 %v2070, %v2068
  %v2104 = vpack.c.bf16 %v2075, %v2073
  %v2105 = vpack.c.bf16 %v2080, %v2078
  %v2106 = vld [vmem:[%s18] sm:$0xff]
  %v2107 = vld [vmem:[%s18 + $0x8] sm:$0xff]
  %v2108 = vld [vmem:[%s18 + $0x10] sm:$0xff]
  %v2109 = vld [vmem:[%s18 + $0x18] sm:$0xff]
  %v2110 = vld [vmem:[%s18 + $0x20] sm:$0xff]
  %v2111 = vld [vmem:[%s18 + $0x28] sm:$0xff]
  %v2112 = vld [vmem:[%s18 + $0x30] sm:$0xff]
  %v2113 = vld [vmem:[%s18 + $0x38] sm:$0xff]
  %2115 = vset.pattern.permute.xlu0 0
  %2116 = vperm.xlu0 %2115, %v2106
  %v2117 = vpop.permute.xlu0 %2116
  %2120 = vset.pattern.permute.xlu0 0
  %2121 = vperm.xlu0 %2120, %v2107
  %v2122 = vpop.permute.xlu0 %2121
  %2125 = vset.pattern.permute.xlu0 0
  %2126 = vperm.xlu0 %2125, %v2108
  %v2127 = vpop.permute.xlu0 %2126
  %2130 = vset.pattern.permute.xlu0 0
  %2131 = vperm.xlu0 %2130, %v2109
  %v2132 = vpop.permute.xlu0 %2131
  %2135 = vset.pattern.permute.xlu0 0
  %2136 = vperm.xlu0 %2135, %v2110
  %v2137 = vpop.permute.xlu0 %2136
  %2140 = vset.pattern.permute.xlu0 0
  %2141 = vperm.xlu0 %2140, %v2111
  %v2142 = vpop.permute.xlu0 %2141
  %2145 = vset.pattern.permute.xlu0 0
  %2146 = vperm.xlu0 %2145, %v2112
  %v2147 = vpop.permute.xlu0 %2146
  %2150 = vset.pattern.permute.xlu0 0
  %2151 = vperm.xlu0 %2150, %v2113
  %v2152 = vpop.permute.xlu0 %2151
  %v2162 = vunpack.c.l.b16 %v2082
  %v2163 = vunpack.c.h.b16 %v2082
  %v2164 = vunpack.c.l.b16 %v2083
  %v2165 = vunpack.c.h.b16 %v2083
  %v2166 = vunpack.c.l.b16 %v2084
  %v2167 = vunpack.c.h.b16 %v2084
  %v2168 = vunpack.c.l.b16 %v2085
  %v2169 = vunpack.c.h.b16 %v2085
  %v2170 = vunpack.c.l.b16 %v2086
  %v2171 = vunpack.c.h.b16 %v2086
  %v2172 = vunpack.c.l.b16 %v2087
  %v2173 = vunpack.c.h.b16 %v2087
  %v2174 = vunpack.c.l.b16 %v2088
  %v2175 = vunpack.c.h.b16 %v2088
  %v2176 = vunpack.c.l.b16 %v2089
  %v2177 = vunpack.c.h.b16 %v2089
  %v2178 = vpack.c.b16 %v2164, %v2162
  %v2179 = vpack.c.b16 %v2165, %v2163
  %v2180 = vpack.c.b16 %v2168, %v2166
  %v2181 = vpack.c.b16 %v2169, %v2167
  %v2182 = vpack.c.b16 %v2172, %v2170
  %v2183 = vpack.c.b16 %v2173, %v2171
  %v2184 = vpack.c.b16 %v2176, %v2174
  %v2185 = vpack.c.b16 %v2177, %v2175
  %2194 = vmatpush.bf16.msra.mxu0 %v2097
  %2195 = vmatpush.bf16.msra.mxu0 %v2096
  %2196 = vmatpush.bf16.msra.mxu0 %v2095
  %2197 = vmatpush.bf16.msra.mxu0 %v2094
  %2198 = vmatpush.bf16.msra.mxu0 %v2093
  %2199 = vmatpush.bf16.msra.mxu0 %v2092
  %2200 = vmatpush.bf16.msra.mxu0 %v2091
  %2201 = vmatpush.bf16.msra.mxu0 %v2090
  %2202 = vmatmul.bf16.gmra.mxu0 %v2178
  %v2203 = vpop.f32.mrf.mxu0
  %v2204 = vadd.f32 %v2117, %v2203
  %v2205 = vpop.f32.mrf.mxu0
  %v2206 = vadd.f32 %v2122, %v2205
  %2207 = vmatmul.bf16.gmra.mxu0 %v2180
  %v2208 = vpop.f32.mrf.mxu0
  %v2209 = vadd.f32 %v2127, %v2208
  %v2210 = vpop.f32.mrf.mxu0
  %v2211 = vadd.f32 %v2132, %v2210
  %2212 = vmatmul.bf16.gmra.mxu0 %v2182
  %v2213 = vpop.f32.mrf.mxu0
  %v2214 = vadd.f32 %v2137, %v2213
  %v2215 = vpop.f32.mrf.mxu0
  %v2216 = vadd.f32 %v2142, %v2215
  %2217 = vmatmul.bf16.gmra.mxu0 %v2184
  %v2218 = vpop.f32.mrf.mxu0
  %v2219 = vadd.f32 %v2147, %v2218
  %v2220 = vpop.f32.mrf.mxu0
  %v2221 = vadd.f32 %v2152, %v2220
  %2222 = vdwg.mxu0
  %2223 = vmatpush.bf16.msra.mxu0 %v2105
  %2224 = vmatpush.bf16.msra.mxu0 %v2104
  %2225 = vmatpush.bf16.msra.mxu0 %v2103
  %2226 = vmatpush.bf16.msra.mxu0 %v2102
  %2227 = vmatpush.bf16.msra.mxu0 %v2101
  %2228 = vmatpush.bf16.msra.mxu0 %v2100
  %2229 = vmatpush.bf16.msra.mxu0 %v2099
  %2230 = vmatpush.bf16.msra.mxu0 %v2098
  %2231 = vmatmul.bf16.gmra.mxu0 %v2179
  %v2232 = vpop.f32.mrf.mxu0
  %v2233 = vadd.f32 %v2204, %v2232
  %v2234 = vpop.f32.mrf.mxu0
  %v2235 = vadd.f32 %v2206, %v2234
  %2236 = vmatmul.bf16.gmra.mxu0 %v2181
  %v2237 = vpop.f32.mrf.mxu0
  %v2238 = vadd.f32 %v2209, %v2237
  %v2239 = vpop.f32.mrf.mxu0
  %v2240 = vadd.f32 %v2211, %v2239
  %2241 = vmatmul.bf16.gmra.mxu0 %v2183
  %v2242 = vpop.f32.mrf.mxu0
  %v2243 = vadd.f32 %v2214, %v2242
  %v2244 = vpop.f32.mrf.mxu0
  %v2245 = vadd.f32 %v2216, %v2244
  %2246 = vmatmul.bf16.gmra.mxu0 %v2185
  %v2247 = vpop.f32.mrf.mxu0
  %v2248 = vadd.f32 %v2219, %v2247
  %v2249 = vpop.f32.mrf.mxu0
  %v2250 = vadd.f32 %v2221, %v2249
  %2251 = vdwg.mxu0
  %2252 = vst.msk [vmem:[%s21] sm:$0xff] %vm1944, %v2233
  %2253 = vst.msk [vmem:[%s21 + $0x8] sm:$0xff] %vm1944, %v2235
  %2254 = vst.msk [vmem:[%s21 + $0x10] sm:$0xff] %vm1944, %v2238
  %2255 = vst.msk [vmem:[%s21 + $0x18] sm:$0xff] %vm1944, %v2240
  %2256 = vst.msk [vmem:[%s21 + $0x20] sm:$0xff] %vm1944, %v2243
  %2257 = vst.msk [vmem:[%s21 + $0x28] sm:$0xff] %vm1944, %v2245
  %2258 = vst.msk [vmem:[%s21 + $0x30] sm:$0xff] %vm1944, %v2248
  %2259 = vst.msk [vmem:[%s21 + $0x38] sm:$0xff] %vm1944, %v2250
  %v2260 = vld [vmem:[%s2] sm:$0xf]
  %v2261 = vld [vmem:[%s2 + $0x4] sm:$0xf]
  %v2262 = vld [vmem:[%s2 + $0x8] sm:$0xf]
  %v2263 = vld [vmem:[%s2 + $0xc] sm:$0xf]
  %v2264 = vld [vmem:[%s2 + $0x10] sm:$0xf]
  %v2265 = vld [vmem:[%s2 + $0x14] sm:$0xf]
  %v2266 = vld [vmem:[%s2 + $0x18] sm:$0xf]
  %v2267 = vld [vmem:[%s2 + $0x1c] sm:$0xf]
  %v2268 = vld [vmem:[%s2 + $0x20] sm:$0xf]
  %v2269 = vld [vmem:[%s2 + $0x24] sm:$0xf]
  %v2270 = vld [vmem:[%s2 + $0x28] sm:$0xf]
  %v2271 = vld [vmem:[%s2 + $0x2c] sm:$0xf]
  %v2272 = vld [vmem:[%s2 + $0x30] sm:$0xf]
  %v2273 = vld [vmem:[%s2 + $0x34] sm:$0xf]
  %v2274 = vld [vmem:[%s2 + $0x38] sm:$0xf]
  %v2275 = vld [vmem:[%s2 + $0x3c] sm:$0xf]
  %v2292 = vunpack.c.l.b16 %v2260
  %v2293 = vunpack.c.l.b16 %v2261
  %v2294 = vunpack.c.l.b16 %v2262
  %v2295 = vunpack.c.l.b16 %v2263
  %v2296 = vunpack.c.l.b16 %v2264
  %v2297 = vunpack.c.l.b16 %v2265
  %v2298 = vunpack.c.l.b16 %v2266
  %v2299 = vunpack.c.l.b16 %v2267
  %v2300 = vunpack.c.l.b16 %v2268
  %v2301 = vunpack.c.l.b16 %v2269
  %v2302 = vunpack.c.l.b16 %v2270
  %v2303 = vunpack.c.l.b16 %v2271
  %v2304 = vunpack.c.l.b16 %v2272
  %v2305 = vunpack.c.l.b16 %v2273
  %v2306 = vunpack.c.l.b16 %v2274
  %v2307 = vunpack.c.l.b16 %v2275
  %v2308 = vpack.c.b16 %v2293, %v2292
  %v2309 = vpack.c.b16 %v2295, %v2294
  %v2310 = vpack.c.b16 %v2297, %v2296
  %v2311 = vpack.c.b16 %v2299, %v2298
  %v2312 = vpack.c.b16 %v2301, %v2300
  %v2313 = vpack.c.b16 %v2303, %v2302
  %v2314 = vpack.c.b16 %v2305, %v2304
  %v2315 = vpack.c.b16 %v2307, %v2306
  %2324 = vmatpush.bf16.msra.mxu0 %v2315
  %2325 = vmatpush.bf16.msra.mxu0 %v2314
  %2326 = vmatpush.bf16.msra.mxu0 %v2313
  %2327 = vmatpush.bf16.msra.mxu0 %v2312
  %2328 = vmatpush.bf16.msra.mxu0 %v2311
  %2329 = vmatpush.bf16.msra.mxu0 %v2310
  %2330 = vmatpush.bf16.msra.mxu0 %v2309
  %2331 = vmatpush.bf16.msra.mxu0 %v2308
  %2332 = vmatmul.bf16.gmra.mxu0 %v129
  %v2333 = vpop.f32.mrf.mxu0
  %v2334 = vadd.f32 %v104, %v2333
  %v2335 = vpop.f32.mrf.mxu0
  %v2336 = vadd.f32 %v109, %v2335
  %2337 = vmatmul.bf16.gmra.mxu0 %v130
  %v2338 = vpop.f32.mrf.mxu0
  %v2339 = vadd.f32 %v114, %v2338
  %v2340 = vpop.f32.mrf.mxu0
  %v2341 = vadd.f32 %v119, %v2340
  %2342 = vdwg.mxu0
  %v2343 = vld [vmem:[%s5] sm:$0xf]
  %v2344 = vld [vmem:[%s5 + $0x4] sm:$0xf]
  %v2345 = vld [vmem:[%s5 + $0x8] sm:$0xf]
  %v2346 = vld [vmem:[%s5 + $0xc] sm:$0xf]
  %v2347 = vld [vmem:[%s5 + $0x10] sm:$0xf]
  %v2348 = vld [vmem:[%s5 + $0x14] sm:$0xf]
  %v2349 = vld [vmem:[%s5 + $0x18] sm:$0xf]
  %v2350 = vld [vmem:[%s5 + $0x1c] sm:$0xf]
  %v2351 = vpack.c.bf16 %v2336, %v2334
  %v2352 = vpack.c.bf16 %v2341, %v2339
  %s2353 = scalar_lea.vmem %s2, 64
  %v2354 = vld [vmem:[%s2353] sm:$0xf]
  %v2355 = vld [vmem:[%s2353 + $0x4] sm:$0xf]
  %v2356 = vld [vmem:[%s2353 + $0x8] sm:$0xf]
  %v2357 = vld [vmem:[%s2353 + $0xc] sm:$0xf]
  %v2358 = vld [vmem:[%s2353 + $0x10] sm:$0xf]
  %v2359 = vld [vmem:[%s2353 + $0x14] sm:$0xf]
  %v2360 = vld [vmem:[%s2353 + $0x18] sm:$0xf]
  %v2361 = vld [vmem:[%s2353 + $0x1c] sm:$0xf]
  %v2362 = vld [vmem:[%s2353 + $0x20] sm:$0xf]
  %v2363 = vld [vmem:[%s2353 + $0x24] sm:$0xf]
  %v2364 = vld [vmem:[%s2353 + $0x28] sm:$0xf]
  %v2365 = vld [vmem:[%s2353 + $0x2c] sm:$0xf]
  %v2366 = vld [vmem:[%s2353 + $0x30] sm:$0xf]
  %v2367 = vld [vmem:[%s2353 + $0x34] sm:$0xf]
  %v2368 = vld [vmem:[%s2353 + $0x38] sm:$0xf]
  %v2369 = vld [vmem:[%s2353 + $0x3c] sm:$0xf]
  %v2386 = vunpack.c.l.b16 %v2354
  %v2387 = vunpack.c.l.b16 %v2355
  %v2388 = vunpack.c.l.b16 %v2356
  %v2389 = vunpack.c.l.b16 %v2357
  %v2390 = vunpack.c.l.b16 %v2358
  %v2391 = vunpack.c.l.b16 %v2359
  %v2392 = vunpack.c.l.b16 %v2360
  %v2393 = vunpack.c.l.b16 %v2361
  %v2394 = vunpack.c.l.b16 %v2362
  %v2395 = vunpack.c.l.b16 %v2363
  %v2396 = vunpack.c.l.b16 %v2364
  %v2397 = vunpack.c.l.b16 %v2365
  %v2398 = vunpack.c.l.b16 %v2366
  %v2399 = vunpack.c.l.b16 %v2367
  %v2400 = vunpack.c.l.b16 %v2368
  %v2401 = vunpack.c.l.b16 %v2369
  %v2402 = vpack.c.b16 %v2387, %v2386
  %v2403 = vpack.c.b16 %v2389, %v2388
  %v2404 = vpack.c.b16 %v2391, %v2390
  %v2405 = vpack.c.b16 %v2393, %v2392
  %v2406 = vpack.c.b16 %v2395, %v2394
  %v2407 = vpack.c.b16 %v2397, %v2396
  %v2408 = vpack.c.b16 %v2399, %v2398
  %v2409 = vpack.c.b16 %v2401, %v2400
  %2418 = vmatpush.bf16.msra.mxu0 %v2409
  %2419 = vmatpush.bf16.msra.mxu0 %v2408
  %2420 = vmatpush.bf16.msra.mxu0 %v2407
  %2421 = vmatpush.bf16.msra.mxu0 %v2406
  %2422 = vmatpush.bf16.msra.mxu0 %v2405
  %2423 = vmatpush.bf16.msra.mxu0 %v2404
  %2424 = vmatpush.bf16.msra.mxu0 %v2403
  %2425 = vmatpush.bf16.msra.mxu0 %v2402
  %2426 = vmatmul.bf16.gmra.mxu0 %v129
  %v2427 = vpop.f32.mrf.mxu0
  %v2428 = vadd.f32 %v104, %v2427
  %v2429 = vpop.f32.mrf.mxu0
  %v2430 = vadd.f32 %v109, %v2429
  %2431 = vmatmul.bf16.gmra.mxu0 %v130
  %v2432 = vpop.f32.mrf.mxu0
  %v2433 = vadd.f32 %v114, %v2432
  %v2434 = vpop.f32.mrf.mxu0
  %v2435 = vadd.f32 %v119, %v2434
  %2436 = vdwg.mxu0
  %v2437 = vld [vmem:[%s1127] sm:$0xf]
  %v2438 = vld [vmem:[%s1127 + $0x4] sm:$0xf]
  %v2439 = vld [vmem:[%s1127 + $0x8] sm:$0xf]
  %v2440 = vld [vmem:[%s1127 + $0xc] sm:$0xf]
  %v2441 = vld [vmem:[%s1127 + $0x10] sm:$0xf]
  %v2442 = vld [vmem:[%s1127 + $0x14] sm:$0xf]
  %v2443 = vld [vmem:[%s1127 + $0x18] sm:$0xf]
  %v2444 = vld [vmem:[%s1127 + $0x1c] sm:$0xf]
  %v2445 = vpack.c.bf16 %v2430, %v2428
  %v2446 = vpack.c.bf16 %v2435, %v2433
  %v2455 = vunpack.c.l.b16 %v2437
  %v2456 = vunpack.c.l.b16 %v2438
  %v2457 = vunpack.c.l.b16 %v2439
  %v2458 = vunpack.c.l.b16 %v2440
  %v2459 = vunpack.c.l.b16 %v2441
  %v2460 = vunpack.c.l.b16 %v2442
  %v2461 = vunpack.c.l.b16 %v2443
  %v2462 = vunpack.c.l.b16 %v2444
  %v2463 = vpack.c.b16 %v2456, %v2455
  %v2464 = vpack.c.b16 %v2458, %v2457
  %v2465 = vpack.c.b16 %v2460, %v2459
  %v2466 = vpack.c.b16 %v2462, %v2461
  %v2468 = vsel %vm559, %v2463, 0
  %v2471 = vsel %vm559, %v2464, 0
  %v2474 = vsel %vm559, %v2465, 0
  %v2477 = vsel %vm559, %v2466, 0
  %2479 = vmatpush.bf16.msra.mxu0 0
  %2480 = vmatpush.bf16.msra.mxu0 0
  %2481 = vmatpush.bf16.msra.mxu0 0
  %2482 = vmatpush.bf16.msra.mxu0 0
  %2483 = vmatpush.bf16.msra.mxu0 0
  %2484 = vmatpush.bf16.msra.mxu0 0
  %2485 = vmatpush.bf16.msra.mxu0 %v2446
  %2486 = vmatpush.bf16.msra.mxu0 %v2445
  %2487 = vmatmul.bf16.gmra.mxu0 %v2468
  %v2488 = vpop.f32.mrf.mxu0
  %v2489 = vadd.f32 0.0, %v2488
  %v2490 = vpop.f32.mrf.mxu0
  %v2491 = vadd.f32 0.0, %v2490
  %2492 = vmatmul.bf16.gmra.mxu0 %v2471
  %v2493 = vpop.f32.mrf.mxu0
  %v2494 = vadd.f32 0.0, %v2493
  %v2495 = vpop.f32.mrf.mxu0
  %v2496 = vadd.f32 0.0, %v2495
  %2497 = vmatmul.bf16.gmra.mxu0 %v2474
  %v2498 = vpop.f32.mrf.mxu0
  %v2499 = vadd.f32 0.0, %v2498
  %v2500 = vpop.f32.mrf.mxu0
  %v2501 = vadd.f32 0.0, %v2500
  %2502 = vmatmul.bf16.gmra.mxu0 %v2477
  %v2503 = vpop.f32.mrf.mxu0
  %v2504 = vadd.f32 0.0, %v2503
  %v2505 = vpop.f32.mrf.mxu0
  %v2506 = vadd.f32 0.0, %v2505
  %2507 = vdwg.mxu0
  %v2516 = vunpack.c.l.b16 %v2343
  %v2517 = vunpack.c.l.b16 %v2344
  %v2518 = vunpack.c.l.b16 %v2345
  %v2519 = vunpack.c.l.b16 %v2346
  %v2520 = vunpack.c.l.b16 %v2347
  %v2521 = vunpack.c.l.b16 %v2348
  %v2522 = vunpack.c.l.b16 %v2349
  %v2523 = vunpack.c.l.b16 %v2350
  %v2524 = vpack.c.b16 %v2517, %v2516
  %v2525 = vpack.c.b16 %v2519, %v2518
  %v2526 = vpack.c.b16 %v2521, %v2520
  %v2527 = vpack.c.b16 %v2523, %v2522
  %v2529 = vsel %vm559, %v2524, 0
  %v2532 = vsel %vm559, %v2525, 0
  %v2535 = vsel %vm559, %v2526, 0
  %v2538 = vsel %vm559, %v2527, 0
  %2540 = vmatpush.bf16.msra.mxu0 0
  %2541 = vmatpush.bf16.msra.mxu0 0
  %2542 = vmatpush.bf16.msra.mxu0 0
  %2543 = vmatpush.bf16.msra.mxu0 0
  %2544 = vmatpush.bf16.msra.mxu0 0
  %2545 = vmatpush.bf16.msra.mxu0 0
  %2546 = vmatpush.bf16.msra.mxu0 %v2352
  %2547 = vmatpush.bf16.msra.mxu0 %v2351
  %2548 = vmatmul.bf16.gmra.mxu0 %v2529
  %v2549 = vpop.f32.mrf.mxu0
  %v2550 = vadd.f32 %v2489, %v2549
  %v2551 = vpop.f32.mrf.mxu0
  %v2552 = vadd.f32 %v2491, %v2551
  %2553 = vmatmul.bf16.gmra.mxu0 %v2532
  %v2554 = vpop.f32.mrf.mxu0
  %v2555 = vadd.f32 %v2494, %v2554
  %v2556 = vpop.f32.mrf.mxu0
  %v2557 = vadd.f32 %v2496, %v2556
  %2558 = vmatmul.bf16.gmra.mxu0 %v2535
  %v2559 = vpop.f32.mrf.mxu0
  %v2560 = vadd.f32 %v2499, %v2559
  %v2561 = vpop.f32.mrf.mxu0
  %v2562 = vadd.f32 %v2501, %v2561
  %2563 = vmatmul.bf16.gmra.mxu0 %v2538
  %v2564 = vpop.f32.mrf.mxu0
  %v2565 = vadd.f32 %v2504, %v2564
  %v2566 = vpop.f32.mrf.mxu0
  %v2567 = vadd.f32 %v2506, %v2566
  %2568 = vdwg.mxu0
  %s2569 = scalar_lea.vmem %s2, 128
  %v2570 = vld [vmem:[%s2569] sm:$0xf]
  %v2571 = vld [vmem:[%s2569 + $0x4] sm:$0xf]
  %v2572 = vld [vmem:[%s2569 + $0x8] sm:$0xf]
  %v2573 = vld [vmem:[%s2569 + $0xc] sm:$0xf]
  %v2574 = vld [vmem:[%s2569 + $0x10] sm:$0xf]
  %v2575 = vld [vmem:[%s2569 + $0x14] sm:$0xf]
  %v2576 = vld [vmem:[%s2569 + $0x18] sm:$0xf]
  %v2577 = vld [vmem:[%s2569 + $0x1c] sm:$0xf]
  %v2578 = vld [vmem:[%s2569 + $0x20] sm:$0xf]
  %v2579 = vld [vmem:[%s2569 + $0x24] sm:$0xf]
  %v2580 = vld [vmem:[%s2569 + $0x28] sm:$0xf]
  %v2581 = vld [vmem:[%s2569 + $0x2c] sm:$0xf]
  %v2582 = vld [vmem:[%s2569 + $0x30] sm:$0xf]
  %v2583 = vld [vmem:[%s2569 + $0x34] sm:$0xf]
  %v2584 = vld [vmem:[%s2569 + $0x38] sm:$0xf]
  %v2585 = vld [vmem:[%s2569 + $0x3c] sm:$0xf]
  %v2602 = vunpack.c.l.b16 %v2570
  %v2603 = vunpack.c.l.b16 %v2571
  %v2604 = vunpack.c.l.b16 %v2572
  %v2605 = vunpack.c.l.b16 %v2573
  %v2606 = vunpack.c.l.b16 %v2574
  %v2607 = vunpack.c.l.b16 %v2575
  %v2608 = vunpack.c.l.b16 %v2576
  %v2609 = vunpack.c.l.b16 %v2577
  %v2610 = vunpack.c.l.b16 %v2578
  %v2611 = vunpack.c.l.b16 %v2579
  %v2612 = vunpack.c.l.b16 %v2580
  %v2613 = vunpack.c.l.b16 %v2581
  %v2614 = vunpack.c.l.b16 %v2582
  %v2615 = vunpack.c.l.b16 %v2583
  %v2616 = vunpack.c.l.b16 %v2584
  %v2617 = vunpack.c.l.b16 %v2585
  %v2618 = vpack.c.b16 %v2603, %v2602
  %v2619 = vpack.c.b16 %v2605, %v2604
  %v2620 = vpack.c.b16 %v2607, %v2606
  %v2621 = vpack.c.b16 %v2609, %v2608
  %v2622 = vpack.c.b16 %v2611, %v2610
  %v2623 = vpack.c.b16 %v2613, %v2612
  %v2624 = vpack.c.b16 %v2615, %v2614
  %v2625 = vpack.c.b16 %v2617, %v2616
  %2634 = vmatpush.bf16.msra.mxu0 %v2625
  %2635 = vmatpush.bf16.msra.mxu0 %v2624
  %2636 = vmatpush.bf16.msra.mxu0 %v2623
  %2637 = vmatpush.bf16.msra.mxu0 %v2622
  %2638 = vmatpush.bf16.msra.mxu0 %v2621
  %2639 = vmatpush.bf16.msra.mxu0 %v2620
  %2640 = vmatpush.bf16.msra.mxu0 %v2619
  %2641 = vmatpush.bf16.msra.mxu0 %v2618
  %2642 = vmatmul.bf16.gmra.mxu0 %v129
  %v2643 = vpop.f32.mrf.mxu0
  %v2644 = vadd.f32 %v104, %v2643
  %v2645 = vpop.f32.mrf.mxu0
  %v2646 = vadd.f32 %v109, %v2645
  %2647 = vmatmul.bf16.gmra.mxu0 %v130
  %v2648 = vpop.f32.mrf.mxu0
  %v2649 = vadd.f32 %v114, %v2648
  %v2650 = vpop.f32.mrf.mxu0
  %v2651 = vadd.f32 %v119, %v2650
  %2652 = vdwg.mxu0
  %v2653 = vld [vmem:[%s1344] sm:$0xf]
  %v2654 = vld [vmem:[%s1344 + $0x4] sm:$0xf]
  %v2655 = vld [vmem:[%s1344 + $0x8] sm:$0xf]
  %v2656 = vld [vmem:[%s1344 + $0xc] sm:$0xf]
  %v2657 = vld [vmem:[%s1344 + $0x10] sm:$0xf]
  %v2658 = vld [vmem:[%s1344 + $0x14] sm:$0xf]
  %v2659 = vld [vmem:[%s1344 + $0x18] sm:$0xf]
  %v2660 = vld [vmem:[%s1344 + $0x1c] sm:$0xf]
  %v2661 = vpack.c.bf16 %v2646, %v2644
  %v2662 = vpack.c.bf16 %v2651, %v2649
  %v2671 = vunpack.c.l.b16 %v2653
  %v2672 = vunpack.c.l.b16 %v2654
  %v2673 = vunpack.c.l.b16 %v2655
  %v2674 = vunpack.c.l.b16 %v2656
  %v2675 = vunpack.c.l.b16 %v2657
  %v2676 = vunpack.c.l.b16 %v2658
  %v2677 = vunpack.c.l.b16 %v2659
  %v2678 = vunpack.c.l.b16 %v2660
  %v2679 = vpack.c.b16 %v2672, %v2671
  %v2680 = vpack.c.b16 %v2674, %v2673
  %v2681 = vpack.c.b16 %v2676, %v2675
  %v2682 = vpack.c.b16 %v2678, %v2677
  %v2684 = vsel %vm559, %v2679, 0
  %v2687 = vsel %vm559, %v2680, 0
  %v2690 = vsel %vm559, %v2681, 0
  %v2693 = vsel %vm559, %v2682, 0
  %2695 = vmatpush.bf16.msra.mxu0 0
  %2696 = vmatpush.bf16.msra.mxu0 0
  %2697 = vmatpush.bf16.msra.mxu0 0
  %2698 = vmatpush.bf16.msra.mxu0 0
  %2699 = vmatpush.bf16.msra.mxu0 0
  %2700 = vmatpush.bf16.msra.mxu0 0
  %2701 = vmatpush.bf16.msra.mxu0 %v2662
  %2702 = vmatpush.bf16.msra.mxu0 %v2661
  %2703 = vmatmul.bf16.gmra.mxu0 %v2684
  %v2704 = vpop.f32.mrf.mxu0
  %v2705 = vadd.f32 0.0, %v2704
  %v2706 = vpop.f32.mrf.mxu0
  %v2707 = vadd.f32 0.0, %v2706
  %2708 = vmatmul.bf16.gmra.mxu0 %v2687
  %v2709 = vpop.f32.mrf.mxu0
  %v2710 = vadd.f32 0.0, %v2709
  %v2711 = vpop.f32.mrf.mxu0
  %v2712 = vadd.f32 0.0, %v2711
  %2713 = vmatmul.bf16.gmra.mxu0 %v2690
  %v2714 = vpop.f32.mrf.mxu0
  %v2715 = vadd.f32 0.0, %v2714
  %v2716 = vpop.f32.mrf.mxu0
  %v2717 = vadd.f32 0.0, %v2716
  %2718 = vmatmul.bf16.gmra.mxu0 %v2693
  %v2719 = vpop.f32.mrf.mxu0
  %v2720 = vadd.f32 0.0, %v2719
  %v2721 = vpop.f32.mrf.mxu0
  %v2722 = vadd.f32 0.0, %v2721
  %2723 = vdwg.mxu0
  %v2724 = vadd.f32 %v2550, %v2705
  %v2725 = vadd.f32 %v2552, %v2707
  %v2726 = vadd.f32 %v2555, %v2710
  %v2727 = vadd.f32 %v2557, %v2712
  %v2728 = vadd.f32 %v2560, %v2715
  %v2729 = vadd.f32 %v2562, %v2717
  %v2730 = vadd.f32 %v2565, %v2720
  %v2731 = vadd.f32 %v2567, %v2722
  %s2732 = scalar_lea.vmem %s2, 192
  %v2733 = vld [vmem:[%s2732] sm:$0xf]
  %v2734 = vld [vmem:[%s2732 + $0x4] sm:$0xf]
  %v2735 = vld [vmem:[%s2732 + $0x8] sm:$0xf]
  %v2736 = vld [vmem:[%s2732 + $0xc] sm:$0xf]
  %v2737 = vld [vmem:[%s2732 + $0x10] sm:$0xf]
  %v2738 = vld [vmem:[%s2732 + $0x14] sm:$0xf]
  %v2739 = vld [vmem:[%s2732 + $0x18] sm:$0xf]
  %v2740 = vld [vmem:[%s2732 + $0x1c] sm:$0xf]
  %v2741 = vld [vmem:[%s2732 + $0x20] sm:$0xf]
  %v2742 = vld [vmem:[%s2732 + $0x24] sm:$0xf]
  %v2743 = vld [vmem:[%s2732 + $0x28] sm:$0xf]
  %v2744 = vld [vmem:[%s2732 + $0x2c] sm:$0xf]
  %v2745 = vld [vmem:[%s2732 + $0x30] sm:$0xf]
  %v2746 = vld [vmem:[%s2732 + $0x34] sm:$0xf]
  %v2747 = vld [vmem:[%s2732 + $0x38] sm:$0xf]
  %v2748 = vld [vmem:[%s2732 + $0x3c] sm:$0xf]
  %v2765 = vunpack.c.l.b16 %v2733
  %v2766 = vunpack.c.l.b16 %v2734
  %v2767 = vunpack.c.l.b16 %v2735
  %v2768 = vunpack.c.l.b16 %v2736
  %v2769 = vunpack.c.l.b16 %v2737
  %v2770 = vunpack.c.l.b16 %v2738
  %v2771 = vunpack.c.l.b16 %v2739
  %v2772 = vunpack.c.l.b16 %v2740
  %v2773 = vunpack.c.l.b16 %v2741
  %v2774 = vunpack.c.l.b16 %v2742
  %v2775 = vunpack.c.l.b16 %v2743
  %v2776 = vunpack.c.l.b16 %v2744
  %v2777 = vunpack.c.l.b16 %v2745
  %v2778 = vunpack.c.l.b16 %v2746
  %v2779 = vunpack.c.l.b16 %v2747
  %v2780 = vunpack.c.l.b16 %v2748
  %v2781 = vpack.c.b16 %v2766, %v2765
  %v2782 = vpack.c.b16 %v2768, %v2767
  %v2783 = vpack.c.b16 %v2770, %v2769
  %v2784 = vpack.c.b16 %v2772, %v2771
  %v2785 = vpack.c.b16 %v2774, %v2773
  %v2786 = vpack.c.b16 %v2776, %v2775
  %v2787 = vpack.c.b16 %v2778, %v2777
  %v2788 = vpack.c.b16 %v2780, %v2779
  %2797 = vmatpush.bf16.msra.mxu0 %v2788
  %2798 = vmatpush.bf16.msra.mxu0 %v2787
  %2799 = vmatpush.bf16.msra.mxu0 %v2786
  %2800 = vmatpush.bf16.msra.mxu0 %v2785
  %2801 = vmatpush.bf16.msra.mxu0 %v2784
  %2802 = vmatpush.bf16.msra.mxu0 %v2783
  %2803 = vmatpush.bf16.msra.mxu0 %v2782
  %2804 = vmatpush.bf16.msra.mxu0 %v2781
  %2805 = vmatmul.bf16.gmra.mxu0 %v129
  %v2806 = vpop.f32.mrf.mxu0
  %v2807 = vadd.f32 %v104, %v2806
  %v2808 = vpop.f32.mrf.mxu0
  %v2809 = vadd.f32 %v109, %v2808
  %2810 = vmatmul.bf16.gmra.mxu0 %v130
  %v2811 = vpop.f32.mrf.mxu0
  %v2812 = vadd.f32 %v114, %v2811
  %v2813 = vpop.f32.mrf.mxu0
  %v2814 = vadd.f32 %v119, %v2813
  %2815 = vdwg.mxu0
  %v2816 = vld [vmem:[%s1508] sm:$0xf]
  %v2817 = vld [vmem:[%s1508 + $0x4] sm:$0xf]
  %v2818 = vld [vmem:[%s1508 + $0x8] sm:$0xf]
  %v2819 = vld [vmem:[%s1508 + $0xc] sm:$0xf]
  %v2820 = vld [vmem:[%s1508 + $0x10] sm:$0xf]
  %v2821 = vld [vmem:[%s1508 + $0x14] sm:$0xf]
  %v2822 = vld [vmem:[%s1508 + $0x18] sm:$0xf]
  %v2823 = vld [vmem:[%s1508 + $0x1c] sm:$0xf]
  %v2824 = vpack.c.bf16 %v2809, %v2807
  %v2825 = vpack.c.bf16 %v2814, %v2812
  %v2834 = vunpack.c.l.b16 %v2816
  %v2835 = vunpack.c.l.b16 %v2817
  %v2836 = vunpack.c.l.b16 %v2818
  %v2837 = vunpack.c.l.b16 %v2819
  %v2838 = vunpack.c.l.b16 %v2820
  %v2839 = vunpack.c.l.b16 %v2821
  %v2840 = vunpack.c.l.b16 %v2822
  %v2841 = vunpack.c.l.b16 %v2823
  %v2842 = vpack.c.b16 %v2835, %v2834
  %v2843 = vpack.c.b16 %v2837, %v2836
  %v2844 = vpack.c.b16 %v2839, %v2838
  %v2845 = vpack.c.b16 %v2841, %v2840
  %v2847 = vsel %vm559, %v2842, 0
  %v2850 = vsel %vm559, %v2843, 0
  %v2853 = vsel %vm559, %v2844, 0
  %v2856 = vsel %vm559, %v2845, 0
  %2858 = vmatpush.bf16.msra.mxu0 0
  %2859 = vmatpush.bf16.msra.mxu0 0
  %2860 = vmatpush.bf16.msra.mxu0 0
  %2861 = vmatpush.bf16.msra.mxu0 0
  %2862 = vmatpush.bf16.msra.mxu0 0
  %2863 = vmatpush.bf16.msra.mxu0 0
  %2864 = vmatpush.bf16.msra.mxu0 %v2825
  %2865 = vmatpush.bf16.msra.mxu0 %v2824
  %2866 = vmatmul.bf16.gmra.mxu0 %v2847
  %v2867 = vpop.f32.mrf.mxu0
  %v2868 = vadd.f32 0.0, %v2867
  %v2869 = vpop.f32.mrf.mxu0
  %v2870 = vadd.f32 0.0, %v2869
  %2871 = vmatmul.bf16.gmra.mxu0 %v2850
  %v2872 = vpop.f32.mrf.mxu0
  %v2873 = vadd.f32 0.0, %v2872
  %v2874 = vpop.f32.mrf.mxu0
  %v2875 = vadd.f32 0.0, %v2874
  %2876 = vmatmul.bf16.gmra.mxu0 %v2853
  %v2877 = vpop.f32.mrf.mxu0
  %v2878 = vadd.f32 0.0, %v2877
  %v2879 = vpop.f32.mrf.mxu0
  %v2880 = vadd.f32 0.0, %v2879
  %2881 = vmatmul.bf16.gmra.mxu0 %v2856
  %v2882 = vpop.f32.mrf.mxu0
  %v2883 = vadd.f32 0.0, %v2882
  %v2884 = vpop.f32.mrf.mxu0
  %v2885 = vadd.f32 0.0, %v2884
  %2886 = vdwg.mxu0
  %v2887 = vadd.f32 %v2724, %v2868
  %v2888 = vadd.f32 %v2725, %v2870
  %v2889 = vadd.f32 %v2726, %v2873
  %v2890 = vadd.f32 %v2727, %v2875
  %v2891 = vadd.f32 %v2728, %v2878
  %v2892 = vadd.f32 %v2729, %v2880
  %v2893 = vadd.f32 %v2730, %v2883
  %v2894 = vadd.f32 %v2731, %v2885
  %v2895 = vadd.f32 %v2887, %v1591
  %v2896 = vadd.f32 %v2888, %v1596
  %v2897 = vadd.f32 %v2889, %v1601
  %v2898 = vadd.f32 %v2890, %v1606
  %v2899 = vadd.f32 %v2891, %v1611
  %v2900 = vadd.f32 %v2892, %v1616
  %v2901 = vadd.f32 %v2893, %v1621
  %v2902 = vadd.f32 %v2894, %v1626
  %v2903 = vld [vmem:[%s7] sm:$0xf]
  %v2904 = vld [vmem:[%s7 + $0x4] sm:$0xf]
  %v2905 = vld [vmem:[%s7 + $0x8] sm:$0xf]
  %v2906 = vld [vmem:[%s7 + $0xc] sm:$0xf]
  %v2907 = vld [vmem:[%s7 + $0x10] sm:$0xf]
  %v2908 = vld [vmem:[%s7 + $0x14] sm:$0xf]
  %v2909 = vld [vmem:[%s7 + $0x18] sm:$0xf]
  %v2910 = vld [vmem:[%s7 + $0x1c] sm:$0xf]
  %v2911 = vld [vmem:[%s7 + $0x20] sm:$0xf]
  %v2912 = vld [vmem:[%s7 + $0x24] sm:$0xf]
  %v2913 = vld [vmem:[%s7 + $0x28] sm:$0xf]
  %v2914 = vld [vmem:[%s7 + $0x2c] sm:$0xf]
  %v2915 = vld [vmem:[%s7 + $0x30] sm:$0xf]
  %v2916 = vld [vmem:[%s7 + $0x34] sm:$0xf]
  %v2917 = vld [vmem:[%s7 + $0x38] sm:$0xf]
  %v2918 = vld [vmem:[%s7 + $0x3c] sm:$0xf]
  %v2919 = vpack.c.bf16 %v2896, %v2895
  %v2920 = vpack.c.bf16 %v2898, %v2897
  %v2921 = vpack.c.bf16 %v2900, %v2899
  %v2922 = vpack.c.bf16 %v2902, %v2901
  %s2923 = scalar_lea.vmem %s2, 256
  %v2924 = vld [vmem:[%s2923] sm:$0xf]
  %v2925 = vld [vmem:[%s2923 + $0x4] sm:$0xf]
  %v2926 = vld [vmem:[%s2923 + $0x8] sm:$0xf]
  %v2927 = vld [vmem:[%s2923 + $0xc] sm:$0xf]
  %v2928 = vld [vmem:[%s2923 + $0x10] sm:$0xf]
  %v2929 = vld [vmem:[%s2923 + $0x14] sm:$0xf]
  %v2930 = vld [vmem:[%s2923 + $0x18] sm:$0xf]
  %v2931 = vld [vmem:[%s2923 + $0x1c] sm:$0xf]
  %v2932 = vld [vmem:[%s2923 + $0x20] sm:$0xf]
  %v2933 = vld [vmem:[%s2923 + $0x24] sm:$0xf]
  %v2934 = vld [vmem:[%s2923 + $0x28] sm:$0xf]
  %v2935 = vld [vmem:[%s2923 + $0x2c] sm:$0xf]
  %v2936 = vld [vmem:[%s2923 + $0x30] sm:$0xf]
  %v2937 = vld [vmem:[%s2923 + $0x34] sm:$0xf]
  %v2938 = vld [vmem:[%s2923 + $0x38] sm:$0xf]
  %v2939 = vld [vmem:[%s2923 + $0x3c] sm:$0xf]
  %v2956 = vunpack.c.l.b16 %v2924
  %v2957 = vunpack.c.l.b16 %v2925
  %v2958 = vunpack.c.l.b16 %v2926
  %v2959 = vunpack.c.l.b16 %v2927
  %v2960 = vunpack.c.l.b16 %v2928
  %v2961 = vunpack.c.l.b16 %v2929
  %v2962 = vunpack.c.l.b16 %v2930
  %v2963 = vunpack.c.l.b16 %v2931
  %v2964 = vunpack.c.l.b16 %v2932
  %v2965 = vunpack.c.l.b16 %v2933
  %v2966 = vunpack.c.l.b16 %v2934
  %v2967 = vunpack.c.l.b16 %v2935
  %v2968 = vunpack.c.l.b16 %v2936
  %v2969 = vunpack.c.l.b16 %v2937
  %v2970 = vunpack.c.l.b16 %v2938
  %v2971 = vunpack.c.l.b16 %v2939
  %v2972 = vpack.c.b16 %v2957, %v2956
  %v2973 = vpack.c.b16 %v2959, %v2958
  %v2974 = vpack.c.b16 %v2961, %v2960
  %v2975 = vpack.c.b16 %v2963, %v2962
  %v2976 = vpack.c.b16 %v2965, %v2964
  %v2977 = vpack.c.b16 %v2967, %v2966
  %v2978 = vpack.c.b16 %v2969, %v2968
  %v2979 = vpack.c.b16 %v2971, %v2970
  %2988 = vmatpush.bf16.msra.mxu0 %v2979
  %2989 = vmatpush.bf16.msra.mxu0 %v2978
  %2990 = vmatpush.bf16.msra.mxu0 %v2977
  %2991 = vmatpush.bf16.msra.mxu0 %v2976
  %2992 = vmatpush.bf16.msra.mxu0 %v2975
  %2993 = vmatpush.bf16.msra.mxu0 %v2974
  %2994 = vmatpush.bf16.msra.mxu0 %v2973
  %2995 = vmatpush.bf16.msra.mxu0 %v2972
  %2996 = vmatmul.bf16.gmra.mxu0 %v129
  %v2997 = vpop.f32.mrf.mxu0
  %v2998 = vadd.f32 %v104, %v2997
  %v2999 = vpop.f32.mrf.mxu0
  %v3000 = vadd.f32 %v109, %v2999
  %3001 = vmatmul.bf16.gmra.mxu0 %v130
  %v3002 = vpop.f32.mrf.mxu0
  %v3003 = vadd.f32 %v114, %v3002
  %v3004 = vpop.f32.mrf.mxu0
  %v3005 = vadd.f32 %v119, %v3004
  %3006 = vdwg.mxu0
  %v3007 = vpack.c.bf16 %v3000, %v2998
  %v3008 = vpack.c.bf16 %v3005, %v3003
  %s3009 = scalar_lea.vmem %s2, 320
  %v3010 = vld [vmem:[%s3009] sm:$0xf]
  %v3011 = vld [vmem:[%s3009 + $0x4] sm:$0xf]
  %v3012 = vld [vmem:[%s3009 + $0x8] sm:$0xf]
  %v3013 = vld [vmem:[%s3009 + $0xc] sm:$0xf]
  %v3014 = vld [vmem:[%s3009 + $0x10] sm:$0xf]
  %v3015 = vld [vmem:[%s3009 + $0x14] sm:$0xf]
  %v3016 = vld [vmem:[%s3009 + $0x18] sm:$0xf]
  %v3017 = vld [vmem:[%s3009 + $0x1c] sm:$0xf]
  %v3018 = vld [vmem:[%s3009 + $0x20] sm:$0xf]
  %v3019 = vld [vmem:[%s3009 + $0x24] sm:$0xf]
  %v3020 = vld [vmem:[%s3009 + $0x28] sm:$0xf]
  %v3021 = vld [vmem:[%s3009 + $0x2c] sm:$0xf]
  %v3022 = vld [vmem:[%s3009 + $0x30] sm:$0xf]
  %v3023 = vld [vmem:[%s3009 + $0x34] sm:$0xf]
  %v3024 = vld [vmem:[%s3009 + $0x38] sm:$0xf]
  %v3025 = vld [vmem:[%s3009 + $0x3c] sm:$0xf]
  %v3042 = vunpack.c.l.b16 %v3010
  %v3043 = vunpack.c.l.b16 %v3011
  %v3044 = vunpack.c.l.b16 %v3012
  %v3045 = vunpack.c.l.b16 %v3013
  %v3046 = vunpack.c.l.b16 %v3014
  %v3047 = vunpack.c.l.b16 %v3015
  %v3048 = vunpack.c.l.b16 %v3016
  %v3049 = vunpack.c.l.b16 %v3017
  %v3050 = vunpack.c.l.b16 %v3018
  %v3051 = vunpack.c.l.b16 %v3019
  %v3052 = vunpack.c.l.b16 %v3020
  %v3053 = vunpack.c.l.b16 %v3021
  %v3054 = vunpack.c.l.b16 %v3022
  %v3055 = vunpack.c.l.b16 %v3023
  %v3056 = vunpack.c.l.b16 %v3024
  %v3057 = vunpack.c.l.b16 %v3025
  %v3058 = vpack.c.b16 %v3043, %v3042
  %v3059 = vpack.c.b16 %v3045, %v3044
  %v3060 = vpack.c.b16 %v3047, %v3046
  %v3061 = vpack.c.b16 %v3049, %v3048
  %v3062 = vpack.c.b16 %v3051, %v3050
  %v3063 = vpack.c.b16 %v3053, %v3052
  %v3064 = vpack.c.b16 %v3055, %v3054
  %v3065 = vpack.c.b16 %v3057, %v3056
  %3074 = vmatpush.bf16.msra.mxu0 %v3065
  %3075 = vmatpush.bf16.msra.mxu0 %v3064
  %3076 = vmatpush.bf16.msra.mxu0 %v3063
  %3077 = vmatpush.bf16.msra.mxu0 %v3062
  %3078 = vmatpush.bf16.msra.mxu0 %v3061
  %3079 = vmatpush.bf16.msra.mxu0 %v3060
  %3080 = vmatpush.bf16.msra.mxu0 %v3059
  %3081 = vmatpush.bf16.msra.mxu0 %v3058
  %3082 = vmatmul.bf16.gmra.mxu0 %v129
  %v3083 = vpop.f32.mrf.mxu0
  %v3084 = vadd.f32 %v104, %v3083
  %v3085 = vpop.f32.mrf.mxu0
  %v3086 = vadd.f32 %v109, %v3085
  %3087 = vmatmul.bf16.gmra.mxu0 %v130
  %v3088 = vpop.f32.mrf.mxu0
  %v3089 = vadd.f32 %v114, %v3088
  %v3090 = vpop.f32.mrf.mxu0
  %v3091 = vadd.f32 %v119, %v3090
  %3092 = vdwg.mxu0
  %v3093 = vpack.c.bf16 %v3086, %v3084
  %v3094 = vpack.c.bf16 %v3091, %v3089
  %3095 = vmatpush.bf16.msra.mxu0 0
  %3096 = vmatpush.bf16.msra.mxu0 0
  %3097 = vmatpush.bf16.msra.mxu0 0
  %3098 = vmatpush.bf16.msra.mxu0 0
  %3099 = vmatpush.bf16.msra.mxu0 0
  %3100 = vmatpush.bf16.msra.mxu0 0
  %3101 = vmatpush.bf16.msra.mxu0 %v3094
  %3102 = vmatpush.bf16.msra.mxu0 %v3093
  %3103 = vmatmul.bf16.gmra.mxu0 %v2468
  %v3104 = vpop.f32.mrf.mxu0
  %v3105 = vadd.f32 0.0, %v3104
  %v3106 = vpop.f32.mrf.mxu0
  %v3107 = vadd.f32 0.0, %v3106
  %3108 = vmatmul.bf16.gmra.mxu0 %v2471
  %v3109 = vpop.f32.mrf.mxu0
  %v3110 = vadd.f32 0.0, %v3109
  %v3111 = vpop.f32.mrf.mxu0
  %v3112 = vadd.f32 0.0, %v3111
  %3113 = vmatmul.bf16.gmra.mxu0 %v2474
  %v3114 = vpop.f32.mrf.mxu0
  %v3115 = vadd.f32 0.0, %v3114
  %v3116 = vpop.f32.mrf.mxu0
  %v3117 = vadd.f32 0.0, %v3116
  %3118 = vmatmul.bf16.gmra.mxu0 %v2477
  %v3119 = vpop.f32.mrf.mxu0
  %v3120 = vadd.f32 0.0, %v3119
  %v3121 = vpop.f32.mrf.mxu0
  %v3122 = vadd.f32 0.0, %v3121
  %3123 = vdwg.mxu0
  %3124 = vmatpush.bf16.msra.mxu0 0
  %3125 = vmatpush.bf16.msra.mxu0 0
  %3126 = vmatpush.bf16.msra.mxu0 0
  %3127 = vmatpush.bf16.msra.mxu0 0
  %3128 = vmatpush.bf16.msra.mxu0 0
  %3129 = vmatpush.bf16.msra.mxu0 0
  %3130 = vmatpush.bf16.msra.mxu0 %v3008
  %3131 = vmatpush.bf16.msra.mxu0 %v3007
  %3132 = vmatmul.bf16.gmra.mxu0 %v2529
  %v3133 = vpop.f32.mrf.mxu0
  %v3134 = vadd.f32 %v3105, %v3133
  %v3135 = vpop.f32.mrf.mxu0
  %v3136 = vadd.f32 %v3107, %v3135
  %3137 = vmatmul.bf16.gmra.mxu0 %v2532
  %v3138 = vpop.f32.mrf.mxu0
  %v3139 = vadd.f32 %v3110, %v3138
  %v3140 = vpop.f32.mrf.mxu0
  %v3141 = vadd.f32 %v3112, %v3140
  %3142 = vmatmul.bf16.gmra.mxu0 %v2535
  %v3143 = vpop.f32.mrf.mxu0
  %v3144 = vadd.f32 %v3115, %v3143
  %v3145 = vpop.f32.mrf.mxu0
  %v3146 = vadd.f32 %v3117, %v3145
  %3147 = vmatmul.bf16.gmra.mxu0 %v2538
  %v3148 = vpop.f32.mrf.mxu0
  %v3149 = vadd.f32 %v3120, %v3148
  %v3150 = vpop.f32.mrf.mxu0
  %v3151 = vadd.f32 %v3122, %v3150
  %3152 = vdwg.mxu0
  %s3153 = scalar_lea.vmem %s2, 384
  %v3154 = vld [vmem:[%s3153] sm:$0xf]
  %v3155 = vld [vmem:[%s3153 + $0x4] sm:$0xf]
  %v3156 = vld [vmem:[%s3153 + $0x8] sm:$0xf]
  %v3157 = vld [vmem:[%s3153 + $0xc] sm:$0xf]
  %v3158 = vld [vmem:[%s3153 + $0x10] sm:$0xf]
  %v3159 = vld [vmem:[%s3153 + $0x14] sm:$0xf]
  %v3160 = vld [vmem:[%s3153 + $0x18] sm:$0xf]
  %v3161 = vld [vmem:[%s3153 + $0x1c] sm:$0xf]
  %v3162 = vld [vmem:[%s3153 + $0x20] sm:$0xf]
  %v3163 = vld [vmem:[%s3153 + $0x24] sm:$0xf]
  %v3164 = vld [vmem:[%s3153 + $0x28] sm:$0xf]
  %v3165 = vld [vmem:[%s3153 + $0x2c] sm:$0xf]
  %v3166 = vld [vmem:[%s3153 + $0x30] sm:$0xf]
  %v3167 = vld [vmem:[%s3153 + $0x34] sm:$0xf]
  %v3168 = vld [vmem:[%s3153 + $0x38] sm:$0xf]
  %v3169 = vld [vmem:[%s3153 + $0x3c] sm:$0xf]
  %v3186 = vunpack.c.l.b16 %v3154
  %v3187 = vunpack.c.l.b16 %v3155
  %v3188 = vunpack.c.l.b16 %v3156
  %v3189 = vunpack.c.l.b16 %v3157
  %v3190 = vunpack.c.l.b16 %v3158
  %v3191 = vunpack.c.l.b16 %v3159
  %v3192 = vunpack.c.l.b16 %v3160
  %v3193 = vunpack.c.l.b16 %v3161
  %v3194 = vunpack.c.l.b16 %v3162
  %v3195 = vunpack.c.l.b16 %v3163
  %v3196 = vunpack.c.l.b16 %v3164
  %v3197 = vunpack.c.l.b16 %v3165
  %v3198 = vunpack.c.l.b16 %v3166
  %v3199 = vunpack.c.l.b16 %v3167
  %v3200 = vunpack.c.l.b16 %v3168
  %v3201 = vunpack.c.l.b16 %v3169
  %v3202 = vpack.c.b16 %v3187, %v3186
  %v3203 = vpack.c.b16 %v3189, %v3188
  %v3204 = vpack.c.b16 %v3191, %v3190
  %v3205 = vpack.c.b16 %v3193, %v3192
  %v3206 = vpack.c.b16 %v3195, %v3194
  %v3207 = vpack.c.b16 %v3197, %v3196
  %v3208 = vpack.c.b16 %v3199, %v3198
  %v3209 = vpack.c.b16 %v3201, %v3200
  %3218 = vmatpush.bf16.msra.mxu0 %v3209
  %3219 = vmatpush.bf16.msra.mxu0 %v3208
  %3220 = vmatpush.bf16.msra.mxu0 %v3207
  %3221 = vmatpush.bf16.msra.mxu0 %v3206
  %3222 = vmatpush.bf16.msra.mxu0 %v3205
  %3223 = vmatpush.bf16.msra.mxu0 %v3204
  %3224 = vmatpush.bf16.msra.mxu0 %v3203
  %3225 = vmatpush.bf16.msra.mxu0 %v3202
  %3226 = vmatmul.bf16.gmra.mxu0 %v129
  %v3227 = vpop.f32.mrf.mxu0
  %v3228 = vadd.f32 %v104, %v3227
  %v3229 = vpop.f32.mrf.mxu0
  %v3230 = vadd.f32 %v109, %v3229
  %3231 = vmatmul.bf16.gmra.mxu0 %v130
  %v3232 = vpop.f32.mrf.mxu0
  %v3233 = vadd.f32 %v114, %v3232
  %v3234 = vpop.f32.mrf.mxu0
  %v3235 = vadd.f32 %v119, %v3234
  %3236 = vdwg.mxu0
  %v3237 = vpack.c.bf16 %v3230, %v3228
  %v3238 = vpack.c.bf16 %v3235, %v3233
  %3239 = vmatpush.bf16.msra.mxu0 0
  %3240 = vmatpush.bf16.msra.mxu0 0
  %3241 = vmatpush.bf16.msra.mxu0 0
  %3242 = vmatpush.bf16.msra.mxu0 0
  %3243 = vmatpush.bf16.msra.mxu0 0
  %3244 = vmatpush.bf16.msra.mxu0 0
  %3245 = vmatpush.bf16.msra.mxu0 %v3238
  %3246 = vmatpush.bf16.msra.mxu0 %v3237
  %3247 = vmatmul.bf16.gmra.mxu0 %v2684
  %v3248 = vpop.f32.mrf.mxu0
  %v3249 = vadd.f32 0.0, %v3248
  %v3250 = vpop.f32.mrf.mxu0
  %v3251 = vadd.f32 0.0, %v3250
  %3252 = vmatmul.bf16.gmra.mxu0 %v2687
  %v3253 = vpop.f32.mrf.mxu0
  %v3254 = vadd.f32 0.0, %v3253
  %v3255 = vpop.f32.mrf.mxu0
  %v3256 = vadd.f32 0.0, %v3255
  %3257 = vmatmul.bf16.gmra.mxu0 %v2690
  %v3258 = vpop.f32.mrf.mxu0
  %v3259 = vadd.f32 0.0, %v3258
  %v3260 = vpop.f32.mrf.mxu0
  %v3261 = vadd.f32 0.0, %v3260
  %3262 = vmatmul.bf16.gmra.mxu0 %v2693
  %v3263 = vpop.f32.mrf.mxu0
  %v3264 = vadd.f32 0.0, %v3263
  %v3265 = vpop.f32.mrf.mxu0
  %v3266 = vadd.f32 0.0, %v3265
  %3267 = vdwg.mxu0
  %v3268 = vadd.f32 %v3134, %v3249
  %v3269 = vadd.f32 %v3136, %v3251
  %v3270 = vadd.f32 %v3139, %v3254
  %v3271 = vadd.f32 %v3141, %v3256
  %v3272 = vadd.f32 %v3144, %v3259
  %v3273 = vadd.f32 %v3146, %v3261
  %v3274 = vadd.f32 %v3149, %v3264
  %v3275 = vadd.f32 %v3151, %v3266
  %s3276 = scalar_lea.vmem %s2, 448
  %v3277 = vld [vmem:[%s3276] sm:$0xf]
  %v3278 = vld [vmem:[%s3276 + $0x4] sm:$0xf]
  %v3279 = vld [vmem:[%s3276 + $0x8] sm:$0xf]
  %v3280 = vld [vmem:[%s3276 + $0xc] sm:$0xf]
  %v3281 = vld [vmem:[%s3276 + $0x10] sm:$0xf]
  %v3282 = vld [vmem:[%s3276 + $0x14] sm:$0xf]
  %v3283 = vld [vmem:[%s3276 + $0x18] sm:$0xf]
  %v3284 = vld [vmem:[%s3276 + $0x1c] sm:$0xf]
  %v3285 = vld [vmem:[%s3276 + $0x20] sm:$0xf]
  %v3286 = vld [vmem:[%s3276 + $0x24] sm:$0xf]
  %v3287 = vld [vmem:[%s3276 + $0x28] sm:$0xf]
  %v3288 = vld [vmem:[%s3276 + $0x2c] sm:$0xf]
  %v3289 = vld [vmem:[%s3276 + $0x30] sm:$0xf]
  %v3290 = vld [vmem:[%s3276 + $0x34] sm:$0xf]
  %v3291 = vld [vmem:[%s3276 + $0x38] sm:$0xf]
  %v3292 = vld [vmem:[%s3276 + $0x3c] sm:$0xf]
  %v3309 = vunpack.c.l.b16 %v3277
  %v3310 = vunpack.c.l.b16 %v3278
  %v3311 = vunpack.c.l.b16 %v3279
  %v3312 = vunpack.c.l.b16 %v3280
  %v3313 = vunpack.c.l.b16 %v3281
  %v3314 = vunpack.c.l.b16 %v3282
  %v3315 = vunpack.c.l.b16 %v3283
  %v3316 = vunpack.c.l.b16 %v3284
  %v3317 = vunpack.c.l.b16 %v3285
  %v3318 = vunpack.c.l.b16 %v3286
  %v3319 = vunpack.c.l.b16 %v3287
  %v3320 = vunpack.c.l.b16 %v3288
  %v3321 = vunpack.c.l.b16 %v3289
  %v3322 = vunpack.c.l.b16 %v3290
  %v3323 = vunpack.c.l.b16 %v3291
  %v3324 = vunpack.c.l.b16 %v3292
  %v3325 = vpack.c.b16 %v3310, %v3309
  %v3326 = vpack.c.b16 %v3312, %v3311
  %v3327 = vpack.c.b16 %v3314, %v3313
  %v3328 = vpack.c.b16 %v3316, %v3315
  %v3329 = vpack.c.b16 %v3318, %v3317
  %v3330 = vpack.c.b16 %v3320, %v3319
  %v3331 = vpack.c.b16 %v3322, %v3321
  %v3332 = vpack.c.b16 %v3324, %v3323
  %3341 = vmatpush.bf16.msra.mxu0 %v3332
  %3342 = vmatpush.bf16.msra.mxu0 %v3331
  %3343 = vmatpush.bf16.msra.mxu0 %v3330
  %3344 = vmatpush.bf16.msra.mxu0 %v3329
  %3345 = vmatpush.bf16.msra.mxu0 %v3328
  %3346 = vmatpush.bf16.msra.mxu0 %v3327
  %3347 = vmatpush.bf16.msra.mxu0 %v3326
  %3348 = vmatpush.bf16.msra.mxu0 %v3325
  %3349 = vmatmul.bf16.gmra.mxu0 %v129
  %v3350 = vpop.f32.mrf.mxu0
  %v3351 = vadd.f32 %v104, %v3350
  %v3352 = vpop.f32.mrf.mxu0
  %v3353 = vadd.f32 %v109, %v3352
  %3354 = vmatmul.bf16.gmra.mxu0 %v130
  %v3355 = vpop.f32.mrf.mxu0
  %v3356 = vadd.f32 %v114, %v3355
  %v3357 = vpop.f32.mrf.mxu0
  %v3358 = vadd.f32 %v119, %v3357
  %3359 = vdwg.mxu0
  %v3360 = vpack.c.bf16 %v3353, %v3351
  %v3361 = vpack.c.bf16 %v3358, %v3356
  %3362 = vmatpush.bf16.msra.mxu0 0
  %3363 = vmatpush.bf16.msra.mxu0 0
  %3364 = vmatpush.bf16.msra.mxu0 0
  %3365 = vmatpush.bf16.msra.mxu0 0
  %3366 = vmatpush.bf16.msra.mxu0 0
  %3367 = vmatpush.bf16.msra.mxu0 0
  %3368 = vmatpush.bf16.msra.mxu0 %v3361
  %3369 = vmatpush.bf16.msra.mxu0 %v3360
  %3370 = vmatmul.bf16.gmra.mxu0 %v2847
  %v3371 = vpop.f32.mrf.mxu0
  %v3372 = vadd.f32 0.0, %v3371
  %v3373 = vpop.f32.mrf.mxu0
  %v3374 = vadd.f32 0.0, %v3373
  %3375 = vmatmul.bf16.gmra.mxu0 %v2850
  %v3376 = vpop.f32.mrf.mxu0
  %v3377 = vadd.f32 0.0, %v3376
  %v3378 = vpop.f32.mrf.mxu0
  %v3379 = vadd.f32 0.0, %v3378
  %3380 = vmatmul.bf16.gmra.mxu0 %v2853
  %v3381 = vpop.f32.mrf.mxu0
  %v3382 = vadd.f32 0.0, %v3381
  %v3383 = vpop.f32.mrf.mxu0
  %v3384 = vadd.f32 0.0, %v3383
  %3385 = vmatmul.bf16.gmra.mxu0 %v2856
  %v3386 = vpop.f32.mrf.mxu0
  %v3387 = vadd.f32 0.0, %v3386
  %v3388 = vpop.f32.mrf.mxu0
  %v3389 = vadd.f32 0.0, %v3388
  %3390 = vdwg.mxu0
  %v3391 = vadd.f32 %v3268, %v3372
  %v3392 = vadd.f32 %v3269, %v3374
  %v3393 = vadd.f32 %v3270, %v3377
  %v3394 = vadd.f32 %v3271, %v3379
  %v3395 = vadd.f32 %v3272, %v3382
  %v3396 = vadd.f32 %v3273, %v3384
  %v3397 = vadd.f32 %v3274, %v3387
  %v3398 = vadd.f32 %v3275, %v3389
  %v3399 = vadd.f32 %v3391, %v1591
  %v3400 = vadd.f32 %v3392, %v1596
  %v3401 = vadd.f32 %v3393, %v1601
  %v3402 = vadd.f32 %v3394, %v1606
  %v3403 = vadd.f32 %v3395, %v1611
  %v3404 = vadd.f32 %v3396, %v1616
  %v3405 = vadd.f32 %v3397, %v1621
  %v3406 = vadd.f32 %v3398, %v1626
  %s3407 = scalar_lea.vmem %s7, 64
  %v3408 = vld [vmem:[%s3407] sm:$0xf]
  %v3409 = vld [vmem:[%s3407 + $0x4] sm:$0xf]
  %v3410 = vld [vmem:[%s3407 + $0x8] sm:$0xf]
  %v3411 = vld [vmem:[%s3407 + $0xc] sm:$0xf]
  %v3412 = vld [vmem:[%s3407 + $0x10] sm:$0xf]
  %v3413 = vld [vmem:[%s3407 + $0x14] sm:$0xf]
  %v3414 = vld [vmem:[%s3407 + $0x18] sm:$0xf]
  %v3415 = vld [vmem:[%s3407 + $0x1c] sm:$0xf]
  %v3416 = vld [vmem:[%s3407 + $0x20] sm:$0xf]
  %v3417 = vld [vmem:[%s3407 + $0x24] sm:$0xf]
  %v3418 = vld [vmem:[%s3407 + $0x28] sm:$0xf]
  %v3419 = vld [vmem:[%s3407 + $0x2c] sm:$0xf]
  %v3420 = vld [vmem:[%s3407 + $0x30] sm:$0xf]
  %v3421 = vld [vmem:[%s3407 + $0x34] sm:$0xf]
  %v3422 = vld [vmem:[%s3407 + $0x38] sm:$0xf]
  %v3423 = vld [vmem:[%s3407 + $0x3c] sm:$0xf]
  %v3424 = vpack.c.bf16 %v3400, %v3399
  %v3425 = vpack.c.bf16 %v3402, %v3401
  %v3426 = vpack.c.bf16 %v3404, %v3403
  %v3427 = vpack.c.bf16 %v3406, %v3405
  %v3444 = vunpack.c.l.b16 %v3408
  %v3445 = vunpack.c.l.b16 %v3409
  %v3446 = vunpack.c.l.b16 %v3410
  %v3447 = vunpack.c.l.b16 %v3411
  %v3448 = vunpack.c.l.b16 %v3412
  %v3449 = vunpack.c.l.b16 %v3413
  %v3450 = vunpack.c.l.b16 %v3414
  %v3451 = vunpack.c.l.b16 %v3415
  %v3452 = vunpack.c.l.b16 %v3416
  %v3453 = vunpack.c.l.b16 %v3417
  %v3454 = vunpack.c.l.b16 %v3418
  %v3455 = vunpack.c.l.b16 %v3419
  %v3456 = vunpack.c.l.b16 %v3420
  %v3457 = vunpack.c.l.b16 %v3421
  %v3458 = vunpack.c.l.b16 %v3422
  %v3459 = vunpack.c.l.b16 %v3423
  %v3460 = vpack.c.b16 %v3445, %v3444
  %v3461 = vpack.c.b16 %v3447, %v3446
  %v3462 = vpack.c.b16 %v3449, %v3448
  %v3463 = vpack.c.b16 %v3451, %v3450
  %v3464 = vpack.c.b16 %v3453, %v3452
  %v3465 = vpack.c.b16 %v3455, %v3454
  %v3466 = vpack.c.b16 %v3457, %v3456
  %v3467 = vpack.c.b16 %v3459, %v3458
  %v3469 = vsel %vm1944, %v3460, 0
  %v3472 = vsel %vm1944, %v3461, 0
  %v3475 = vsel %vm1944, %v3462, 0
  %v3478 = vsel %vm1944, %v3463, 0
  %v3481 = vsel %vm1944, %v3464, 0
  %v3484 = vsel %vm1944, %v3465, 0
  %v3487 = vsel %vm1944, %v3466, 0
  %v3490 = vsel %vm1944, %v3467, 0
  %3492 = vmatpush.bf16.msra.mxu0 0
  %3493 = vmatpush.bf16.msra.mxu0 0
  %3494 = vmatpush.bf16.msra.mxu0 0
  %3495 = vmatpush.bf16.msra.mxu0 0
  %3496 = vmatpush.bf16.msra.mxu0 %v3427
  %3497 = vmatpush.bf16.msra.mxu0 %v3426
  %3498 = vmatpush.bf16.msra.mxu0 %v3425
  %3499 = vmatpush.bf16.msra.mxu0 %v3424
  %3500 = vmatmul.bf16.gmra.mxu0 %v3469
  %v3501 = vpop.f32.mrf.mxu0
  %v3502 = vadd.f32 0.0, %v3501
  %v3503 = vpop.f32.mrf.mxu0
  %v3504 = vadd.f32 0.0, %v3503
  %3505 = vmatmul.bf16.gmra.mxu0 %v3472
  %v3506 = vpop.f32.mrf.mxu0
  %v3507 = vadd.f32 0.0, %v3506
  %v3508 = vpop.f32.mrf.mxu0
  %v3509 = vadd.f32 0.0, %v3508
  %3510 = vmatmul.bf16.gmra.mxu0 %v3475
  %v3511 = vpop.f32.mrf.mxu0
  %v3512 = vadd.f32 0.0, %v3511
  %v3513 = vpop.f32.mrf.mxu0
  %v3514 = vadd.f32 0.0, %v3513
  %3515 = vmatmul.bf16.gmra.mxu0 %v3478
  %v3516 = vpop.f32.mrf.mxu0
  %v3517 = vadd.f32 0.0, %v3516
  %v3518 = vpop.f32.mrf.mxu0
  %v3519 = vadd.f32 0.0, %v3518
  %3520 = vmatmul.bf16.gmra.mxu0 %v3481
  %v3521 = vpop.f32.mrf.mxu0
  %v3522 = vadd.f32 0.0, %v3521
  %v3523 = vpop.f32.mrf.mxu0
  %v3524 = vadd.f32 0.0, %v3523
  %3525 = vmatmul.bf16.gmra.mxu0 %v3484
  %v3526 = vpop.f32.mrf.mxu0
  %v3527 = vadd.f32 0.0, %v3526
  %v3528 = vpop.f32.mrf.mxu0
  %v3529 = vadd.f32 0.0, %v3528
  %3530 = vmatmul.bf16.gmra.mxu0 %v3487
  %v3531 = vpop.f32.mrf.mxu0
  %v3532 = vadd.f32 0.0, %v3531
  %v3533 = vpop.f32.mrf.mxu0
  %v3534 = vadd.f32 0.0, %v3533
  %3535 = vmatmul.bf16.gmra.mxu0 %v3490
  %v3536 = vpop.f32.mrf.mxu0
  %v3537 = vadd.f32 0.0, %v3536
  %v3538 = vpop.f32.mrf.mxu0
  %v3539 = vadd.f32 0.0, %v3538
  %3540 = vdwg.mxu0
  %v3557 = vunpack.c.l.b16 %v2903
  %v3558 = vunpack.c.l.b16 %v2904
  %v3559 = vunpack.c.l.b16 %v2905
  %v3560 = vunpack.c.l.b16 %v2906
  %v3561 = vunpack.c.l.b16 %v2907
  %v3562 = vunpack.c.l.b16 %v2908
  %v3563 = vunpack.c.l.b16 %v2909
  %v3564 = vunpack.c.l.b16 %v2910
  %v3565 = vunpack.c.l.b16 %v2911
  %v3566 = vunpack.c.l.b16 %v2912
  %v3567 = vunpack.c.l.b16 %v2913
  %v3568 = vunpack.c.l.b16 %v2914
  %v3569 = vunpack.c.l.b16 %v2915
  %v3570 = vunpack.c.l.b16 %v2916
  %v3571 = vunpack.c.l.b16 %v2917
  %v3572 = vunpack.c.l.b16 %v2918
  %v3573 = vpack.c.b16 %v3558, %v3557
  %v3574 = vpack.c.b16 %v3560, %v3559
  %v3575 = vpack.c.b16 %v3562, %v3561
  %v3576 = vpack.c.b16 %v3564, %v3563
  %v3577 = vpack.c.b16 %v3566, %v3565
  %v3578 = vpack.c.b16 %v3568, %v3567
  %v3579 = vpack.c.b16 %v3570, %v3569
  %v3580 = vpack.c.b16 %v3572, %v3571
  %v3582 = vsel %vm1944, %v3573, 0
  %v3585 = vsel %vm1944, %v3574, 0
  %v3588 = vsel %vm1944, %v3575, 0
  %v3591 = vsel %vm1944, %v3576, 0
  %v3594 = vsel %vm1944, %v3577, 0
  %v3597 = vsel %vm1944, %v3578, 0
  %v3600 = vsel %vm1944, %v3579, 0
  %v3603 = vsel %vm1944, %v3580, 0
  %3605 = vmatpush.bf16.msra.mxu0 0
  %3606 = vmatpush.bf16.msra.mxu0 0
  %3607 = vmatpush.bf16.msra.mxu0 0
  %3608 = vmatpush.bf16.msra.mxu0 0
  %3609 = vmatpush.bf16.msra.mxu0 %v2922
  %3610 = vmatpush.bf16.msra.mxu0 %v2921
  %3611 = vmatpush.bf16.msra.mxu0 %v2920
  %3612 = vmatpush.bf16.msra.mxu0 %v2919
  %3613 = vmatmul.bf16.gmra.mxu0 %v3582
  %v3614 = vpop.f32.mrf.mxu0
  %v3615 = vadd.f32 %v3502, %v3614
  %v3616 = vpop.f32.mrf.mxu0
  %v3617 = vadd.f32 %v3504, %v3616
  %3618 = vmatmul.bf16.gmra.mxu0 %v3585
  %v3619 = vpop.f32.mrf.mxu0
  %v3620 = vadd.f32 %v3507, %v3619
  %v3621 = vpop.f32.mrf.mxu0
  %v3622 = vadd.f32 %v3509, %v3621
  %3623 = vmatmul.bf16.gmra.mxu0 %v3588
  %v3624 = vpop.f32.mrf.mxu0
  %v3625 = vadd.f32 %v3512, %v3624
  %v3626 = vpop.f32.mrf.mxu0
  %v3627 = vadd.f32 %v3514, %v3626
  %3628 = vmatmul.bf16.gmra.mxu0 %v3591
  %v3629 = vpop.f32.mrf.mxu0
  %v3630 = vadd.f32 %v3517, %v3629
  %v3631 = vpop.f32.mrf.mxu0
  %v3632 = vadd.f32 %v3519, %v3631
  %3633 = vmatmul.bf16.gmra.mxu0 %v3594
  %v3634 = vpop.f32.mrf.mxu0
  %v3635 = vadd.f32 %v3522, %v3634
  %v3636 = vpop.f32.mrf.mxu0
  %v3637 = vadd.f32 %v3524, %v3636
  %3638 = vmatmul.bf16.gmra.mxu0 %v3597
  %v3639 = vpop.f32.mrf.mxu0
  %v3640 = vadd.f32 %v3527, %v3639
  %v3641 = vpop.f32.mrf.mxu0
  %v3642 = vadd.f32 %v3529, %v3641
  %3643 = vmatmul.bf16.gmra.mxu0 %v3600
  %v3644 = vpop.f32.mrf.mxu0
  %v3645 = vadd.f32 %v3532, %v3644
  %v3646 = vpop.f32.mrf.mxu0
  %v3647 = vadd.f32 %v3534, %v3646
  %3648 = vmatmul.bf16.gmra.mxu0 %v3603
  %v3649 = vpop.f32.mrf.mxu0
  %v3650 = vadd.f32 %v3537, %v3649
  %v3651 = vpop.f32.mrf.mxu0
  %v3652 = vadd.f32 %v3539, %v3651
  %3653 = vdwg.mxu0
  %s3654 = scalar_lea.vmem %s2, 512
  %v3655 = vld [vmem:[%s3654] sm:$0xf]
  %v3656 = vld [vmem:[%s3654 + $0x4] sm:$0xf]
  %v3657 = vld [vmem:[%s3654 + $0x8] sm:$0xf]
  %v3658 = vld [vmem:[%s3654 + $0xc] sm:$0xf]
  %v3659 = vld [vmem:[%s3654 + $0x10] sm:$0xf]
  %v3660 = vld [vmem:[%s3654 + $0x14] sm:$0xf]
  %v3661 = vld [vmem:[%s3654 + $0x18] sm:$0xf]
  %v3662 = vld [vmem:[%s3654 + $0x1c] sm:$0xf]
  %v3663 = vld [vmem:[%s3654 + $0x20] sm:$0xf]
  %v3664 = vld [vmem:[%s3654 + $0x24] sm:$0xf]
  %v3665 = vld [vmem:[%s3654 + $0x28] sm:$0xf]
  %v3666 = vld [vmem:[%s3654 + $0x2c] sm:$0xf]
  %v3667 = vld [vmem:[%s3654 + $0x30] sm:$0xf]
  %v3668 = vld [vmem:[%s3654 + $0x34] sm:$0xf]
  %v3669 = vld [vmem:[%s3654 + $0x38] sm:$0xf]
  %v3670 = vld [vmem:[%s3654 + $0x3c] sm:$0xf]
  %v3687 = vunpack.c.l.b16 %v3655
  %v3688 = vunpack.c.l.b16 %v3656
  %v3689 = vunpack.c.l.b16 %v3657
  %v3690 = vunpack.c.l.b16 %v3658
  %v3691 = vunpack.c.l.b16 %v3659
  %v3692 = vunpack.c.l.b16 %v3660
  %v3693 = vunpack.c.l.b16 %v3661
  %v3694 = vunpack.c.l.b16 %v3662
  %v3695 = vunpack.c.l.b16 %v3663
  %v3696 = vunpack.c.l.b16 %v3664
  %v3697 = vunpack.c.l.b16 %v3665
  %v3698 = vunpack.c.l.b16 %v3666
  %v3699 = vunpack.c.l.b16 %v3667
  %v3700 = vunpack.c.l.b16 %v3668
  %v3701 = vunpack.c.l.b16 %v3669
  %v3702 = vunpack.c.l.b16 %v3670
  %v3703 = vpack.c.b16 %v3688, %v3687
  %v3704 = vpack.c.b16 %v3690, %v3689
  %v3705 = vpack.c.b16 %v3692, %v3691
  %v3706 = vpack.c.b16 %v3694, %v3693
  %v3707 = vpack.c.b16 %v3696, %v3695
  %v3708 = vpack.c.b16 %v3698, %v3697
  %v3709 = vpack.c.b16 %v3700, %v3699
  %v3710 = vpack.c.b16 %v3702, %v3701
  %3719 = vmatpush.bf16.msra.mxu0 %v3710
  %3720 = vmatpush.bf16.msra.mxu0 %v3709
  %3721 = vmatpush.bf16.msra.mxu0 %v3708
  %3722 = vmatpush.bf16.msra.mxu0 %v3707
  %3723 = vmatpush.bf16.msra.mxu0 %v3706
  %3724 = vmatpush.bf16.msra.mxu0 %v3705
  %3725 = vmatpush.bf16.msra.mxu0 %v3704
  %3726 = vmatpush.bf16.msra.mxu0 %v3703
  %3727 = vmatmul.bf16.gmra.mxu0 %v129
  %v3728 = vpop.f32.mrf.mxu0
  %v3729 = vadd.f32 %v104, %v3728
  %v3730 = vpop.f32.mrf.mxu0
  %v3731 = vadd.f32 %v109, %v3730
  %3732 = vmatmul.bf16.gmra.mxu0 %v130
  %v3733 = vpop.f32.mrf.mxu0
  %v3734 = vadd.f32 %v114, %v3733
  %v3735 = vpop.f32.mrf.mxu0
  %v3736 = vadd.f32 %v119, %v3735
  %3737 = vdwg.mxu0
  %v3738 = vpack.c.bf16 %v3731, %v3729
  %v3739 = vpack.c.bf16 %v3736, %v3734
  %s3740 = scalar_lea.vmem %s2, 576
  %v3741 = vld [vmem:[%s3740] sm:$0xf]
  %v3742 = vld [vmem:[%s3740 + $0x4] sm:$0xf]
  %v3743 = vld [vmem:[%s3740 + $0x8] sm:$0xf]
  %v3744 = vld [vmem:[%s3740 + $0xc] sm:$0xf]
  %v3745 = vld [vmem:[%s3740 + $0x10] sm:$0xf]
  %v3746 = vld [vmem:[%s3740 + $0x14] sm:$0xf]
  %v3747 = vld [vmem:[%s3740 + $0x18] sm:$0xf]
  %v3748 = vld [vmem:[%s3740 + $0x1c] sm:$0xf]
  %v3749 = vld [vmem:[%s3740 + $0x20] sm:$0xf]
  %v3750 = vld [vmem:[%s3740 + $0x24] sm:$0xf]
  %v3751 = vld [vmem:[%s3740 + $0x28] sm:$0xf]
  %v3752 = vld [vmem:[%s3740 + $0x2c] sm:$0xf]
  %v3753 = vld [vmem:[%s3740 + $0x30] sm:$0xf]
  %v3754 = vld [vmem:[%s3740 + $0x34] sm:$0xf]
  %v3755 = vld [vmem:[%s3740 + $0x38] sm:$0xf]
  %v3756 = vld [vmem:[%s3740 + $0x3c] sm:$0xf]
  %v3773 = vunpack.c.l.b16 %v3741
  %v3774 = vunpack.c.l.b16 %v3742
  %v3775 = vunpack.c.l.b16 %v3743
  %v3776 = vunpack.c.l.b16 %v3744
  %v3777 = vunpack.c.l.b16 %v3745
  %v3778 = vunpack.c.l.b16 %v3746
  %v3779 = vunpack.c.l.b16 %v3747
  %v3780 = vunpack.c.l.b16 %v3748
  %v3781 = vunpack.c.l.b16 %v3749
  %v3782 = vunpack.c.l.b16 %v3750
  %v3783 = vunpack.c.l.b16 %v3751
  %v3784 = vunpack.c.l.b16 %v3752
  %v3785 = vunpack.c.l.b16 %v3753
  %v3786 = vunpack.c.l.b16 %v3754
  %v3787 = vunpack.c.l.b16 %v3755
  %v3788 = vunpack.c.l.b16 %v3756
  %v3789 = vpack.c.b16 %v3774, %v3773
  %v3790 = vpack.c.b16 %v3776, %v3775
  %v3791 = vpack.c.b16 %v3778, %v3777
  %v3792 = vpack.c.b16 %v3780, %v3779
  %v3793 = vpack.c.b16 %v3782, %v3781
  %v3794 = vpack.c.b16 %v3784, %v3783
  %v3795 = vpack.c.b16 %v3786, %v3785
  %v3796 = vpack.c.b16 %v3788, %v3787
  %3805 = vmatpush.bf16.msra.mxu0 %v3796
  %3806 = vmatpush.bf16.msra.mxu0 %v3795
  %3807 = vmatpush.bf16.msra.mxu0 %v3794
  %3808 = vmatpush.bf16.msra.mxu0 %v3793
  %3809 = vmatpush.bf16.msra.mxu0 %v3792
  %3810 = vmatpush.bf16.msra.mxu0 %v3791
  %3811 = vmatpush.bf16.msra.mxu0 %v3790
  %3812 = vmatpush.bf16.msra.mxu0 %v3789
  %3813 = vmatmul.bf16.gmra.mxu0 %v129
  %v3814 = vpop.f32.mrf.mxu0
  %v3815 = vadd.f32 %v104, %v3814
  %v3816 = vpop.f32.mrf.mxu0
  %v3817 = vadd.f32 %v109, %v3816
  %3818 = vmatmul.bf16.gmra.mxu0 %v130
  %v3819 = vpop.f32.mrf.mxu0
  %v3820 = vadd.f32 %v114, %v3819
  %v3821 = vpop.f32.mrf.mxu0
  %v3822 = vadd.f32 %v119, %v3821
  %3823 = vdwg.mxu0
  %v3824 = vpack.c.bf16 %v3817, %v3815
  %v3825 = vpack.c.bf16 %v3822, %v3820
  %3826 = vmatpush.bf16.msra.mxu0 0
  %3827 = vmatpush.bf16.msra.mxu0 0
  %3828 = vmatpush.bf16.msra.mxu0 0
  %3829 = vmatpush.bf16.msra.mxu0 0
  %3830 = vmatpush.bf16.msra.mxu0 0
  %3831 = vmatpush.bf16.msra.mxu0 0
  %3832 = vmatpush.bf16.msra.mxu0 %v3825
  %3833 = vmatpush.bf16.msra.mxu0 %v3824
  %3834 = vmatmul.bf16.gmra.mxu0 %v2468
  %v3835 = vpop.f32.mrf.mxu0
  %v3836 = vadd.f32 0.0, %v3835
  %v3837 = vpop.f32.mrf.mxu0
  %v3838 = vadd.f32 0.0, %v3837
  %3839 = vmatmul.bf16.gmra.mxu0 %v2471
  %v3840 = vpop.f32.mrf.mxu0
  %v3841 = vadd.f32 0.0, %v3840
  %v3842 = vpop.f32.mrf.mxu0
  %v3843 = vadd.f32 0.0, %v3842
  %3844 = vmatmul.bf16.gmra.mxu0 %v2474
  %v3845 = vpop.f32.mrf.mxu0
  %v3846 = vadd.f32 0.0, %v3845
  %v3847 = vpop.f32.mrf.mxu0
  %v3848 = vadd.f32 0.0, %v3847
  %3849 = vmatmul.bf16.gmra.mxu0 %v2477
  %v3850 = vpop.f32.mrf.mxu0
  %v3851 = vadd.f32 0.0, %v3850
  %v3852 = vpop.f32.mrf.mxu0
  %v3853 = vadd.f32 0.0, %v3852
  %3854 = vdwg.mxu0
  %3855 = vmatpush.bf16.msra.mxu0 0
  %3856 = vmatpush.bf16.msra.mxu0 0
  %3857 = vmatpush.bf16.msra.mxu0 0
  %3858 = vmatpush.bf16.msra.mxu0 0
  %3859 = vmatpush.bf16.msra.mxu0 0
  %3860 = vmatpush.bf16.msra.mxu0 0
  %3861 = vmatpush.bf16.msra.mxu0 %v3739
  %3862 = vmatpush.bf16.msra.mxu0 %v3738
  %3863 = vmatmul.bf16.gmra.mxu0 %v2529
  %v3864 = vpop.f32.mrf.mxu0
  %v3865 = vadd.f32 %v3836, %v3864
  %v3866 = vpop.f32.mrf.mxu0
  %v3867 = vadd.f32 %v3838, %v3866
  %3868 = vmatmul.bf16.gmra.mxu0 %v2532
  %v3869 = vpop.f32.mrf.mxu0
  %v3870 = vadd.f32 %v3841, %v3869
  %v3871 = vpop.f32.mrf.mxu0
  %v3872 = vadd.f32 %v3843, %v3871
  %3873 = vmatmul.bf16.gmra.mxu0 %v2535
  %v3874 = vpop.f32.mrf.mxu0
  %v3875 = vadd.f32 %v3846, %v3874
  %v3876 = vpop.f32.mrf.mxu0
  %v3877 = vadd.f32 %v3848, %v3876
  %3878 = vmatmul.bf16.gmra.mxu0 %v2538
  %v3879 = vpop.f32.mrf.mxu0
  %v3880 = vadd.f32 %v3851, %v3879
  %v3881 = vpop.f32.mrf.mxu0
  %v3882 = vadd.f32 %v3853, %v3881
  %3883 = vdwg.mxu0
  %s3884 = scalar_lea.vmem %s2, 640
  %v3885 = vld [vmem:[%s3884] sm:$0xf]
  %v3886 = vld [vmem:[%s3884 + $0x4] sm:$0xf]
  %v3887 = vld [vmem:[%s3884 + $0x8] sm:$0xf]
  %v3888 = vld [vmem:[%s3884 + $0xc] sm:$0xf]
  %v3889 = vld [vmem:[%s3884 + $0x10] sm:$0xf]
  %v3890 = vld [vmem:[%s3884 + $0x14] sm:$0xf]
  %v3891 = vld [vmem:[%s3884 + $0x18] sm:$0xf]
  %v3892 = vld [vmem:[%s3884 + $0x1c] sm:$0xf]
  %v3893 = vld [vmem:[%s3884 + $0x20] sm:$0xf]
  %v3894 = vld [vmem:[%s3884 + $0x24] sm:$0xf]
  %v3895 = vld [vmem:[%s3884 + $0x28] sm:$0xf]
  %v3896 = vld [vmem:[%s3884 + $0x2c] sm:$0xf]
  %v3897 = vld [vmem:[%s3884 + $0x30] sm:$0xf]
  %v3898 = vld [vmem:[%s3884 + $0x34] sm:$0xf]
  %v3899 = vld [vmem:[%s3884 + $0x38] sm:$0xf]
  %v3900 = vld [vmem:[%s3884 + $0x3c] sm:$0xf]
  %v3917 = vunpack.c.l.b16 %v3885
  %v3918 = vunpack.c.l.b16 %v3886
  %v3919 = vunpack.c.l.b16 %v3887
  %v3920 = vunpack.c.l.b16 %v3888
  %v3921 = vunpack.c.l.b16 %v3889
  %v3922 = vunpack.c.l.b16 %v3890
  %v3923 = vunpack.c.l.b16 %v3891
  %v3924 = vunpack.c.l.b16 %v3892
  %v3925 = vunpack.c.l.b16 %v3893
  %v3926 = vunpack.c.l.b16 %v3894
  %v3927 = vunpack.c.l.b16 %v3895
  %v3928 = vunpack.c.l.b16 %v3896
  %v3929 = vunpack.c.l.b16 %v3897
  %v3930 = vunpack.c.l.b16 %v3898
  %v3931 = vunpack.c.l.b16 %v3899
  %v3932 = vunpack.c.l.b16 %v3900
  %v3933 = vpack.c.b16 %v3918, %v3917
  %v3934 = vpack.c.b16 %v3920, %v3919
  %v3935 = vpack.c.b16 %v3922, %v3921
  %v3936 = vpack.c.b16 %v3924, %v3923
  %v3937 = vpack.c.b16 %v3926, %v3925
  %v3938 = vpack.c.b16 %v3928, %v3927
  %v3939 = vpack.c.b16 %v3930, %v3929
  %v3940 = vpack.c.b16 %v3932, %v3931
  %3949 = vmatpush.bf16.msra.mxu0 %v3940
  %3950 = vmatpush.bf16.msra.mxu0 %v3939
  %3951 = vmatpush.bf16.msra.mxu0 %v3938
  %3952 = vmatpush.bf16.msra.mxu0 %v3937
  %3953 = vmatpush.bf16.msra.mxu0 %v3936
  %3954 = vmatpush.bf16.msra.mxu0 %v3935
  %3955 = vmatpush.bf16.msra.mxu0 %v3934
  %3956 = vmatpush.bf16.msra.mxu0 %v3933
  %3957 = vmatmul.bf16.gmra.mxu0 %v129
  %v3958 = vpop.f32.mrf.mxu0
  %v3959 = vadd.f32 %v104, %v3958
  %v3960 = vpop.f32.mrf.mxu0
  %v3961 = vadd.f32 %v109, %v3960
  %3962 = vmatmul.bf16.gmra.mxu0 %v130
  %v3963 = vpop.f32.mrf.mxu0
  %v3964 = vadd.f32 %v114, %v3963
  %v3965 = vpop.f32.mrf.mxu0
  %v3966 = vadd.f32 %v119, %v3965
  %3967 = vdwg.mxu0
  %v3968 = vpack.c.bf16 %v3961, %v3959
  %v3969 = vpack.c.bf16 %v3966, %v3964
  %3970 = vmatpush.bf16.msra.mxu0 0
  %3971 = vmatpush.bf16.msra.mxu0 0
  %3972 = vmatpush.bf16.msra.mxu0 0
  %3973 = vmatpush.bf16.msra.mxu0 0
  %3974 = vmatpush.bf16.msra.mxu0 0
  %3975 = vmatpush.bf16.msra.mxu0 0
  %3976 = vmatpush.bf16.msra.mxu0 %v3969
  %3977 = vmatpush.bf16.msra.mxu0 %v3968
  %3978 = vmatmul.bf16.gmra.mxu0 %v2684
  %v3979 = vpop.f32.mrf.mxu0
  %v3980 = vadd.f32 0.0, %v3979
  %v3981 = vpop.f32.mrf.mxu0
  %v3982 = vadd.f32 0.0, %v3981
  %3983 = vmatmul.bf16.gmra.mxu0 %v2687
  %v3984 = vpop.f32.mrf.mxu0
  %v3985 = vadd.f32 0.0, %v3984
  %v3986 = vpop.f32.mrf.mxu0
  %v3987 = vadd.f32 0.0, %v3986
  %3988 = vmatmul.bf16.gmra.mxu0 %v2690
  %v3989 = vpop.f32.mrf.mxu0
  %v3990 = vadd.f32 0.0, %v3989
  %v3991 = vpop.f32.mrf.mxu0
  %v3992 = vadd.f32 0.0, %v3991
  %3993 = vmatmul.bf16.gmra.mxu0 %v2693
  %v3994 = vpop.f32.mrf.mxu0
  %v3995 = vadd.f32 0.0, %v3994
  %v3996 = vpop.f32.mrf.mxu0
  %v3997 = vadd.f32 0.0, %v3996
  %3998 = vdwg.mxu0
  %v3999 = vadd.f32 %v3865, %v3980
  %v4000 = vadd.f32 %v3867, %v3982
  %v4001 = vadd.f32 %v3870, %v3985
  %v4002 = vadd.f32 %v3872, %v3987
  %v4003 = vadd.f32 %v3875, %v3990
  %v4004 = vadd.f32 %v3877, %v3992
  %v4005 = vadd.f32 %v3880, %v3995
  %v4006 = vadd.f32 %v3882, %v3997
  %s4007 = scalar_lea.vmem %s2, 704
  %v4008 = vld [vmem:[%s4007] sm:$0xf]
  %v4009 = vld [vmem:[%s4007 + $0x4] sm:$0xf]
  %v4010 = vld [vmem:[%s4007 + $0x8] sm:$0xf]
  %v4011 = vld [vmem:[%s4007 + $0xc] sm:$0xf]
  %v4012 = vld [vmem:[%s4007 + $0x10] sm:$0xf]
  %v4013 = vld [vmem:[%s4007 + $0x14] sm:$0xf]
  %v4014 = vld [vmem:[%s4007 + $0x18] sm:$0xf]
  %v4015 = vld [vmem:[%s4007 + $0x1c] sm:$0xf]
  %v4016 = vld [vmem:[%s4007 + $0x20] sm:$0xf]
  %v4017 = vld [vmem:[%s4007 + $0x24] sm:$0xf]
  %v4018 = vld [vmem:[%s4007 + $0x28] sm:$0xf]
  %v4019 = vld [vmem:[%s4007 + $0x2c] sm:$0xf]
  %v4020 = vld [vmem:[%s4007 + $0x30] sm:$0xf]
  %v4021 = vld [vmem:[%s4007 + $0x34] sm:$0xf]
  %v4022 = vld [vmem:[%s4007 + $0x38] sm:$0xf]
  %v4023 = vld [vmem:[%s4007 + $0x3c] sm:$0xf]
  %v4040 = vunpack.c.l.b16 %v4008
  %v4041 = vunpack.c.l.b16 %v4009
  %v4042 = vunpack.c.l.b16 %v4010
  %v4043 = vunpack.c.l.b16 %v4011
  %v4044 = vunpack.c.l.b16 %v4012
  %v4045 = vunpack.c.l.b16 %v4013
  %v4046 = vunpack.c.l.b16 %v4014
  %v4047 = vunpack.c.l.b16 %v4015
  %v4048 = vunpack.c.l.b16 %v4016
  %v4049 = vunpack.c.l.b16 %v4017
  %v4050 = vunpack.c.l.b16 %v4018
  %v4051 = vunpack.c.l.b16 %v4019
  %v4052 = vunpack.c.l.b16 %v4020
  %v4053 = vunpack.c.l.b16 %v4021
  %v4054 = vunpack.c.l.b16 %v4022
  %v4055 = vunpack.c.l.b16 %v4023
  %v4056 = vpack.c.b16 %v4041, %v4040
  %v4057 = vpack.c.b16 %v4043, %v4042
  %v4058 = vpack.c.b16 %v4045, %v4044
  %v4059 = vpack.c.b16 %v4047, %v4046
  %v4060 = vpack.c.b16 %v4049, %v4048
  %v4061 = vpack.c.b16 %v4051, %v4050
  %v4062 = vpack.c.b16 %v4053, %v4052
  %v4063 = vpack.c.b16 %v4055, %v4054
  %4072 = vmatpush.bf16.msra.mxu0 %v4063
  %4073 = vmatpush.bf16.msra.mxu0 %v4062
  %4074 = vmatpush.bf16.msra.mxu0 %v4061
  %4075 = vmatpush.bf16.msra.mxu0 %v4060
  %4076 = vmatpush.bf16.msra.mxu0 %v4059
  %4077 = vmatpush.bf16.msra.mxu0 %v4058
  %4078 = vmatpush.bf16.msra.mxu0 %v4057
  %4079 = vmatpush.bf16.msra.mxu0 %v4056
  %4080 = vmatmul.bf16.gmra.mxu0 %v129
  %v4081 = vpop.f32.mrf.mxu0
  %v4082 = vadd.f32 %v104, %v4081
  %v4083 = vpop.f32.mrf.mxu0
  %v4084 = vadd.f32 %v109, %v4083
  %4085 = vmatmul.bf16.gmra.mxu0 %v130
  %v4086 = vpop.f32.mrf.mxu0
  %v4087 = vadd.f32 %v114, %v4086
  %v4088 = vpop.f32.mrf.mxu0
  %v4089 = vadd.f32 %v119, %v4088
  %4090 = vdwg.mxu0
  %v4091 = vpack.c.bf16 %v4084, %v4082
  %v4092 = vpack.c.bf16 %v4089, %v4087
  %4093 = vmatpush.bf16.msra.mxu0 0
  %4094 = vmatpush.bf16.msra.mxu0 0
  %4095 = vmatpush.bf16.msra.mxu0 0
  %4096 = vmatpush.bf16.msra.mxu0 0
  %4097 = vmatpush.bf16.msra.mxu0 0
  %4098 = vmatpush.bf16.msra.mxu0 0
  %4099 = vmatpush.bf16.msra.mxu0 %v4092
  %4100 = vmatpush.bf16.msra.mxu0 %v4091
  %4101 = vmatmul.bf16.gmra.mxu0 %v2847
  %v4102 = vpop.f32.mrf.mxu0
  %v4103 = vadd.f32 0.0, %v4102
  %v4104 = vpop.f32.mrf.mxu0
  %v4105 = vadd.f32 0.0, %v4104
  %4106 = vmatmul.bf16.gmra.mxu0 %v2850
  %v4107 = vpop.f32.mrf.mxu0
  %v4108 = vadd.f32 0.0, %v4107
  %v4109 = vpop.f32.mrf.mxu0
  %v4110 = vadd.f32 0.0, %v4109
  %4111 = vmatmul.bf16.gmra.mxu0 %v2853
  %v4112 = vpop.f32.mrf.mxu0
  %v4113 = vadd.f32 0.0, %v4112
  %v4114 = vpop.f32.mrf.mxu0
  %v4115 = vadd.f32 0.0, %v4114
  %4116 = vmatmul.bf16.gmra.mxu0 %v2856
  %v4117 = vpop.f32.mrf.mxu0
  %v4118 = vadd.f32 0.0, %v4117
  %v4119 = vpop.f32.mrf.mxu0
  %v4120 = vadd.f32 0.0, %v4119
  %4121 = vdwg.mxu0
  %v4122 = vadd.f32 %v3999, %v4103
  %v4123 = vadd.f32 %v4000, %v4105
  %v4124 = vadd.f32 %v4001, %v4108
  %v4125 = vadd.f32 %v4002, %v4110
  %v4126 = vadd.f32 %v4003, %v4113
  %v4127 = vadd.f32 %v4004, %v4115
  %v4128 = vadd.f32 %v4005, %v4118
  %v4129 = vadd.f32 %v4006, %v4120
  %v4130 = vadd.f32 %v4122, %v1591
  %v4131 = vadd.f32 %v4123, %v1596
  %v4132 = vadd.f32 %v4124, %v1601
  %v4133 = vadd.f32 %v4125, %v1606
  %v4134 = vadd.f32 %v4126, %v1611
  %v4135 = vadd.f32 %v4127, %v1616
  %v4136 = vadd.f32 %v4128, %v1621
  %v4137 = vadd.f32 %v4129, %v1626
  %s4138 = scalar_lea.vmem %s7, 128
  %v4139 = vld [vmem:[%s4138] sm:$0xf]
  %v4140 = vld [vmem:[%s4138 + $0x4] sm:$0xf]
  %v4141 = vld [vmem:[%s4138 + $0x8] sm:$0xf]
  %v4142 = vld [vmem:[%s4138 + $0xc] sm:$0xf]
  %v4143 = vld [vmem:[%s4138 + $0x10] sm:$0xf]
  %v4144 = vld [vmem:[%s4138 + $0x14] sm:$0xf]
  %v4145 = vld [vmem:[%s4138 + $0x18] sm:$0xf]
  %v4146 = vld [vmem:[%s4138 + $0x1c] sm:$0xf]
  %v4147 = vld [vmem:[%s4138 + $0x20] sm:$0xf]
  %v4148 = vld [vmem:[%s4138 + $0x24] sm:$0xf]
  %v4149 = vld [vmem:[%s4138 + $0x28] sm:$0xf]
  %v4150 = vld [vmem:[%s4138 + $0x2c] sm:$0xf]
  %v4151 = vld [vmem:[%s4138 + $0x30] sm:$0xf]
  %v4152 = vld [vmem:[%s4138 + $0x34] sm:$0xf]
  %v4153 = vld [vmem:[%s4138 + $0x38] sm:$0xf]
  %v4154 = vld [vmem:[%s4138 + $0x3c] sm:$0xf]
  %v4155 = vpack.c.bf16 %v4131, %v4130
  %v4156 = vpack.c.bf16 %v4133, %v4132
  %v4157 = vpack.c.bf16 %v4135, %v4134
  %v4158 = vpack.c.bf16 %v4137, %v4136
  %v4175 = vunpack.c.l.b16 %v4139
  %v4176 = vunpack.c.l.b16 %v4140
  %v4177 = vunpack.c.l.b16 %v4141
  %v4178 = vunpack.c.l.b16 %v4142
  %v4179 = vunpack.c.l.b16 %v4143
  %v4180 = vunpack.c.l.b16 %v4144
  %v4181 = vunpack.c.l.b16 %v4145
  %v4182 = vunpack.c.l.b16 %v4146
  %v4183 = vunpack.c.l.b16 %v4147
  %v4184 = vunpack.c.l.b16 %v4148
  %v4185 = vunpack.c.l.b16 %v4149
  %v4186 = vunpack.c.l.b16 %v4150
  %v4187 = vunpack.c.l.b16 %v4151
  %v4188 = vunpack.c.l.b16 %v4152
  %v4189 = vunpack.c.l.b16 %v4153
  %v4190 = vunpack.c.l.b16 %v4154
  %v4191 = vpack.c.b16 %v4176, %v4175
  %v4192 = vpack.c.b16 %v4178, %v4177
  %v4193 = vpack.c.b16 %v4180, %v4179
  %v4194 = vpack.c.b16 %v4182, %v4181
  %v4195 = vpack.c.b16 %v4184, %v4183
  %v4196 = vpack.c.b16 %v4186, %v4185
  %v4197 = vpack.c.b16 %v4188, %v4187
  %v4198 = vpack.c.b16 %v4190, %v4189
  %v4200 = vsel %vm1944, %v4191, 0
  %v4203 = vsel %vm1944, %v4192, 0
  %v4206 = vsel %vm1944, %v4193, 0
  %v4209 = vsel %vm1944, %v4194, 0
  %v4212 = vsel %vm1944, %v4195, 0
  %v4215 = vsel %vm1944, %v4196, 0
  %v4218 = vsel %vm1944, %v4197, 0
  %v4221 = vsel %vm1944, %v4198, 0
  %4223 = vmatpush.bf16.msra.mxu0 0
  %4224 = vmatpush.bf16.msra.mxu0 0
  %4225 = vmatpush.bf16.msra.mxu0 0
  %4226 = vmatpush.bf16.msra.mxu0 0
  %4227 = vmatpush.bf16.msra.mxu0 %v4158
  %4228 = vmatpush.bf16.msra.mxu0 %v4157
  %4229 = vmatpush.bf16.msra.mxu0 %v4156
  %4230 = vmatpush.bf16.msra.mxu0 %v4155
  %4231 = vmatmul.bf16.gmra.mxu0 %v4200
  %v4232 = vpop.f32.mrf.mxu0
  %v4233 = vadd.f32 0.0, %v4232
  %v4234 = vpop.f32.mrf.mxu0
  %v4235 = vadd.f32 0.0, %v4234
  %4236 = vmatmul.bf16.gmra.mxu0 %v4203
  %v4237 = vpop.f32.mrf.mxu0
  %v4238 = vadd.f32 0.0, %v4237
  %v4239 = vpop.f32.mrf.mxu0
  %v4240 = vadd.f32 0.0, %v4239
  %4241 = vmatmul.bf16.gmra.mxu0 %v4206
  %v4242 = vpop.f32.mrf.mxu0
  %v4243 = vadd.f32 0.0, %v4242
  %v4244 = vpop.f32.mrf.mxu0
  %v4245 = vadd.f32 0.0, %v4244
  %4246 = vmatmul.bf16.gmra.mxu0 %v4209
  %v4247 = vpop.f32.mrf.mxu0
  %v4248 = vadd.f32 0.0, %v4247
  %v4249 = vpop.f32.mrf.mxu0
  %v4250 = vadd.f32 0.0, %v4249
  %4251 = vmatmul.bf16.gmra.mxu0 %v4212
  %v4252 = vpop.f32.mrf.mxu0
  %v4253 = vadd.f32 0.0, %v4252
  %v4254 = vpop.f32.mrf.mxu0
  %v4255 = vadd.f32 0.0, %v4254
  %4256 = vmatmul.bf16.gmra.mxu0 %v4215
  %v4257 = vpop.f32.mrf.mxu0
  %v4258 = vadd.f32 0.0, %v4257
  %v4259 = vpop.f32.mrf.mxu0
  %v4260 = vadd.f32 0.0, %v4259
  %4261 = vmatmul.bf16.gmra.mxu0 %v4218
  %v4262 = vpop.f32.mrf.mxu0
  %v4263 = vadd.f32 0.0, %v4262
  %v4264 = vpop.f32.mrf.mxu0
  %v4265 = vadd.f32 0.0, %v4264
  %4266 = vmatmul.bf16.gmra.mxu0 %v4221
  %v4267 = vpop.f32.mrf.mxu0
  %v4268 = vadd.f32 0.0, %v4267
  %v4269 = vpop.f32.mrf.mxu0
  %v4270 = vadd.f32 0.0, %v4269
  %4271 = vdwg.mxu0
  %v4272 = vadd.f32 %v3615, %v4233
  %v4273 = vadd.f32 %v3617, %v4235
  %v4274 = vadd.f32 %v3620, %v4238
  %v4275 = vadd.f32 %v3622, %v4240
  %v4276 = vadd.f32 %v3625, %v4243
  %v4277 = vadd.f32 %v3627, %v4245
  %v4278 = vadd.f32 %v3630, %v4248
  %v4279 = vadd.f32 %v3632, %v4250
  %v4280 = vadd.f32 %v3635, %v4253
  %v4281 = vadd.f32 %v3637, %v4255
  %v4282 = vadd.f32 %v3640, %v4258
  %v4283 = vadd.f32 %v3642, %v4260
  %v4284 = vadd.f32 %v3645, %v4263
  %v4285 = vadd.f32 %v3647, %v4265
  %v4286 = vadd.f32 %v3650, %v4268
  %v4287 = vadd.f32 %v3652, %v4270
  %s4288 = scalar_lea.vmem %s2, 768
  %v4289 = vld [vmem:[%s4288] sm:$0xf]
  %v4290 = vld [vmem:[%s4288 + $0x4] sm:$0xf]
  %v4291 = vld [vmem:[%s4288 + $0x8] sm:$0xf]
  %v4292 = vld [vmem:[%s4288 + $0xc] sm:$0xf]
  %v4293 = vld [vmem:[%s4288 + $0x10] sm:$0xf]
  %v4294 = vld [vmem:[%s4288 + $0x14] sm:$0xf]
  %v4295 = vld [vmem:[%s4288 + $0x18] sm:$0xf]
  %v4296 = vld [vmem:[%s4288 + $0x1c] sm:$0xf]
  %v4297 = vld [vmem:[%s4288 + $0x20] sm:$0xf]
  %v4298 = vld [vmem:[%s4288 + $0x24] sm:$0xf]
  %v4299 = vld [vmem:[%s4288 + $0x28] sm:$0xf]
  %v4300 = vld [vmem:[%s4288 + $0x2c] sm:$0xf]
  %v4301 = vld [vmem:[%s4288 + $0x30] sm:$0xf]
  %v4302 = vld [vmem:[%s4288 + $0x34] sm:$0xf]
  %v4303 = vld [vmem:[%s4288 + $0x38] sm:$0xf]
  %v4304 = vld [vmem:[%s4288 + $0x3c] sm:$0xf]
  %v4321 = vunpack.c.l.b16 %v4289
  %v4322 = vunpack.c.l.b16 %v4290
  %v4323 = vunpack.c.l.b16 %v4291
  %v4324 = vunpack.c.l.b16 %v4292
  %v4325 = vunpack.c.l.b16 %v4293
  %v4326 = vunpack.c.l.b16 %v4294
  %v4327 = vunpack.c.l.b16 %v4295
  %v4328 = vunpack.c.l.b16 %v4296
  %v4329 = vunpack.c.l.b16 %v4297
  %v4330 = vunpack.c.l.b16 %v4298
  %v4331 = vunpack.c.l.b16 %v4299
  %v4332 = vunpack.c.l.b16 %v4300
  %v4333 = vunpack.c.l.b16 %v4301
  %v4334 = vunpack.c.l.b16 %v4302
  %v4335 = vunpack.c.l.b16 %v4303
  %v4336 = vunpack.c.l.b16 %v4304
  %v4337 = vpack.c.b16 %v4322, %v4321
  %v4338 = vpack.c.b16 %v4324, %v4323
  %v4339 = vpack.c.b16 %v4326, %v4325
  %v4340 = vpack.c.b16 %v4328, %v4327
  %v4341 = vpack.c.b16 %v4330, %v4329
  %v4342 = vpack.c.b16 %v4332, %v4331
  %v4343 = vpack.c.b16 %v4334, %v4333
  %v4344 = vpack.c.b16 %v4336, %v4335
  %4353 = vmatpush.bf16.msra.mxu0 %v4344
  %4354 = vmatpush.bf16.msra.mxu0 %v4343
  %4355 = vmatpush.bf16.msra.mxu0 %v4342
  %4356 = vmatpush.bf16.msra.mxu0 %v4341
  %4357 = vmatpush.bf16.msra.mxu0 %v4340
  %4358 = vmatpush.bf16.msra.mxu0 %v4339
  %4359 = vmatpush.bf16.msra.mxu0 %v4338
  %4360 = vmatpush.bf16.msra.mxu0 %v4337
  %4361 = vmatmul.bf16.gmra.mxu0 %v129
  %v4362 = vpop.f32.mrf.mxu0
  %v4363 = vadd.f32 %v104, %v4362
  %v4364 = vpop.f32.mrf.mxu0
  %v4365 = vadd.f32 %v109, %v4364
  %4366 = vmatmul.bf16.gmra.mxu0 %v130
  %v4367 = vpop.f32.mrf.mxu0
  %v4368 = vadd.f32 %v114, %v4367
  %v4369 = vpop.f32.mrf.mxu0
  %v4370 = vadd.f32 %v119, %v4369
  %4371 = vdwg.mxu0
  %v4372 = vpack.c.bf16 %v4365, %v4363
  %v4373 = vpack.c.bf16 %v4370, %v4368
  %s4374 = scalar_lea.vmem %s2, 832
  %v4375 = vld [vmem:[%s4374] sm:$0xf]
  %v4376 = vld [vmem:[%s4374 + $0x4] sm:$0xf]
  %v4377 = vld [vmem:[%s4374 + $0x8] sm:$0xf]
  %v4378 = vld [vmem:[%s4374 + $0xc] sm:$0xf]
  %v4379 = vld [vmem:[%s4374 + $0x10] sm:$0xf]
  %v4380 = vld [vmem:[%s4374 + $0x14] sm:$0xf]
  %v4381 = vld [vmem:[%s4374 + $0x18] sm:$0xf]
  %v4382 = vld [vmem:[%s4374 + $0x1c] sm:$0xf]
  %v4383 = vld [vmem:[%s4374 + $0x20] sm:$0xf]
  %v4384 = vld [vmem:[%s4374 + $0x24] sm:$0xf]
  %v4385 = vld [vmem:[%s4374 + $0x28] sm:$0xf]
  %v4386 = vld [vmem:[%s4374 + $0x2c] sm:$0xf]
  %v4387 = vld [vmem:[%s4374 + $0x30] sm:$0xf]
  %v4388 = vld [vmem:[%s4374 + $0x34] sm:$0xf]
  %v4389 = vld [vmem:[%s4374 + $0x38] sm:$0xf]
  %v4390 = vld [vmem:[%s4374 + $0x3c] sm:$0xf]
  %v4407 = vunpack.c.l.b16 %v4375
  %v4408 = vunpack.c.l.b16 %v4376
  %v4409 = vunpack.c.l.b16 %v4377
  %v4410 = vunpack.c.l.b16 %v4378
  %v4411 = vunpack.c.l.b16 %v4379
  %v4412 = vunpack.c.l.b16 %v4380
  %v4413 = vunpack.c.l.b16 %v4381
  %v4414 = vunpack.c.l.b16 %v4382
  %v4415 = vunpack.c.l.b16 %v4383
  %v4416 = vunpack.c.l.b16 %v4384
  %v4417 = vunpack.c.l.b16 %v4385
  %v4418 = vunpack.c.l.b16 %v4386
  %v4419 = vunpack.c.l.b16 %v4387
  %v4420 = vunpack.c.l.b16 %v4388
  %v4421 = vunpack.c.l.b16 %v4389
  %v4422 = vunpack.c.l.b16 %v4390
  %v4423 = vpack.c.b16 %v4408, %v4407
  %v4424 = vpack.c.b16 %v4410, %v4409
  %v4425 = vpack.c.b16 %v4412, %v4411
  %v4426 = vpack.c.b16 %v4414, %v4413
  %v4427 = vpack.c.b16 %v4416, %v4415
  %v4428 = vpack.c.b16 %v4418, %v4417
  %v4429 = vpack.c.b16 %v4420, %v4419
  %v4430 = vpack.c.b16 %v4422, %v4421
  %4439 = vmatpush.bf16.msra.mxu0 %v4430
  %4440 = vmatpush.bf16.msra.mxu0 %v4429
  %4441 = vmatpush.bf16.msra.mxu0 %v4428
  %4442 = vmatpush.bf16.msra.mxu0 %v4427
  %4443 = vmatpush.bf16.msra.mxu0 %v4426
  %4444 = vmatpush.bf16.msra.mxu0 %v4425
  %4445 = vmatpush.bf16.msra.mxu0 %v4424
  %4446 = vmatpush.bf16.msra.mxu0 %v4423
  %4447 = vmatmul.bf16.gmra.mxu0 %v129
  %v4448 = vpop.f32.mrf.mxu0
  %v4449 = vadd.f32 %v104, %v4448
  %v4450 = vpop.f32.mrf.mxu0
  %v4451 = vadd.f32 %v109, %v4450
  %4452 = vmatmul.bf16.gmra.mxu0 %v130
  %v4453 = vpop.f32.mrf.mxu0
  %v4454 = vadd.f32 %v114, %v4453
  %v4455 = vpop.f32.mrf.mxu0
  %v4456 = vadd.f32 %v119, %v4455
  %4457 = vdwg.mxu0
  %v4458 = vpack.c.bf16 %v4451, %v4449
  %v4459 = vpack.c.bf16 %v4456, %v4454
  %4460 = vmatpush.bf16.msra.mxu0 0
  %4461 = vmatpush.bf16.msra.mxu0 0
  %4462 = vmatpush.bf16.msra.mxu0 0
  %4463 = vmatpush.bf16.msra.mxu0 0
  %4464 = vmatpush.bf16.msra.mxu0 0
  %4465 = vmatpush.bf16.msra.mxu0 0
  %4466 = vmatpush.bf16.msra.mxu0 %v4459
  %4467 = vmatpush.bf16.msra.mxu0 %v4458
  %4468 = vmatmul.bf16.gmra.mxu0 %v2468
  %v4469 = vpop.f32.mrf.mxu0
  %v4470 = vadd.f32 0.0, %v4469
  %v4471 = vpop.f32.mrf.mxu0
  %v4472 = vadd.f32 0.0, %v4471
  %4473 = vmatmul.bf16.gmra.mxu0 %v2471
  %v4474 = vpop.f32.mrf.mxu0
  %v4475 = vadd.f32 0.0, %v4474
  %v4476 = vpop.f32.mrf.mxu0
  %v4477 = vadd.f32 0.0, %v4476
  %4478 = vmatmul.bf16.gmra.mxu0 %v2474
  %v4479 = vpop.f32.mrf.mxu0
  %v4480 = vadd.f32 0.0, %v4479
  %v4481 = vpop.f32.mrf.mxu0
  %v4482 = vadd.f32 0.0, %v4481
  %4483 = vmatmul.bf16.gmra.mxu0 %v2477
  %v4484 = vpop.f32.mrf.mxu0
  %v4485 = vadd.f32 0.0, %v4484
  %v4486 = vpop.f32.mrf.mxu0
  %v4487 = vadd.f32 0.0, %v4486
  %4488 = vdwg.mxu0
  %4489 = vmatpush.bf16.msra.mxu0 0
  %4490 = vmatpush.bf16.msra.mxu0 0
  %4491 = vmatpush.bf16.msra.mxu0 0
  %4492 = vmatpush.bf16.msra.mxu0 0
  %4493 = vmatpush.bf16.msra.mxu0 0
  %4494 = vmatpush.bf16.msra.mxu0 0
  %4495 = vmatpush.bf16.msra.mxu0 %v4373
  %4496 = vmatpush.bf16.msra.mxu0 %v4372
  %4497 = vmatmul.bf16.gmra.mxu0 %v2529
  %v4498 = vpop.f32.mrf.mxu0
  %v4499 = vadd.f32 %v4470, %v4498
  %v4500 = vpop.f32.mrf.mxu0
  %v4501 = vadd.f32 %v4472, %v4500
  %4502 = vmatmul.bf16.gmra.mxu0 %v2532
  %v4503 = vpop.f32.mrf.mxu0
  %v4504 = vadd.f32 %v4475, %v4503
  %v4505 = vpop.f32.mrf.mxu0
  %v4506 = vadd.f32 %v4477, %v4505
  %4507 = vmatmul.bf16.gmra.mxu0 %v2535
  %v4508 = vpop.f32.mrf.mxu0
  %v4509 = vadd.f32 %v4480, %v4508
  %v4510 = vpop.f32.mrf.mxu0
  %v4511 = vadd.f32 %v4482, %v4510
  %4512 = vmatmul.bf16.gmra.mxu0 %v2538
  %v4513 = vpop.f32.mrf.mxu0
  %v4514 = vadd.f32 %v4485, %v4513
  %v4515 = vpop.f32.mrf.mxu0
  %v4516 = vadd.f32 %v4487, %v4515
  %4517 = vdwg.mxu0
  %s4518 = scalar_lea.vmem %s2, 896
  %v4519 = vld [vmem:[%s4518] sm:$0xf]
  %v4520 = vld [vmem:[%s4518 + $0x4] sm:$0xf]
  %v4521 = vld [vmem:[%s4518 + $0x8] sm:$0xf]
  %v4522 = vld [vmem:[%s4518 + $0xc] sm:$0xf]
  %v4523 = vld [vmem:[%s4518 + $0x10] sm:$0xf]
  %v4524 = vld [vmem:[%s4518 + $0x14] sm:$0xf]
  %v4525 = vld [vmem:[%s4518 + $0x18] sm:$0xf]
  %v4526 = vld [vmem:[%s4518 + $0x1c] sm:$0xf]
  %v4527 = vld [vmem:[%s4518 + $0x20] sm:$0xf]
  %v4528 = vld [vmem:[%s4518 + $0x24] sm:$0xf]
  %v4529 = vld [vmem:[%s4518 + $0x28] sm:$0xf]
  %v4530 = vld [vmem:[%s4518 + $0x2c] sm:$0xf]
  %v4531 = vld [vmem:[%s4518 + $0x30] sm:$0xf]
  %v4532 = vld [vmem:[%s4518 + $0x34] sm:$0xf]
  %v4533 = vld [vmem:[%s4518 + $0x38] sm:$0xf]
  %v4534 = vld [vmem:[%s4518 + $0x3c] sm:$0xf]
  %v4551 = vunpack.c.l.b16 %v4519
  %v4552 = vunpack.c.l.b16 %v4520
  %v4553 = vunpack.c.l.b16 %v4521
  %v4554 = vunpack.c.l.b16 %v4522
  %v4555 = vunpack.c.l.b16 %v4523
  %v4556 = vunpack.c.l.b16 %v4524
  %v4557 = vunpack.c.l.b16 %v4525
  %v4558 = vunpack.c.l.b16 %v4526
  %v4559 = vunpack.c.l.b16 %v4527
  %v4560 = vunpack.c.l.b16 %v4528
  %v4561 = vunpack.c.l.b16 %v4529
  %v4562 = vunpack.c.l.b16 %v4530
  %v4563 = vunpack.c.l.b16 %v4531
  %v4564 = vunpack.c.l.b16 %v4532
  %v4565 = vunpack.c.l.b16 %v4533
  %v4566 = vunpack.c.l.b16 %v4534
  %v4567 = vpack.c.b16 %v4552, %v4551
  %v4568 = vpack.c.b16 %v4554, %v4553
  %v4569 = vpack.c.b16 %v4556, %v4555
  %v4570 = vpack.c.b16 %v4558, %v4557
  %v4571 = vpack.c.b16 %v4560, %v4559
  %v4572 = vpack.c.b16 %v4562, %v4561
  %v4573 = vpack.c.b16 %v4564, %v4563
  %v4574 = vpack.c.b16 %v4566, %v4565
  %4583 = vmatpush.bf16.msra.mxu0 %v4574
  %4584 = vmatpush.bf16.msra.mxu0 %v4573
  %4585 = vmatpush.bf16.msra.mxu0 %v4572
  %4586 = vmatpush.bf16.msra.mxu0 %v4571
  %4587 = vmatpush.bf16.msra.mxu0 %v4570
  %4588 = vmatpush.bf16.msra.mxu0 %v4569
  %4589 = vmatpush.bf16.msra.mxu0 %v4568
  %4590 = vmatpush.bf16.msra.mxu0 %v4567
  %4591 = vmatmul.bf16.gmra.mxu0 %v129
  %v4592 = vpop.f32.mrf.mxu0
  %v4593 = vadd.f32 %v104, %v4592
  %v4594 = vpop.f32.mrf.mxu0
  %v4595 = vadd.f32 %v109, %v4594
  %4596 = vmatmul.bf16.gmra.mxu0 %v130
  %v4597 = vpop.f32.mrf.mxu0
  %v4598 = vadd.f32 %v114, %v4597
  %v4599 = vpop.f32.mrf.mxu0
  %v4600 = vadd.f32 %v119, %v4599
  %4601 = vdwg.mxu0
  %v4602 = vpack.c.bf16 %v4595, %v4593
  %v4603 = vpack.c.bf16 %v4600, %v4598
  %4604 = vmatpush.bf16.msra.mxu0 0
  %4605 = vmatpush.bf16.msra.mxu0 0
  %4606 = vmatpush.bf16.msra.mxu0 0
  %4607 = vmatpush.bf16.msra.mxu0 0
  %4608 = vmatpush.bf16.msra.mxu0 0
  %4609 = vmatpush.bf16.msra.mxu0 0
  %4610 = vmatpush.bf16.msra.mxu0 %v4603
  %4611 = vmatpush.bf16.msra.mxu0 %v4602
  %4612 = vmatmul.bf16.gmra.mxu0 %v2684
  %v4613 = vpop.f32.mrf.mxu0
  %v4614 = vadd.f32 0.0, %v4613
  %v4615 = vpop.f32.mrf.mxu0
  %v4616 = vadd.f32 0.0, %v4615
  %4617 = vmatmul.bf16.gmra.mxu0 %v2687
  %v4618 = vpop.f32.mrf.mxu0
  %v4619 = vadd.f32 0.0, %v4618
  %v4620 = vpop.f32.mrf.mxu0
  %v4621 = vadd.f32 0.0, %v4620
  %4622 = vmatmul.bf16.gmra.mxu0 %v2690
  %v4623 = vpop.f32.mrf.mxu0
  %v4624 = vadd.f32 0.0, %v4623
  %v4625 = vpop.f32.mrf.mxu0
  %v4626 = vadd.f32 0.0, %v4625
  %4627 = vmatmul.bf16.gmra.mxu0 %v2693
  %v4628 = vpop.f32.mrf.mxu0
  %v4629 = vadd.f32 0.0, %v4628
  %v4630 = vpop.f32.mrf.mxu0
  %v4631 = vadd.f32 0.0, %v4630
  %4632 = vdwg.mxu0
  %v4633 = vadd.f32 %v4499, %v4614
  %v4634 = vadd.f32 %v4501, %v4616
  %v4635 = vadd.f32 %v4504, %v4619
  %v4636 = vadd.f32 %v4506, %v4621
  %v4637 = vadd.f32 %v4509, %v4624
  %v4638 = vadd.f32 %v4511, %v4626
  %v4639 = vadd.f32 %v4514, %v4629
  %v4640 = vadd.f32 %v4516, %v4631
  %s4641 = scalar_lea.vmem %s2, 960
  %v4642 = vld [vmem:[%s4641] sm:$0xf]
  %v4643 = vld [vmem:[%s4641 + $0x4] sm:$0xf]
  %v4644 = vld [vmem:[%s4641 + $0x8] sm:$0xf]
  %v4645 = vld [vmem:[%s4641 + $0xc] sm:$0xf]
  %v4646 = vld [vmem:[%s4641 + $0x10] sm:$0xf]
  %v4647 = vld [vmem:[%s4641 + $0x14] sm:$0xf]
  %v4648 = vld [vmem:[%s4641 + $0x18] sm:$0xf]
  %v4649 = vld [vmem:[%s4641 + $0x1c] sm:$0xf]
  %v4650 = vld [vmem:[%s4641 + $0x20] sm:$0xf]
  %v4651 = vld [vmem:[%s4641 + $0x24] sm:$0xf]
  %v4652 = vld [vmem:[%s4641 + $0x28] sm:$0xf]
  %v4653 = vld [vmem:[%s4641 + $0x2c] sm:$0xf]
  %v4654 = vld [vmem:[%s4641 + $0x30] sm:$0xf]
  %v4655 = vld [vmem:[%s4641 + $0x34] sm:$0xf]
  %v4656 = vld [vmem:[%s4641 + $0x38] sm:$0xf]
  %v4657 = vld [vmem:[%s4641 + $0x3c] sm:$0xf]
  %v4674 = vunpack.c.l.b16 %v4642
  %v4675 = vunpack.c.l.b16 %v4643
  %v4676 = vunpack.c.l.b16 %v4644
  %v4677 = vunpack.c.l.b16 %v4645
  %v4678 = vunpack.c.l.b16 %v4646
  %v4679 = vunpack.c.l.b16 %v4647
  %v4680 = vunpack.c.l.b16 %v4648
  %v4681 = vunpack.c.l.b16 %v4649
  %v4682 = vunpack.c.l.b16 %v4650
  %v4683 = vunpack.c.l.b16 %v4651
  %v4684 = vunpack.c.l.b16 %v4652
  %v4685 = vunpack.c.l.b16 %v4653
  %v4686 = vunpack.c.l.b16 %v4654
  %v4687 = vunpack.c.l.b16 %v4655
  %v4688 = vunpack.c.l.b16 %v4656
  %v4689 = vunpack.c.l.b16 %v4657
  %v4690 = vpack.c.b16 %v4675, %v4674
  %v4691 = vpack.c.b16 %v4677, %v4676
  %v4692 = vpack.c.b16 %v4679, %v4678
  %v4693 = vpack.c.b16 %v4681, %v4680
  %v4694 = vpack.c.b16 %v4683, %v4682
  %v4695 = vpack.c.b16 %v4685, %v4684
  %v4696 = vpack.c.b16 %v4687, %v4686
  %v4697 = vpack.c.b16 %v4689, %v4688
  %4706 = vmatpush.bf16.msra.mxu0 %v4697
  %4707 = vmatpush.bf16.msra.mxu0 %v4696
  %4708 = vmatpush.bf16.msra.mxu0 %v4695
  %4709 = vmatpush.bf16.msra.mxu0 %v4694
  %4710 = vmatpush.bf16.msra.mxu0 %v4693
  %4711 = vmatpush.bf16.msra.mxu0 %v4692
  %4712 = vmatpush.bf16.msra.mxu0 %v4691
  %4713 = vmatpush.bf16.msra.mxu0 %v4690
  %4714 = vmatmul.bf16.gmra.mxu0 %v129
  %v4715 = vpop.f32.mrf.mxu0
  %v4716 = vadd.f32 %v104, %v4715
  %v4717 = vpop.f32.mrf.mxu0
  %v4718 = vadd.f32 %v109, %v4717
  %4719 = vmatmul.bf16.gmra.mxu0 %v130
  %v4720 = vpop.f32.mrf.mxu0
  %v4721 = vadd.f32 %v114, %v4720
  %v4722 = vpop.f32.mrf.mxu0
  %v4723 = vadd.f32 %v119, %v4722
  %4724 = vdwg.mxu0
  %v4725 = vpack.c.bf16 %v4718, %v4716
  %v4726 = vpack.c.bf16 %v4723, %v4721
  %4727 = vmatpush.bf16.msra.mxu0 0
  %4728 = vmatpush.bf16.msra.mxu0 0
  %4729 = vmatpush.bf16.msra.mxu0 0
  %4730 = vmatpush.bf16.msra.mxu0 0
  %4731 = vmatpush.bf16.msra.mxu0 0
  %4732 = vmatpush.bf16.msra.mxu0 0
  %4733 = vmatpush.bf16.msra.mxu0 %v4726
  %4734 = vmatpush.bf16.msra.mxu0 %v4725
  %4735 = vmatmul.bf16.gmra.mxu0 %v2847
  %v4736 = vpop.f32.mrf.mxu0
  %v4737 = vadd.f32 0.0, %v4736
  %v4738 = vpop.f32.mrf.mxu0
  %v4739 = vadd.f32 0.0, %v4738
  %4740 = vmatmul.bf16.gmra.mxu0 %v2850
  %v4741 = vpop.f32.mrf.mxu0
  %v4742 = vadd.f32 0.0, %v4741
  %v4743 = vpop.f32.mrf.mxu0
  %v4744 = vadd.f32 0.0, %v4743
  %4745 = vmatmul.bf16.gmra.mxu0 %v2853
  %v4746 = vpop.f32.mrf.mxu0
  %v4747 = vadd.f32 0.0, %v4746
  %v4748 = vpop.f32.mrf.mxu0
  %v4749 = vadd.f32 0.0, %v4748
  %4750 = vmatmul.bf16.gmra.mxu0 %v2856
  %v4751 = vpop.f32.mrf.mxu0
  %v4752 = vadd.f32 0.0, %v4751
  %v4753 = vpop.f32.mrf.mxu0
  %v4754 = vadd.f32 0.0, %v4753
  %4755 = vdwg.mxu0
  %v4756 = vadd.f32 %v4633, %v4737
  %v4757 = vadd.f32 %v4634, %v4739
  %v4758 = vadd.f32 %v4635, %v4742
  %v4759 = vadd.f32 %v4636, %v4744
  %v4760 = vadd.f32 %v4637, %v4747
  %v4761 = vadd.f32 %v4638, %v4749
  %v4762 = vadd.f32 %v4639, %v4752
  %v4763 = vadd.f32 %v4640, %v4754
  %v4764 = vadd.f32 %v4756, %v1591
  %v4765 = vadd.f32 %v4757, %v1596
  %v4766 = vadd.f32 %v4758, %v1601
  %v4767 = vadd.f32 %v4759, %v1606
  %v4768 = vadd.f32 %v4760, %v1611
  %v4769 = vadd.f32 %v4761, %v1616
  %v4770 = vadd.f32 %v4762, %v1621
  %v4771 = vadd.f32 %v4763, %v1626
  %s4772 = scalar_lea.vmem %s7, 192
  %v4773 = vld [vmem:[%s4772] sm:$0xf]
  %v4774 = vld [vmem:[%s4772 + $0x4] sm:$0xf]
  %v4775 = vld [vmem:[%s4772 + $0x8] sm:$0xf]
  %v4776 = vld [vmem:[%s4772 + $0xc] sm:$0xf]
  %v4777 = vld [vmem:[%s4772 + $0x10] sm:$0xf]
  %v4778 = vld [vmem:[%s4772 + $0x14] sm:$0xf]
  %v4779 = vld [vmem:[%s4772 + $0x18] sm:$0xf]
  %v4780 = vld [vmem:[%s4772 + $0x1c] sm:$0xf]
  %v4781 = vld [vmem:[%s4772 + $0x20] sm:$0xf]
  %v4782 = vld [vmem:[%s4772 + $0x24] sm:$0xf]
  %v4783 = vld [vmem:[%s4772 + $0x28] sm:$0xf]
  %v4784 = vld [vmem:[%s4772 + $0x2c] sm:$0xf]
  %v4785 = vld [vmem:[%s4772 + $0x30] sm:$0xf]
  %v4786 = vld [vmem:[%s4772 + $0x34] sm:$0xf]
  %v4787 = vld [vmem:[%s4772 + $0x38] sm:$0xf]
  %v4788 = vld [vmem:[%s4772 + $0x3c] sm:$0xf]
  %v4789 = vpack.c.bf16 %v4765, %v4764
  %v4790 = vpack.c.bf16 %v4767, %v4766
  %v4791 = vpack.c.bf16 %v4769, %v4768
  %v4792 = vpack.c.bf16 %v4771, %v4770
  %v4809 = vunpack.c.l.b16 %v4773
  %v4810 = vunpack.c.l.b16 %v4774
  %v4811 = vunpack.c.l.b16 %v4775
  %v4812 = vunpack.c.l.b16 %v4776
  %v4813 = vunpack.c.l.b16 %v4777
  %v4814 = vunpack.c.l.b16 %v4778
  %v4815 = vunpack.c.l.b16 %v4779
  %v4816 = vunpack.c.l.b16 %v4780
  %v4817 = vunpack.c.l.b16 %v4781
  %v4818 = vunpack.c.l.b16 %v4782
  %v4819 = vunpack.c.l.b16 %v4783
  %v4820 = vunpack.c.l.b16 %v4784
  %v4821 = vunpack.c.l.b16 %v4785
  %v4822 = vunpack.c.l.b16 %v4786
  %v4823 = vunpack.c.l.b16 %v4787
  %v4824 = vunpack.c.l.b16 %v4788
  %v4825 = vpack.c.b16 %v4810, %v4809
  %v4826 = vpack.c.b16 %v4812, %v4811
  %v4827 = vpack.c.b16 %v4814, %v4813
  %v4828 = vpack.c.b16 %v4816, %v4815
  %v4829 = vpack.c.b16 %v4818, %v4817
  %v4830 = vpack.c.b16 %v4820, %v4819
  %v4831 = vpack.c.b16 %v4822, %v4821
  %v4832 = vpack.c.b16 %v4824, %v4823
  %v4834 = vsel %vm1944, %v4825, 0
  %v4837 = vsel %vm1944, %v4826, 0
  %v4840 = vsel %vm1944, %v4827, 0
  %v4843 = vsel %vm1944, %v4828, 0
  %v4846 = vsel %vm1944, %v4829, 0
  %v4849 = vsel %vm1944, %v4830, 0
  %v4852 = vsel %vm1944, %v4831, 0
  %v4855 = vsel %vm1944, %v4832, 0
  %4857 = vmatpush.bf16.msra.mxu0 0
  %4858 = vmatpush.bf16.msra.mxu0 0
  %4859 = vmatpush.bf16.msra.mxu0 0
  %4860 = vmatpush.bf16.msra.mxu0 0
  %4861 = vmatpush.bf16.msra.mxu0 %v4792
  %4862 = vmatpush.bf16.msra.mxu0 %v4791
  %4863 = vmatpush.bf16.msra.mxu0 %v4790
  %4864 = vmatpush.bf16.msra.mxu0 %v4789
  %4865 = vmatmul.bf16.gmra.mxu0 %v4834
  %v4866 = vpop.f32.mrf.mxu0
  %v4867 = vadd.f32 0.0, %v4866
  %v4868 = vpop.f32.mrf.mxu0
  %v4869 = vadd.f32 0.0, %v4868
  %4870 = vmatmul.bf16.gmra.mxu0 %v4837
  %v4871 = vpop.f32.mrf.mxu0
  %v4872 = vadd.f32 0.0, %v4871
  %v4873 = vpop.f32.mrf.mxu0
  %v4874 = vadd.f32 0.0, %v4873
  %4875 = vmatmul.bf16.gmra.mxu0 %v4840
  %v4876 = vpop.f32.mrf.mxu0
  %v4877 = vadd.f32 0.0, %v4876
  %v4878 = vpop.f32.mrf.mxu0
  %v4879 = vadd.f32 0.0, %v4878
  %4880 = vmatmul.bf16.gmra.mxu0 %v4843
  %v4881 = vpop.f32.mrf.mxu0
  %v4882 = vadd.f32 0.0, %v4881
  %v4883 = vpop.f32.mrf.mxu0
  %v4884 = vadd.f32 0.0, %v4883
  %4885 = vmatmul.bf16.gmra.mxu0 %v4846
  %v4886 = vpop.f32.mrf.mxu0
  %v4887 = vadd.f32 0.0, %v4886
  %v4888 = vpop.f32.mrf.mxu0
  %v4889 = vadd.f32 0.0, %v4888
  %4890 = vmatmul.bf16.gmra.mxu0 %v4849
  %v4891 = vpop.f32.mrf.mxu0
  %v4892 = vadd.f32 0.0, %v4891
  %v4893 = vpop.f32.mrf.mxu0
  %v4894 = vadd.f32 0.0, %v4893
  %4895 = vmatmul.bf16.gmra.mxu0 %v4852
  %v4896 = vpop.f32.mrf.mxu0
  %v4897 = vadd.f32 0.0, %v4896
  %v4898 = vpop.f32.mrf.mxu0
  %v4899 = vadd.f32 0.0, %v4898
  %4900 = vmatmul.bf16.gmra.mxu0 %v4855
  %v4901 = vpop.f32.mrf.mxu0
  %v4902 = vadd.f32 0.0, %v4901
  %v4903 = vpop.f32.mrf.mxu0
  %v4904 = vadd.f32 0.0, %v4903
  %4905 = vdwg.mxu0
  %v4906 = vadd.f32 %v4272, %v4867
  %v4907 = vadd.f32 %v4273, %v4869
  %v4908 = vadd.f32 %v4274, %v4872
  %v4909 = vadd.f32 %v4275, %v4874
  %v4910 = vadd.f32 %v4276, %v4877
  %v4911 = vadd.f32 %v4277, %v4879
  %v4912 = vadd.f32 %v4278, %v4882
  %v4913 = vadd.f32 %v4279, %v4884
  %v4914 = vadd.f32 %v4280, %v4887
  %v4915 = vadd.f32 %v4281, %v4889
  %v4916 = vadd.f32 %v4282, %v4892
  %v4917 = vadd.f32 %v4283, %v4894
  %v4918 = vadd.f32 %v4284, %v4897
  %v4919 = vadd.f32 %v4285, %v4899
  %v4920 = vadd.f32 %v4286, %v4902
  %v4921 = vadd.f32 %v4287, %v4904
  %v4922 = vld [vmem:[%s8] sm:$0xff]
  %v4923 = vld [vmem:[%s8 + $0x8] sm:$0xff]
  %v4924 = vld [vmem:[%s8 + $0x10] sm:$0xff]
  %v4925 = vld [vmem:[%s8 + $0x18] sm:$0xff]
  %v4926 = vld [vmem:[%s8 + $0x20] sm:$0xff]
  %v4927 = vld [vmem:[%s8 + $0x28] sm:$0xff]
  %v4928 = vld [vmem:[%s8 + $0x30] sm:$0xff]
  %v4929 = vld [vmem:[%s8 + $0x38] sm:$0xff]
  %v4930 = vld [vmem:[%s8 + $0x40] sm:$0xff]
  %v4931 = vld [vmem:[%s8 + $0x48] sm:$0xff]
  %v4932 = vld [vmem:[%s8 + $0x50] sm:$0xff]
  %v4933 = vld [vmem:[%s8 + $0x58] sm:$0xff]
  %v4934 = vld [vmem:[%s8 + $0x60] sm:$0xff]
  %v4935 = vld [vmem:[%s8 + $0x68] sm:$0xff]
  %v4936 = vld [vmem:[%s8 + $0x70] sm:$0xff]
  %v4937 = vld [vmem:[%s8 + $0x78] sm:$0xff]
  %4939 = vset.pattern.permute.xlu0 0
  %4940 = vperm.xlu0 %4939, %v4922
  %v4941 = vpop.permute.xlu0 %4940
  %4944 = vset.pattern.permute.xlu0 0
  %4945 = vperm.xlu0 %4944, %v4923
  %v4946 = vpop.permute.xlu0 %4945
  %4949 = vset.pattern.permute.xlu0 0
  %4950 = vperm.xlu0 %4949, %v4924
  %v4951 = vpop.permute.xlu0 %4950
  %4954 = vset.pattern.permute.xlu0 0
  %4955 = vperm.xlu0 %4954, %v4925
  %v4956 = vpop.permute.xlu0 %4955
  %4959 = vset.pattern.permute.xlu0 0
  %4960 = vperm.xlu0 %4959, %v4926
  %v4961 = vpop.permute.xlu0 %4960
  %4964 = vset.pattern.permute.xlu0 0
  %4965 = vperm.xlu0 %4964, %v4927
  %v4966 = vpop.permute.xlu0 %4965
  %4969 = vset.pattern.permute.xlu0 0
  %4970 = vperm.xlu0 %4969, %v4928
  %v4971 = vpop.permute.xlu0 %4970
  %4974 = vset.pattern.permute.xlu0 0
  %4975 = vperm.xlu0 %4974, %v4929
  %v4976 = vpop.permute.xlu0 %4975
  %4979 = vset.pattern.permute.xlu0 0
  %4980 = vperm.xlu0 %4979, %v4930
  %v4981 = vpop.permute.xlu0 %4980
  %4984 = vset.pattern.permute.xlu0 0
  %4985 = vperm.xlu0 %4984, %v4931
  %v4986 = vpop.permute.xlu0 %4985
  %4989 = vset.pattern.permute.xlu0 0
  %4990 = vperm.xlu0 %4989, %v4932
  %v4991 = vpop.permute.xlu0 %4990
  %4994 = vset.pattern.permute.xlu0 0
  %4995 = vperm.xlu0 %4994, %v4933
  %v4996 = vpop.permute.xlu0 %4995
  %4999 = vset.pattern.permute.xlu0 0
  %5000 = vperm.xlu0 %4999, %v4934
  %v5001 = vpop.permute.xlu0 %5000
  %5004 = vset.pattern.permute.xlu0 0
  %5005 = vperm.xlu0 %5004, %v4935
  %v5006 = vpop.permute.xlu0 %5005
  %5009 = vset.pattern.permute.xlu0 0
  %5010 = vperm.xlu0 %5009, %v4936
  %v5011 = vpop.permute.xlu0 %5010
  %5014 = vset.pattern.permute.xlu0 0
  %5015 = vperm.xlu0 %5014, %v4937
  %v5016 = vpop.permute.xlu0 %5015
  %v5018 = vadd.f32 %v4906, %v4941
  %v5019 = vadd.f32 %v4907, %v4946
  %v5020 = vadd.f32 %v4908, %v4951
  %v5021 = vadd.f32 %v4909, %v4956
  %v5022 = vadd.f32 %v4910, %v4961
  %v5023 = vadd.f32 %v4911, %v4966
  %v5024 = vadd.f32 %v4912, %v4971
  %v5025 = vadd.f32 %v4913, %v4976
  %v5026 = vadd.f32 %v4914, %v4981
  %v5027 = vadd.f32 %v4915, %v4986
  %v5028 = vadd.f32 %v4916, %v4991
  %v5029 = vadd.f32 %v4917, %v4996
  %v5030 = vadd.f32 %v4918, %v5001
  %v5031 = vadd.f32 %v4919, %v5006
  %v5032 = vadd.f32 %v4920, %v5011
  %v5033 = vadd.f32 %v4921, %v5016
  %v5034 = vld [vmem:[%s13] sm:$0xf]
  %v5035 = vld [vmem:[%s13 + $0x4] sm:$0xf]
  %v5036 = vld [vmem:[%s13 + $0x8] sm:$0xf]
  %v5037 = vld [vmem:[%s13 + $0xc] sm:$0xf]
  %v5038 = vld [vmem:[%s13 + $0x10] sm:$0xf]
  %v5039 = vld [vmem:[%s13 + $0x14] sm:$0xf]
  %v5040 = vld [vmem:[%s13 + $0x18] sm:$0xf]
  %v5041 = vld [vmem:[%s13 + $0x1c] sm:$0xf]
  %v5042 = vld [vmem:[%s13 + $0x20] sm:$0xf]
  %v5043 = vld [vmem:[%s13 + $0x24] sm:$0xf]
  %v5044 = vld [vmem:[%s13 + $0x28] sm:$0xf]
  %v5045 = vld [vmem:[%s13 + $0x2c] sm:$0xf]
  %v5046 = vld [vmem:[%s13 + $0x30] sm:$0xf]
  %v5047 = vld [vmem:[%s13 + $0x34] sm:$0xf]
  %v5048 = vld [vmem:[%s13 + $0x38] sm:$0xf]
  %v5049 = vld [vmem:[%s13 + $0x3c] sm:$0xf]
  %v5050 = vld [vmem:[%s13 + $0x40] sm:$0xf]
  %v5051 = vld [vmem:[%s13 + $0x44] sm:$0xf]
  %v5052 = vld [vmem:[%s13 + $0x48] sm:$0xf]
  %v5053 = vld [vmem:[%s13 + $0x4c] sm:$0xf]
  %v5054 = vld [vmem:[%s13 + $0x50] sm:$0xf]
  %v5055 = vld [vmem:[%s13 + $0x54] sm:$0xf]
  %v5056 = vld [vmem:[%s13 + $0x58] sm:$0xf]
  %v5057 = vld [vmem:[%s13 + $0x5c] sm:$0xf]
  %v5058 = vld [vmem:[%s13 + $0x60] sm:$0xf]
  %v5059 = vld [vmem:[%s13 + $0x64] sm:$0xf]
  %v5060 = vld [vmem:[%s13 + $0x68] sm:$0xf]
  %v5061 = vld [vmem:[%s13 + $0x6c] sm:$0xf]
  %v5062 = vld [vmem:[%s13 + $0x70] sm:$0xf]
  %v5063 = vld [vmem:[%s13 + $0x74] sm:$0xf]
  %v5064 = vld [vmem:[%s13 + $0x78] sm:$0xf]
  %v5065 = vld [vmem:[%s13 + $0x7c] sm:$0xf]
  %v5066 = vpack.c.bf16 %v5019, %v5018
  %v5067 = vpack.c.bf16 %v5021, %v5020
  %v5068 = vpack.c.bf16 %v5023, %v5022
  %v5069 = vpack.c.bf16 %v5025, %v5024
  %v5070 = vpack.c.bf16 %v5027, %v5026
  %v5071 = vpack.c.bf16 %v5029, %v5028
  %v5072 = vpack.c.bf16 %v5031, %v5030
  %v5073 = vpack.c.bf16 %v5033, %v5032
  %v5074 = vld [vmem:[%s14] sm:$0xff]
  %v5075 = vld [vmem:[%s14 + $0x8] sm:$0xff]
  %v5076 = vld [vmem:[%s14 + $0x10] sm:$0xff]
  %v5077 = vld [vmem:[%s14 + $0x18] sm:$0xff]
  %v5078 = vld [vmem:[%s14 + $0x20] sm:$0xff]
  %v5079 = vld [vmem:[%s14 + $0x28] sm:$0xff]
  %v5080 = vld [vmem:[%s14 + $0x30] sm:$0xff]
  %v5081 = vld [vmem:[%s14 + $0x38] sm:$0xff]
  %v5082 = vld [vmem:[%s14 + $0x40] sm:$0xff]
  %v5083 = vld [vmem:[%s14 + $0x48] sm:$0xff]
  %v5084 = vld [vmem:[%s14 + $0x50] sm:$0xff]
  %v5085 = vld [vmem:[%s14 + $0x58] sm:$0xff]
  %v5086 = vld [vmem:[%s14 + $0x60] sm:$0xff]
  %v5087 = vld [vmem:[%s14 + $0x68] sm:$0xff]
  %v5088 = vld [vmem:[%s14 + $0x70] sm:$0xff]
  %v5089 = vld [vmem:[%s14 + $0x78] sm:$0xff]
  %v5090 = vld [vmem:[%s14 + $0x80] sm:$0xff]
  %v5091 = vld [vmem:[%s14 + $0x88] sm:$0xff]
  %v5092 = vld [vmem:[%s14 + $0x90] sm:$0xff]
  %v5093 = vld [vmem:[%s14 + $0x98] sm:$0xff]
  %v5094 = vld [vmem:[%s14 + $0xa0] sm:$0xff]
  %v5095 = vld [vmem:[%s14 + $0xa8] sm:$0xff]
  %v5096 = vld [vmem:[%s14 + $0xb0] sm:$0xff]
  %v5097 = vld [vmem:[%s14 + $0xb8] sm:$0xff]
  %v5098 = vld [vmem:[%s14 + $0xc0] sm:$0xff]
  %v5099 = vld [vmem:[%s14 + $0xc8] sm:$0xff]
  %v5100 = vld [vmem:[%s14 + $0xd0] sm:$0xff]
  %v5101 = vld [vmem:[%s14 + $0xd8] sm:$0xff]
  %v5102 = vld [vmem:[%s14 + $0xe0] sm:$0xff]
  %v5103 = vld [vmem:[%s14 + $0xe8] sm:$0xff]
  %v5104 = vld [vmem:[%s14 + $0xf0] sm:$0xff]
  %v5105 = vld [vmem:[%s14 + $0xf8] sm:$0xff]
  %5107 = vset.pattern.permute.xlu0 0
  %5108 = vperm.xlu0 %5107, %v5074
  %v5109 = vpop.permute.xlu0 %5108
  %5112 = vset.pattern.permute.xlu0 0
  %5113 = vperm.xlu0 %5112, %v5075
  %v5114 = vpop.permute.xlu0 %5113
  %5117 = vset.pattern.permute.xlu0 0
  %5118 = vperm.xlu0 %5117, %v5076
  %v5119 = vpop.permute.xlu0 %5118
  %5122 = vset.pattern.permute.xlu0 0
  %5123 = vperm.xlu0 %5122, %v5077
  %v5124 = vpop.permute.xlu0 %5123
  %5127 = vset.pattern.permute.xlu0 0
  %5128 = vperm.xlu0 %5127, %v5078
  %v5129 = vpop.permute.xlu0 %5128
  %5132 = vset.pattern.permute.xlu0 0
  %5133 = vperm.xlu0 %5132, %v5079
  %v5134 = vpop.permute.xlu0 %5133
  %5137 = vset.pattern.permute.xlu0 0
  %5138 = vperm.xlu0 %5137, %v5080
  %v5139 = vpop.permute.xlu0 %5138
  %5142 = vset.pattern.permute.xlu0 0
  %5143 = vperm.xlu0 %5142, %v5081
  %v5144 = vpop.permute.xlu0 %5143
  %5147 = vset.pattern.permute.xlu0 0
  %5148 = vperm.xlu0 %5147, %v5082
  %v5149 = vpop.permute.xlu0 %5148
  %5152 = vset.pattern.permute.xlu0 0
  %5153 = vperm.xlu0 %5152, %v5083
  %v5154 = vpop.permute.xlu0 %5153
  %5157 = vset.pattern.permute.xlu0 0
  %5158 = vperm.xlu0 %5157, %v5084
  %v5159 = vpop.permute.xlu0 %5158
  %5162 = vset.pattern.permute.xlu0 0
  %5163 = vperm.xlu0 %5162, %v5085
  %v5164 = vpop.permute.xlu0 %5163
  %5167 = vset.pattern.permute.xlu0 0
  %5168 = vperm.xlu0 %5167, %v5086
  %v5169 = vpop.permute.xlu0 %5168
  %5172 = vset.pattern.permute.xlu0 0
  %5173 = vperm.xlu0 %5172, %v5087
  %v5174 = vpop.permute.xlu0 %5173
  %5177 = vset.pattern.permute.xlu0 0
  %5178 = vperm.xlu0 %5177, %v5088
  %v5179 = vpop.permute.xlu0 %5178
  %5182 = vset.pattern.permute.xlu0 0
  %5183 = vperm.xlu0 %5182, %v5089
  %v5184 = vpop.permute.xlu0 %5183
  %5187 = vset.pattern.permute.xlu0 0
  %5188 = vperm.xlu0 %5187, %v5090
  %v5189 = vpop.permute.xlu0 %5188
  %5192 = vset.pattern.permute.xlu0 0
  %5193 = vperm.xlu0 %5192, %v5091
  %v5194 = vpop.permute.xlu0 %5193
  %5197 = vset.pattern.permute.xlu0 0
  %5198 = vperm.xlu0 %5197, %v5092
  %v5199 = vpop.permute.xlu0 %5198
  %5202 = vset.pattern.permute.xlu0 0
  %5203 = vperm.xlu0 %5202, %v5093
  %v5204 = vpop.permute.xlu0 %5203
  %5207 = vset.pattern.permute.xlu0 0
  %5208 = vperm.xlu0 %5207, %v5094
  %v5209 = vpop.permute.xlu0 %5208
  %5212 = vset.pattern.permute.xlu0 0
  %5213 = vperm.xlu0 %5212, %v5095
  %v5214 = vpop.permute.xlu0 %5213
  %5217 = vset.pattern.permute.xlu0 0
  %5218 = vperm.xlu0 %5217, %v5096
  %v5219 = vpop.permute.xlu0 %5218
  %5222 = vset.pattern.permute.xlu0 0
  %5223 = vperm.xlu0 %5222, %v5097
  %v5224 = vpop.permute.xlu0 %5223
  %5227 = vset.pattern.permute.xlu0 0
  %5228 = vperm.xlu0 %5227, %v5098
  %v5229 = vpop.permute.xlu0 %5228
  %5232 = vset.pattern.permute.xlu0 0
  %5233 = vperm.xlu0 %5232, %v5099
  %v5234 = vpop.permute.xlu0 %5233
  %5237 = vset.pattern.permute.xlu0 0
  %5238 = vperm.xlu0 %5237, %v5100
  %v5239 = vpop.permute.xlu0 %5238
  %5242 = vset.pattern.permute.xlu0 0
  %5243 = vperm.xlu0 %5242, %v5101
  %v5244 = vpop.permute.xlu0 %5243
  %5247 = vset.pattern.permute.xlu0 0
  %5248 = vperm.xlu0 %5247, %v5102
  %v5249 = vpop.permute.xlu0 %5248
  %5252 = vset.pattern.permute.xlu0 0
  %5253 = vperm.xlu0 %5252, %v5103
  %v5254 = vpop.permute.xlu0 %5253
  %5257 = vset.pattern.permute.xlu0 0
  %5258 = vperm.xlu0 %5257, %v5104
  %v5259 = vpop.permute.xlu0 %5258
  %5262 = vset.pattern.permute.xlu0 0
  %5263 = vperm.xlu0 %5262, %v5105
  %v5264 = vpop.permute.xlu0 %5263
  %v5298 = vunpack.c.l.b16 %v5034
  %v5299 = vunpack.c.l.b16 %v5035
  %v5300 = vunpack.c.l.b16 %v5036
  %v5301 = vunpack.c.l.b16 %v5037
  %v5302 = vunpack.c.l.b16 %v5038
  %v5303 = vunpack.c.l.b16 %v5039
  %v5304 = vunpack.c.l.b16 %v5040
  %v5305 = vunpack.c.l.b16 %v5041
  %v5306 = vunpack.c.l.b16 %v5042
  %v5307 = vunpack.c.l.b16 %v5043
  %v5308 = vunpack.c.l.b16 %v5044
  %v5309 = vunpack.c.l.b16 %v5045
  %v5310 = vunpack.c.l.b16 %v5046
  %v5311 = vunpack.c.l.b16 %v5047
  %v5312 = vunpack.c.l.b16 %v5048
  %v5313 = vunpack.c.l.b16 %v5049
  %v5314 = vunpack.c.l.b16 %v5050
  %v5315 = vunpack.c.l.b16 %v5051
  %v5316 = vunpack.c.l.b16 %v5052
  %v5317 = vunpack.c.l.b16 %v5053
  %v5318 = vunpack.c.l.b16 %v5054
  %v5319 = vunpack.c.l.b16 %v5055
  %v5320 = vunpack.c.l.b16 %v5056
  %v5321 = vunpack.c.l.b16 %v5057
  %v5322 = vunpack.c.l.b16 %v5058
  %v5323 = vunpack.c.l.b16 %v5059
  %v5324 = vunpack.c.l.b16 %v5060
  %v5325 = vunpack.c.l.b16 %v5061
  %v5326 = vunpack.c.l.b16 %v5062
  %v5327 = vunpack.c.l.b16 %v5063
  %v5328 = vunpack.c.l.b16 %v5064
  %v5329 = vunpack.c.l.b16 %v5065
  %v5330 = vpack.c.b16 %v5299, %v5298
  %v5331 = vpack.c.b16 %v5301, %v5300
  %v5332 = vpack.c.b16 %v5303, %v5302
  %v5333 = vpack.c.b16 %v5305, %v5304
  %v5334 = vpack.c.b16 %v5307, %v5306
  %v5335 = vpack.c.b16 %v5309, %v5308
  %v5336 = vpack.c.b16 %v5311, %v5310
  %v5337 = vpack.c.b16 %v5313, %v5312
  %v5338 = vpack.c.b16 %v5315, %v5314
  %v5339 = vpack.c.b16 %v5317, %v5316
  %v5340 = vpack.c.b16 %v5319, %v5318
  %v5341 = vpack.c.b16 %v5321, %v5320
  %v5342 = vpack.c.b16 %v5323, %v5322
  %v5343 = vpack.c.b16 %v5325, %v5324
  %v5344 = vpack.c.b16 %v5327, %v5326
  %v5345 = vpack.c.b16 %v5329, %v5328
  %5362 = vmatpush.bf16.msra.mxu0 %v5073
  %5363 = vmatpush.bf16.msra.mxu0 %v5072
  %5364 = vmatpush.bf16.msra.mxu0 %v5071
  %5365 = vmatpush.bf16.msra.mxu0 %v5070
  %5366 = vmatpush.bf16.msra.mxu0 %v5069
  %5367 = vmatpush.bf16.msra.mxu0 %v5068
  %5368 = vmatpush.bf16.msra.mxu0 %v5067
  %5369 = vmatpush.bf16.msra.mxu0 %v5066
  %5370 = vmatmul.bf16.gmra.mxu0 %v5330
  %v5371 = vpop.f32.mrf.mxu0
  %v5372 = vadd.f32 %v5109, %v5371
  %v5373 = vpop.f32.mrf.mxu0
  %v5374 = vadd.f32 %v5114, %v5373
  %5375 = vmatmul.bf16.gmra.mxu0 %v5331
  %v5376 = vpop.f32.mrf.mxu0
  %v5377 = vadd.f32 %v5119, %v5376
  %v5378 = vpop.f32.mrf.mxu0
  %v5379 = vadd.f32 %v5124, %v5378
  %5380 = vmatmul.bf16.gmra.mxu0 %v5332
  %v5381 = vpop.f32.mrf.mxu0
  %v5382 = vadd.f32 %v5129, %v5381
  %v5383 = vpop.f32.mrf.mxu0
  %v5384 = vadd.f32 %v5134, %v5383
  %5385 = vmatmul.bf16.gmra.mxu0 %v5333
  %v5386 = vpop.f32.mrf.mxu0
  %v5387 = vadd.f32 %v5139, %v5386
  %v5388 = vpop.f32.mrf.mxu0
  %v5389 = vadd.f32 %v5144, %v5388
  %5390 = vmatmul.bf16.gmra.mxu0 %v5334
  %v5391 = vpop.f32.mrf.mxu0
  %v5392 = vadd.f32 %v5149, %v5391
  %v5393 = vpop.f32.mrf.mxu0
  %v5394 = vadd.f32 %v5154, %v5393
  %5395 = vmatmul.bf16.gmra.mxu0 %v5335
  %v5396 = vpop.f32.mrf.mxu0
  %v5397 = vadd.f32 %v5159, %v5396
  %v5398 = vpop.f32.mrf.mxu0
  %v5399 = vadd.f32 %v5164, %v5398
  %5400 = vmatmul.bf16.gmra.mxu0 %v5336
  %v5401 = vpop.f32.mrf.mxu0
  %v5402 = vadd.f32 %v5169, %v5401
  %v5403 = vpop.f32.mrf.mxu0
  %v5404 = vadd.f32 %v5174, %v5403
  %5405 = vmatmul.bf16.gmra.mxu0 %v5337
  %v5406 = vpop.f32.mrf.mxu0
  %v5407 = vadd.f32 %v5179, %v5406
  %v5408 = vpop.f32.mrf.mxu0
  %v5409 = vadd.f32 %v5184, %v5408
  %5410 = vmatmul.bf16.gmra.mxu0 %v5338
  %v5411 = vpop.f32.mrf.mxu0
  %v5412 = vadd.f32 %v5189, %v5411
  %v5413 = vpop.f32.mrf.mxu0
  %v5414 = vadd.f32 %v5194, %v5413
  %5415 = vmatmul.bf16.gmra.mxu0 %v5339
  %v5416 = vpop.f32.mrf.mxu0
  %v5417 = vadd.f32 %v5199, %v5416
  %v5418 = vpop.f32.mrf.mxu0
  %v5419 = vadd.f32 %v5204, %v5418
  %5420 = vmatmul.bf16.gmra.mxu0 %v5340
  %v5421 = vpop.f32.mrf.mxu0
  %v5422 = vadd.f32 %v5209, %v5421
  %v5423 = vpop.f32.mrf.mxu0
  %v5424 = vadd.f32 %v5214, %v5423
  %5425 = vmatmul.bf16.gmra.mxu0 %v5341
  %v5426 = vpop.f32.mrf.mxu0
  %v5427 = vadd.f32 %v5219, %v5426
  %v5428 = vpop.f32.mrf.mxu0
  %v5429 = vadd.f32 %v5224, %v5428
  %5430 = vmatmul.bf16.gmra.mxu0 %v5342
  %v5431 = vpop.f32.mrf.mxu0
  %v5432 = vadd.f32 %v5229, %v5431
  %v5433 = vpop.f32.mrf.mxu0
  %v5434 = vadd.f32 %v5234, %v5433
  %5435 = vmatmul.bf16.gmra.mxu0 %v5343
  %v5436 = vpop.f32.mrf.mxu0
  %v5437 = vadd.f32 %v5239, %v5436
  %v5438 = vpop.f32.mrf.mxu0
  %v5439 = vadd.f32 %v5244, %v5438
  %5440 = vmatmul.bf16.gmra.mxu0 %v5344
  %v5441 = vpop.f32.mrf.mxu0
  %v5442 = vadd.f32 %v5249, %v5441
  %v5443 = vpop.f32.mrf.mxu0
  %v5444 = vadd.f32 %v5254, %v5443
  %5445 = vmatmul.bf16.gmra.mxu0 %v5345
  %v5446 = vpop.f32.mrf.mxu0
  %v5447 = vadd.f32 %v5259, %v5446
  %v5448 = vpop.f32.mrf.mxu0
  %v5449 = vadd.f32 %v5264, %v5448
  %5450 = vdwg.mxu0
  %v5451 = vld [vmem:[%s19] sm:$0xff]
  %v5452 = vld [vmem:[%s19 + $0x8] sm:$0xff]
  %v5453 = vld [vmem:[%s19 + $0x10] sm:$0xff]
  %v5454 = vld [vmem:[%s19 + $0x18] sm:$0xff]
  %v5455 = vld [vmem:[%s19 + $0x20] sm:$0xff]
  %v5456 = vld [vmem:[%s19 + $0x28] sm:$0xff]
  %v5457 = vld [vmem:[%s19 + $0x30] sm:$0xff]
  %v5458 = vld [vmem:[%s19 + $0x38] sm:$0xff]
  %v5459 = vld [vmem:[%s19 + $0x40] sm:$0xff]
  %v5460 = vld [vmem:[%s19 + $0x48] sm:$0xff]
  %v5461 = vld [vmem:[%s19 + $0x50] sm:$0xff]
  %v5462 = vld [vmem:[%s19 + $0x58] sm:$0xff]
  %v5463 = vld [vmem:[%s19 + $0x60] sm:$0xff]
  %v5464 = vld [vmem:[%s19 + $0x68] sm:$0xff]
  %v5465 = vld [vmem:[%s19 + $0x70] sm:$0xff]
  %v5466 = vld [vmem:[%s19 + $0x78] sm:$0xff]
  %v5467 = vld [vmem:[%s19 + $0x80] sm:$0xff]
  %v5468 = vld [vmem:[%s19 + $0x88] sm:$0xff]
  %v5469 = vld [vmem:[%s19 + $0x90] sm:$0xff]
  %v5470 = vld [vmem:[%s19 + $0x98] sm:$0xff]
  %v5471 = vld [vmem:[%s19 + $0xa0] sm:$0xff]
  %v5472 = vld [vmem:[%s19 + $0xa8] sm:$0xff]
  %v5473 = vld [vmem:[%s19 + $0xb0] sm:$0xff]
  %v5474 = vld [vmem:[%s19 + $0xb8] sm:$0xff]
  %v5475 = vld [vmem:[%s19 + $0xc0] sm:$0xff]
  %v5476 = vld [vmem:[%s19 + $0xc8] sm:$0xff]
  %v5477 = vld [vmem:[%s19 + $0xd0] sm:$0xff]
  %v5478 = vld [vmem:[%s19 + $0xd8] sm:$0xff]
  %v5479 = vld [vmem:[%s19 + $0xe0] sm:$0xff]
  %v5480 = vld [vmem:[%s19 + $0xe8] sm:$0xff]
  %v5481 = vld [vmem:[%s19 + $0xf0] sm:$0xff]
  %v5482 = vld [vmem:[%s19 + $0xf8] sm:$0xff]
  %5484 = vset.pattern.permute.xlu0 0
  %5485 = vperm.xlu0 %5484, %v5451
  %v5486 = vpop.permute.xlu0 %5485
  %5489 = vset.pattern.permute.xlu0 0
  %5490 = vperm.xlu0 %5489, %v5452
  %v5491 = vpop.permute.xlu0 %5490
  %5494 = vset.pattern.permute.xlu0 0
  %5495 = vperm.xlu0 %5494, %v5453
  %v5496 = vpop.permute.xlu0 %5495
  %5499 = vset.pattern.permute.xlu0 0
  %5500 = vperm.xlu0 %5499, %v5454
  %v5501 = vpop.permute.xlu0 %5500
  %5504 = vset.pattern.permute.xlu0 0
  %5505 = vperm.xlu0 %5504, %v5455
  %v5506 = vpop.permute.xlu0 %5505
  %5509 = vset.pattern.permute.xlu0 0
  %5510 = vperm.xlu0 %5509, %v5456
  %v5511 = vpop.permute.xlu0 %5510
  %5514 = vset.pattern.permute.xlu0 0
  %5515 = vperm.xlu0 %5514, %v5457
  %v5516 = vpop.permute.xlu0 %5515
  %5519 = vset.pattern.permute.xlu0 0
  %5520 = vperm.xlu0 %5519, %v5458
  %v5521 = vpop.permute.xlu0 %5520
  %5524 = vset.pattern.permute.xlu0 0
  %5525 = vperm.xlu0 %5524, %v5459
  %v5526 = vpop.permute.xlu0 %5525
  %5529 = vset.pattern.permute.xlu0 0
  %5530 = vperm.xlu0 %5529, %v5460
  %v5531 = vpop.permute.xlu0 %5530
  %5534 = vset.pattern.permute.xlu0 0
  %5535 = vperm.xlu0 %5534, %v5461
  %v5536 = vpop.permute.xlu0 %5535
  %5539 = vset.pattern.permute.xlu0 0
  %5540 = vperm.xlu0 %5539, %v5462
  %v5541 = vpop.permute.xlu0 %5540
  %5544 = vset.pattern.permute.xlu0 0
  %5545 = vperm.xlu0 %5544, %v5463
  %v5546 = vpop.permute.xlu0 %5545
  %5549 = vset.pattern.permute.xlu0 0
  %5550 = vperm.xlu0 %5549, %v5464
  %v5551 = vpop.permute.xlu0 %5550
  %5554 = vset.pattern.permute.xlu0 0
  %5555 = vperm.xlu0 %5554, %v5465
  %v5556 = vpop.permute.xlu0 %5555
  %5559 = vset.pattern.permute.xlu0 0
  %5560 = vperm.xlu0 %5559, %v5466
  %v5561 = vpop.permute.xlu0 %5560
  %5564 = vset.pattern.permute.xlu0 0
  %5565 = vperm.xlu0 %5564, %v5467
  %v5566 = vpop.permute.xlu0 %5565
  %5569 = vset.pattern.permute.xlu0 0
  %5570 = vperm.xlu0 %5569, %v5468
  %v5571 = vpop.permute.xlu0 %5570
  %5574 = vset.pattern.permute.xlu0 0
  %5575 = vperm.xlu0 %5574, %v5469
  %v5576 = vpop.permute.xlu0 %5575
  %5579 = vset.pattern.permute.xlu0 0
  %5580 = vperm.xlu0 %5579, %v5470
  %v5581 = vpop.permute.xlu0 %5580
  %5584 = vset.pattern.permute.xlu0 0
  %5585 = vperm.xlu0 %5584, %v5471
  %v5586 = vpop.permute.xlu0 %5585
  %5589 = vset.pattern.permute.xlu0 0
  %5590 = vperm.xlu0 %5589, %v5472
  %v5591 = vpop.permute.xlu0 %5590
  %5594 = vset.pattern.permute.xlu0 0
  %5595 = vperm.xlu0 %5594, %v5473
  %v5596 = vpop.permute.xlu0 %5595
  %5599 = vset.pattern.permute.xlu0 0
  %5600 = vperm.xlu0 %5599, %v5474
  %v5601 = vpop.permute.xlu0 %5600
  %5604 = vset.pattern.permute.xlu0 0
  %5605 = vperm.xlu0 %5604, %v5475
  %v5606 = vpop.permute.xlu0 %5605
  %5609 = vset.pattern.permute.xlu0 0
  %5610 = vperm.xlu0 %5609, %v5476
  %v5611 = vpop.permute.xlu0 %5610
  %5614 = vset.pattern.permute.xlu0 0
  %5615 = vperm.xlu0 %5614, %v5477
  %v5616 = vpop.permute.xlu0 %5615
  %5619 = vset.pattern.permute.xlu0 0
  %5620 = vperm.xlu0 %5619, %v5478
  %v5621 = vpop.permute.xlu0 %5620
  %5624 = vset.pattern.permute.xlu0 0
  %5625 = vperm.xlu0 %5624, %v5479
  %v5626 = vpop.permute.xlu0 %5625
  %5629 = vset.pattern.permute.xlu0 0
  %5630 = vperm.xlu0 %5629, %v5480
  %v5631 = vpop.permute.xlu0 %5630
  %5634 = vset.pattern.permute.xlu0 0
  %5635 = vperm.xlu0 %5634, %v5481
  %v5636 = vpop.permute.xlu0 %5635
  %5639 = vset.pattern.permute.xlu0 0
  %5640 = vperm.xlu0 %5639, %v5482
  %v5641 = vpop.permute.xlu0 %5640
  %v5643 = vadd.f32 %v5372, %v5486
  %v5644 = vadd.f32 %v5374, %v5491
  %v5645 = vadd.f32 %v5377, %v5496
  %v5646 = vadd.f32 %v5379, %v5501
  %v5647 = vadd.f32 %v5382, %v5506
  %v5648 = vadd.f32 %v5384, %v5511
  %v5649 = vadd.f32 %v5387, %v5516
  %v5650 = vadd.f32 %v5389, %v5521
  %v5651 = vadd.f32 %v5392, %v5526
  %v5652 = vadd.f32 %v5394, %v5531
  %v5653 = vadd.f32 %v5397, %v5536
  %v5654 = vadd.f32 %v5399, %v5541
  %v5655 = vadd.f32 %v5402, %v5546
  %v5656 = vadd.f32 %v5404, %v5551
  %v5657 = vadd.f32 %v5407, %v5556
  %v5658 = vadd.f32 %v5409, %v5561
  %v5659 = vadd.f32 %v5412, %v5566
  %v5660 = vadd.f32 %v5414, %v5571
  %v5661 = vadd.f32 %v5417, %v5576
  %v5662 = vadd.f32 %v5419, %v5581
  %v5663 = vadd.f32 %v5422, %v5586
  %v5664 = vadd.f32 %v5424, %v5591
  %v5665 = vadd.f32 %v5427, %v5596
  %v5666 = vadd.f32 %v5429, %v5601
  %v5667 = vadd.f32 %v5432, %v5606
  %v5668 = vadd.f32 %v5434, %v5611
  %v5669 = vadd.f32 %v5437, %v5616
  %v5670 = vadd.f32 %v5439, %v5621
  %v5671 = vadd.f32 %v5442, %v5626
  %v5672 = vadd.f32 %v5444, %v5631
  %v5673 = vadd.f32 %v5447, %v5636
  %v5674 = vadd.f32 %v5449, %v5641
  %vm5675 = vcmask 130048
  %5676 = vst.msk [vmem:[%s22] sm:$0xff] %vm5675, %v5643
  %5677 = vst.msk [vmem:[%s22 + $0x8] sm:$0xff] %vm5675, %v5644
  %5678 = vst.msk [vmem:[%s22 + $0x10] sm:$0xff] %vm5675, %v5645
  %5679 = vst.msk [vmem:[%s22 + $0x18] sm:$0xff] %vm5675, %v5646
  %5680 = vst.msk [vmem:[%s22 + $0x20] sm:$0xff] %vm5675, %v5647
  %5681 = vst.msk [vmem:[%s22 + $0x28] sm:$0xff] %vm5675, %v5648
  %5682 = vst.msk [vmem:[%s22 + $0x30] sm:$0xff] %vm5675, %v5649
  %5683 = vst.msk [vmem:[%s22 + $0x38] sm:$0xff] %vm5675, %v5650
  %5684 = vst.msk [vmem:[%s22 + $0x40] sm:$0xff] %vm5675, %v5651
  %5685 = vst.msk [vmem:[%s22 + $0x48] sm:$0xff] %vm5675, %v5652
  %5686 = vst.msk [vmem:[%s22 + $0x50] sm:$0xff] %vm5675, %v5653
  %5687 = vst.msk [vmem:[%s22 + $0x58] sm:$0xff] %vm5675, %v5654
  %5688 = vst.msk [vmem:[%s22 + $0x60] sm:$0xff] %vm5675, %v5655
  %5689 = vst.msk [vmem:[%s22 + $0x68] sm:$0xff] %vm5675, %v5656
  %5690 = vst.msk [vmem:[%s22 + $0x70] sm:$0xff] %vm5675, %v5657
  %5691 = vst.msk [vmem:[%s22 + $0x78] sm:$0xff] %vm5675, %v5658
  %5692 = vst.msk [vmem:[%s22 + $0x80] sm:$0xff] %vm5675, %v5659
  %5693 = vst.msk [vmem:[%s22 + $0x88] sm:$0xff] %vm5675, %v5660
  %5694 = vst.msk [vmem:[%s22 + $0x90] sm:$0xff] %vm5675, %v5661
  %5695 = vst.msk [vmem:[%s22 + $0x98] sm:$0xff] %vm5675, %v5662
  %5696 = vst.msk [vmem:[%s22 + $0xa0] sm:$0xff] %vm5675, %v5663
  %5697 = vst.msk [vmem:[%s22 + $0xa8] sm:$0xff] %vm5675, %v5664
  %5698 = vst.msk [vmem:[%s22 + $0xb0] sm:$0xff] %vm5675, %v5665
  %5699 = vst.msk [vmem:[%s22 + $0xb8] sm:$0xff] %vm5675, %v5666
  %5700 = vst.msk [vmem:[%s22 + $0xc0] sm:$0xff] %vm5675, %v5667
  %5701 = vst.msk [vmem:[%s22 + $0xc8] sm:$0xff] %vm5675, %v5668
  %5702 = vst.msk [vmem:[%s22 + $0xd0] sm:$0xff] %vm5675, %v5669
  %5703 = vst.msk [vmem:[%s22 + $0xd8] sm:$0xff] %vm5675, %v5670
  %5704 = vst.msk [vmem:[%s22 + $0xe0] sm:$0xff] %vm5675, %v5671
  %5705 = vst.msk [vmem:[%s22 + $0xe8] sm:$0xff] %vm5675, %v5672
  %5706 = vst.msk [vmem:[%s22 + $0xf0] sm:$0xff] %vm5675, %v5673
  %5707 = vst.msk [vmem:[%s22 + $0xf8] sm:$0xff] %vm5675, %v5674
  // Predicated region
  $region82: #{image_encoder_forward.1} parent=0 // pred_check
    _
  $region83: #{image_encoder_forward.1} parent=0 // pred_check_branch
    %5709 = sbr.rel (0) target = $region85
  $region84: #{image_encoder_forward.1} parent=0 // pred_region
    _
  $region85: #{image_encoder_forward.1} parent=0 // pred_fallthru
    _
  // Predicated region
  $region86: #{image_encoder_forward.1} parent=0 // pred_check
    _
  $region87: #{image_encoder_forward.1} parent=0 // pred_check_branch
    %5711 = sbr.rel (0) target = $region89
  $region88: #{image_encoder_forward.1} parent=0 // pred_region
    _
  $region89: #{image_encoder_forward.1} parent=0 // pred_fallthru
    _
  // Predicated region
  $region90: #{image_encoder_forward.1} parent=0 // pred_check
    _
  $region91: #{image_encoder_forward.1} parent=0 // pred_check_branch
    %5713 = sbr.rel (0) target = $region93
  $region92: #{image_encoder_forward.1} parent=0 // pred_region
    _
  $region93: #{image_encoder_forward.1} parent=0 // pred_fallthru
    _
  // Predicated region
  $region94: #{image_encoder_forward.1} parent=0 // pred_check
    _
  $region95: #{image_encoder_forward.1} parent=0 // pred_check_branch
    %5715 = sbr.rel (0) target = $region97
  $region96: #{image_encoder_forward.1} parent=0 // pred_region
    _
  $region97: #{image_encoder_forward.1} parent=0 // pred_fallthru
    _
  // Predicated region
  $region98: #{image_encoder_forward.1} parent=0 // pred_check
    _
  $region99: #{image_encoder_forward.1} parent=0 // pred_check_branch
    %5717 = sbr.rel (0) target = $region101
  $region100: #{image_encoder_forward.1} parent=0 // pred_region
    _
  $region101: #{image_encoder_forward.1} parent=0 // pred_fallthru
    _
  // Predicated region
  $region102: #{image_encoder_forward.1} parent=0 // pred_check
    _
  $region103: #{image_encoder_forward.1} parent=0 // pred_check_branch
    %5719 = sbr.rel (0) target = $region105
  $region104: #{image_encoder_forward.1} parent=0 // pred_region
    _
  $region105: #{image_encoder_forward.1} parent=0 // pred_fallthru
    _

</llo_original>
